<compile_context>
chip_gen: v7x
topology: tpu7x:2x2x1
jax: 0.10.0
libtpu: 0.0.40
codegen_flags: <defaults>
</compile_context>

<pallas_src>
import functools
import math

import jax
import jax.numpy as jnp
from jax.experimental import pallas as pl
from jax.experimental.pallas import tpu as pltpu

# ---- model dims (small synthetic stand-in for bert-base-cased) ----
VOCAB = 50
MAX_POS = 16
HIDDEN = 32
N_HEADS = 2
HEAD_DIM = HIDDEN // N_HEADS
INTERMEDIATE = 64
N_LAYERS = 2
N_OTHER = 4          # n_other_features
LN_EPS = 1e-12


def _layernorm(x, g, b):
    mu = jnp.mean(x, axis=-1, keepdims=True)
    var = jnp.mean(jnp.square(x - mu), axis=-1, keepdims=True)
    return (x - mu) * jax.lax.rsqrt(var + LN_EPS) * g + b


# ---------------- fused Pallas kernel (one grid step == one batch element) ----------------

def _fused_titledet_kernel(*refs, n_layers, n_heads, has_labels):
    if has_labels:
        x_ref, mask_ref, others_ref, labels_ref = refs[:4]
        w_refs = refs[4:-2]
        probs_ref, bce_ref = refs[-2:]
    else:
        x_ref, mask_ref, others_ref = refs[:3]
        labels_ref, bce_ref = None, None
        w_refs = refs[3:-1]
        probs_ref = refs[-1]

    (emb_ln_g_ref, emb_ln_b_ref,
     wq_ref, bq_ref, wkT_ref, bkT_ref, wv_ref, bv_ref,
     wo_ref, bo_ref, ln1_g_ref, ln1_b_ref,
     wi_ref, bi_ref, wf_ref, bff_ref, ln2_g_ref, ln2_b_ref,
     w_pool_ref, b_pool_ref, w_head_h_ref, w_head_o_ref, b_head_ref) = w_refs

    # embedding LayerNorm for this batch element
    x = _layernorm(x_ref[0], emb_ln_g_ref[...], emb_ln_b_ref[...])        # (S, H) f32

    # additive key-padding mask built in-kernel from the (1, S) attention_mask block
    neg = (mask_ref[0] - 1.0) * 1e9                                       # (1, S): 0 keep, -1e9 pad

    # transformer stack (unrolled; everything stays in vregs/VMEM)
    for l in range(n_layers):
        xb = x.astype(jnp.bfloat16)                                       # MXU operand
        xT = x.T.astype(jnp.bfloat16)                                     # one transpose / layer

        attn = None
        for h in range(n_heads):
            # per-head pre-split weights: no lane slicing inside the kernel
            q = jnp.dot(xb, wq_ref[l, h],
                        preferred_element_type=jnp.float32) + bq_ref[l, h]    # (S, DH), scale folded
            kT = jnp.dot(wkT_ref[l, h], xT,
                         preferred_element_type=jnp.float32) + bkT_ref[l, h]  # (DH, S)
            v = jnp.dot(xb, wv_ref[l, h],
                        preferred_element_type=jnp.float32) + bv_ref[l, h]    # (S, DH)

            s = jnp.dot(q.astype(jnp.bfloat16), kT.astype(jnp.bfloat16),
                        preferred_element_type=jnp.float32) + neg             # (S, S) f32
            m = jnp.max(s, axis=-1, keepdims=True)
            p = jnp.exp(s - m)
            p = p * pl.reciprocal(jnp.sum(p, axis=-1, keepdims=True), approx=True)

            ctx = jnp.dot(p.astype(jnp.bfloat16), v.astype(jnp.bfloat16),
                          preferred_element_type=jnp.float32)                 # (S, DH)
            contrib = jnp.dot(ctx.astype(jnp.bfloat16), wo_ref[l, h],
                              preferred_element_type=jnp.float32)             # (S, H)
            attn = contrib if attn is None else attn + contrib

        x = _layernorm(x + attn + bo_ref[l], ln1_g_ref[l], ln1_b_ref[l])

        ff = jnp.dot(x.astype(jnp.bfloat16), wi_ref[l],
                     preferred_element_type=jnp.float32) + bi_ref[l]
        # TODO(synk): HF BERT uses exact erf GELU; tanh approximation used here for
        # guaranteed Mosaic lowering (tiny numerical difference).
        ff = jax.nn.gelu(ff, approximate=True)
        ff = jnp.dot(ff.astype(jnp.bfloat16), wf_ref[l],
                     preferred_element_type=jnp.float32) + bff_ref[l]
        x = _layernorm(x + ff, ln2_g_ref[l], ln2_b_ref[l])

    # pooler: CLS token is row 0 of this batch element's sequence (static slice)
    cls = x[0:1, :]                                                        # (1, H)
    pooled = jnp.tanh(jnp.dot(cls.astype(jnp.bfloat16), w_pool_ref[...],
                              preferred_element_type=jnp.float32) + b_pool_ref[...])

    # head: concat(pooled, others) @ W + b  ==  two VPU multiply+reduce terms (f32)
    logit = (jnp.sum(pooled * w_head_h_ref[...], axis=-1, keepdims=True)
             + jnp.sum(others_ref[0] * w_head_o_ref[...], axis=-1, keepdims=True)
             + b_head_ref[...])                                            # (1, 1)
    p_out = jax.nn.sigmoid(logit)
    probs_ref[0] = p_out

    if has_labels:
        # per-batch BCE term; log clamped at -100 like torch.nn.BCELoss. Mean taken in wrapper.
        y = labels_ref[0]
        bce = -(y * jnp.maximum(jnp.log(p_out), -100.0)
                + (1.0 - y) * jnp.maximum(jnp.log(1.0 - p_out), -100.0))
        bce_ref[0] = bce


# ---------------- parameters (deterministic synthetic init, per-head pre-split) ----------------

def init_params(key):
    def w(k, shape):
        return 0.02 * jax.random.normal(k, shape, jnp.float32)

    keys = jax.random.split(key, 8 + N_LAYERS)
    params = {
        "word_emb": w(keys[0], (VOCAB, HIDDEN)),
        "pos_emb": w(keys[1], (MAX_POS, HIDDEN)),
        "type_emb": w(keys[2], (2, HIDDEN)),
        "emb_ln_g": jnp.ones((1, HIDDEN), jnp.float32),
        "emb_ln_b": jnp.zeros((1, HIDDEN), jnp.float32),
    }

    att_scale = 1.0 / math.sqrt(HEAD_DIM)
    wq_l, wkT_l, wv_l, wo_l, wi_l, wf_l = [], [], [], [], [], []
    for l in range(N_LAYERS):
        lk = jax.random.split(keys[3 + l], 6)
        wq_full = w(lk[0], (HIDDEN, HIDDEN)) * att_scale     # 1/sqrt(DH) folded into Q proj
        wk_full = w(lk[1], (HIDDEN, HIDDEN))
        wv_full = w(lk[2], (HIDDEN, HIDDEN))
        wo_full = w(lk[3], (HIDDEN, HIDDEN))
        # per-head splits done at trace/init time (no lane slices in-kernel)
        wq_l.append(wq_full.reshape(HIDDEN, N_HEADS, HEAD_DIM).transpose(1, 0, 2))   # (NH,H,DH)
        wkT_l.append(wk_full.reshape(HIDDEN, N_HEADS, HEAD_DIM).transpose(1, 2, 0))  # (NH,DH,H)
        wv_l.append(wv_full.reshape(HIDDEN, N_HEADS, HEAD_DIM).transpose(1, 0, 2))   # (NH,H,DH)
        wo_l.append(wo_full.reshape(N_HEADS, HEAD_DIM, HIDDEN))                      # (NH,DH,H)
        wi_l.append(w(lk[4], (HIDDEN, INTERMEDIATE)))
        wf_l.append(w(lk[5], (INTERMEDIATE, HIDDEN)))

    bf16 = jnp.bfloat16
    params["wq"] = jnp.stack(wq_l).astype(bf16)      # (L,NH,H,DH), scale folded in
    params["bq"] = jnp.zeros((N_LAYERS, N_HEADS, 1, HEAD_DIM), jnp.float32)
    params["wkT"] = jnp.stack(wkT_l).astype(bf16)    # (L,NH,DH,H)
    params["bkT"] = jnp.zeros((N_LAYERS, N_HEADS, HEAD_DIM, 1), jnp.float32)
    params["wv"] = jnp.stack(wv_l).astype(bf16)      # (L,NH,H,DH)
    params["bv"] = jnp.zeros((N_LAYERS, N_HEADS, 1, HEAD_DIM), jnp.float32)
    params["wo"] = jnp.stack(wo_l).astype(bf16)      # (L,NH,DH,H)
    params["bo"] = jnp.zeros((N_LAYERS, 1, HIDDEN), jnp.float32)
    params["ln1_g"] = jnp.ones((N_LAYERS, 1, HIDDEN), jnp.float32)
    params["ln1_b"] = jnp.zeros((N_LAYERS, 1, HIDDEN), jnp.float32)
    params["wi"] = jnp.stack(wi_l).astype(bf16)      # (L,H,I)
    params["bi"] = jnp.zeros((N_LAYERS, 1, INTERMEDIATE), jnp.float32)
    params["wf"] = jnp.stack(wf_l).astype(bf16)      # (L,I,H)
    params["bf"] = jnp.zeros((N_LAYERS, 1, HIDDEN), jnp.float32)
    params["ln2_g"] = jnp.ones((N_LAYERS, 1, HIDDEN), jnp.float32)
    params["ln2_b"] = jnp.zeros((N_LAYERS, 1, HIDDEN), jnp.float32)
    params["w_pool"] = w(keys[3 + N_LAYERS], (HIDDEN, HIDDEN)).astype(bf16)
    params["b_pool"] = jnp.zeros((1, HIDDEN), jnp.float32)
    # head weights stored lane-major for VPU multiply+reduce (kept f32: VPU path, v5e-safe)
    params["w_ff1_h"] = w(keys[4 + N_LAYERS], (1, HIDDEN))
    params["w_ff1_o"] = w(keys[5 + N_LAYERS], (1, N_OTHER))
    params["b_ff1"] = jnp.zeros((1, 1), jnp.float32)
    return params


# ---------------- forward pass (single pallas_call, grid over batch) ----------------

def title_detection_forward(params, input_ids, attention_mask, others, labels=None):
    B, S = input_ids.shape
    has_labels = labels is not None

    # TODO(synk): embedding gather + pretrained-weight loading stay in plain JAX / synthetic
    # init (no checkpoint load); everything else runs inside the fused kernel.
    x = (params["word_emb"][input_ids]
         + params["pos_emb"][None, :S, :]
         + params["type_emb"][None, 0:1, :]).astype(jnp.float32)           # (B, S, H)
    am = attention_mask.astype(jnp.float32).reshape(B, 1, S)               # (B, 1, S)
    oth = others.astype(jnp.float32).reshape(B, 1, N_OTHER)                # (B, 1, N_OTHER)

    weight_args = (
        params["emb_ln_g"], params["emb_ln_b"],
        params["wq"], params["bq"], params["wkT"], params["bkT"],
        params["wv"], params["bv"], params["wo"], params["bo"],
        params["ln1_g"], params["ln1_b"],
        params["wi"], params["bi"], params["wf"], params["bf"],
        params["ln2_g"], params["ln2_b"],
        params["w_pool"], params["b_pool"],
        params["w_ff1_h"], params["w_ff1_o"], params["b_ff1"],
    )
    vmem = pl.BlockSpec(memory_space=pltpu.MemorySpace.VMEM)   # whole (tiny) weight resident

    data_args = [x, am, oth]
    data_specs = [
        pl.BlockSpec((1, S, HIDDEN), lambda b: (b, 0, 0)),
        pl.BlockSpec((1, 1, S), lambda b: (b, 0, 0)),
        pl.BlockSpec((1, 1, N_OTHER), lambda b: (b, 0, 0)),
    ]
    scalar_spec = pl.BlockSpec((1, 1, 1), lambda b: (b, 0, 0))
    if has_labels:
        data_args.append(labels.astype(jnp.float32).reshape(B, 1, 1))
        data_specs.append(scalar_spec)
        out_shape = (jax.ShapeDtypeStruct((B, 1, 1), jnp.float32),   # probs
                     jax.ShapeDtypeStruct((B, 1, 1), jnp.float32))   # per-batch BCE
        out_specs = (scalar_spec, scalar_spec)
    else:
        out_shape = jax.ShapeDtypeStruct((B, 1, 1), jnp.float32)
        out_specs = scalar_spec

    kernel = functools.partial(_fused_titledet_kernel, n_layers=N_LAYERS,
                               n_heads=N_HEADS, has_labels=has_labels)
    outs = pl.pallas_call(
        kernel,
        grid=(B,),
        out_shape=out_shape,
        in_specs=data_specs + [vmem] * len(weight_args),
        out_specs=out_specs,
        compiler_params=pltpu.CompilerParams(dimension_semantics=("parallel",)),
    )(*data_args, *weight_args)

    if has_labels:
        probs3, bce3 = outs
        return jnp.mean(bce3), probs3.reshape(B, 1)
    return jnp.zeros((), jnp.float32), outs.reshape(B, 1)


if __name__ == "__main__":
    key = jax.random.PRNGKey(0)
    kp, kid, ko, kl = jax.random.split(key, 4)
    params = init_params(kp)

    B, S = 2, 8
    input_ids = jax.random.randint(kid, (B, S), 0, VOCAB, dtype=jnp.int32)
    attention_mask = jnp.array([[1, 1, 1, 1, 1, 1, 1, 1],
                                [1, 1, 1, 1, 1, 1, 0, 0]], dtype=jnp.float32)
    others = jax.random.normal(ko, (B, N_OTHER), jnp.float32)
    labels = jax.random.bernoulli(kl, 0.5, (B, 1)).astype(jnp.float32)

    loss, probs = title_detection_forward(params, input_ids, attention_mask, others, labels)
    jax.block_until_ready((loss, probs))
    assert probs.shape == (B, 1) and loss.shape == ()
    assert bool(jnp.all((probs >= 0.0) & (probs <= 1.0)))
    assert bool(jnp.isfinite(loss))

    # also exercise the labels=None (inference-only, loss-free) kernel variant
    loss0, probs0 = title_detection_forward(params, input_ids, attention_mask, others, None)
    jax.block_until_ready(probs0)
    assert probs0.shape == (B, 1)

    print("KERNEL_OK")
</pallas_src>

<mosaic_0001>
module attributes {stable_mosaic.version = 11 : i64} {
  func.func @_fused_titledet_kernel(%arg0: i32, %arg1: memref<1x8x32xf32, #tpu.memory_space<vmem>>, %arg2: memref<1x1x8xf32, #tpu.memory_space<vmem>>, %arg3: memref<1x1x4xf32, #tpu.memory_space<vmem>>, %arg4: memref<1x1x1xf32, #tpu.memory_space<vmem>>, %arg5: memref<1x32xf32, #tpu.memory_space<vmem>>, %arg6: memref<1x32xf32, #tpu.memory_space<vmem>>, %arg7: memref<2x2x32x16xbf16, #tpu.memory_space<vmem>>, %arg8: memref<2x2x1x16xf32, #tpu.memory_space<vmem>>, %arg9: memref<2x2x16x32xbf16, #tpu.memory_space<vmem>>, %arg10: memref<2x2x16x1xf32, #tpu.memory_space<vmem>>, %arg11: memref<2x2x32x16xbf16, #tpu.memory_space<vmem>>, %arg12: memref<2x2x1x16xf32, #tpu.memory_space<vmem>>, %arg13: memref<2x2x16x32xbf16, #tpu.memory_space<vmem>>, %arg14: memref<2x1x32xf32, #tpu.memory_space<vmem>>, %arg15: memref<2x1x32xf32, #tpu.memory_space<vmem>>, %arg16: memref<2x1x32xf32, #tpu.memory_space<vmem>>, %arg17: memref<2x32x64xbf16, #tpu.memory_space<vmem>>, %arg18: memref<2x1x64xf32, #tpu.memory_space<vmem>>, %arg19: memref<2x64x32xbf16, #tpu.memory_space<vmem>>, %arg20: memref<2x1x32xf32, #tpu.memory_space<vmem>>, %arg21: memref<2x1x32xf32, #tpu.memory_space<vmem>>, %arg22: memref<2x1x32xf32, #tpu.memory_space<vmem>>, %arg23: memref<32x32xbf16, #tpu.memory_space<vmem>>, %arg24: memref<1x32xf32, #tpu.memory_space<vmem>>, %arg25: memref<1x32xf32, #tpu.memory_space<vmem>>, %arg26: memref<1x4xf32, #tpu.memory_space<vmem>>, %arg27: memref<1x1xf32, #tpu.memory_space<vmem>>, %arg28: memref<1x1x1xf32, #tpu.memory_space<vmem>>, %arg29: memref<1x1x1xf32, #tpu.memory_space<vmem>>) attributes {dimension_semantics = [#tpu.dimension_semantics<parallel>], iteration_bounds = array<i64: 2>, scalar_prefetch = 0 : i64, scratch_operands = 0 : i64, tpu.core_type = #tpu.core_type<tc>, window_params = [{transform_indices = @transform_0, window_bounds = array<i64: 1, 8, 32>}, {transform_indices = @transform_1, window_bounds = array<i64: 1, 1, 8>}, {transform_indices = @transform_2, window_bounds = array<i64: 1, 1, 4>}, {transform_indices = @transform_3, window_bounds = array<i64: 1, 1, 1>}, {pipeline_mode = #tpu.pipeline_mode<synchronous>, transform_indices = @transform_4, window_bounds = array<i64: 1, 32>}, {pipeline_mode = #tpu.pipeline_mode<synchronous>, transform_indices = @transform_5, window_bounds = array<i64: 1, 32>}, {pipeline_mode = #tpu.pipeline_mode<synchronous>, transform_indices = @transform_6, window_bounds = array<i64: 2, 2, 32, 16>}, {pipeline_mode = #tpu.pipeline_mode<synchronous>, transform_indices = @transform_7, window_bounds = array<i64: 2, 2, 1, 16>}, {pipeline_mode = #tpu.pipeline_mode<synchronous>, transform_indices = @transform_8, window_bounds = array<i64: 2, 2, 16, 32>}, {pipeline_mode = #tpu.pipeline_mode<synchronous>, transform_indices = @transform_9, window_bounds = array<i64: 2, 2, 16, 1>}, {pipeline_mode = #tpu.pipeline_mode<synchronous>, transform_indices = @transform_10, window_bounds = array<i64: 2, 2, 32, 16>}, {pipeline_mode = #tpu.pipeline_mode<synchronous>, transform_indices = @transform_11, window_bounds = array<i64: 2, 2, 1, 16>}, {pipeline_mode = #tpu.pipeline_mode<synchronous>, transform_indices = @transform_12, window_bounds = array<i64: 2, 2, 16, 32>}, {pipeline_mode = #tpu.pipeline_mode<synchronous>, transform_indices = @transform_13, window_bounds = array<i64: 2, 1, 32>}, {pipeline_mode = #tpu.pipeline_mode<synchronous>, transform_indices = @transform_14, window_bounds = array<i64: 2, 1, 32>}, {pipeline_mode = #tpu.pipeline_mode<synchronous>, transform_indices = @transform_15, window_bounds = array<i64: 2, 1, 32>}, {pipeline_mode = #tpu.pipeline_mode<synchronous>, transform_indices = @transform_16, window_bounds = array<i64: 2, 32, 64>}, {pipeline_mode = #tpu.pipeline_mode<synchronous>, transform_indices = @transform_17, window_bounds = array<i64: 2, 1, 64>}, {pipeline_mode = #tpu.pipeline_mode<synchronous>, transform_indices = @transform_18, window_bounds = array<i64: 2, 64, 32>}, {pipeline_mode = #tpu.pipeline_mode<synchronous>, transform_indices = @transform_19, window_bounds = array<i64: 2, 1, 32>}, {pipeline_mode = #tpu.pipeline_mode<synchronous>, transform_indices = @transform_20, window_bounds = array<i64: 2, 1, 32>}, {pipeline_mode = #tpu.pipeline_mode<synchronous>, transform_indices = @transform_21, window_bounds = array<i64: 2, 1, 32>}, {pipeline_mode = #tpu.pipeline_mode<synchronous>, transform_indices = @transform_22, window_bounds = array<i64: 32, 32>}, {pipeline_mode = #tpu.pipeline_mode<synchronous>, transform_indices = @transform_23, window_bounds = array<i64: 1, 32>}, {pipeline_mode = #tpu.pipeline_mode<synchronous>, transform_indices = @transform_24, window_bounds = array<i64: 1, 32>}, {pipeline_mode = #tpu.pipeline_mode<synchronous>, transform_indices = @transform_25, window_bounds = array<i64: 1, 4>}, {pipeline_mode = #tpu.pipeline_mode<synchronous>, transform_indices = @transform_26, window_bounds = array<i64: 1, 1>}, {transform_indices = @transform_27, window_bounds = array<i64: 1, 1, 1>}, {transform_indices = @transform_28, window_bounds = array<i64: 1, 1, 1>}]} {
    %c0 = arith.constant 0 : index
    %c0_0 = arith.constant 0 : index
    %c0_1 = arith.constant 0 : index
    %0 = vector.load %arg1[%c0, %c0_0, %c0_1] : memref<1x8x32xf32, #tpu.memory_space<vmem>>, vector<1x8x32xf32>
    %1 = vector.shape_cast %0 : vector<1x8x32xf32> to vector<8x32xf32>
    %c0_2 = arith.constant 0 : index
    %c0_3 = arith.constant 0 : index
    %2 = vector.load %arg5[%c0_2, %c0_3] : memref<1x32xf32, #tpu.memory_space<vmem>>, vector<1x32xf32>
    %c0_4 = arith.constant 0 : index
    %c0_5 = arith.constant 0 : index
    %3 = vector.load %arg6[%c0_4, %c0_5] : memref<1x32xf32, #tpu.memory_space<vmem>>, vector<1x32xf32>
    %cst = arith.constant dense<0.000000e+00> : vector<8xf32>
    %4 = vector.multi_reduction <add>, %1, %cst [1] : vector<8x32xf32> to vector<8xf32>
    %5 = vector.shape_cast %4 : vector<8xf32> to vector<8x1xf32>
    %cst_6 = arith.constant 3.200000e+01 : f32
    %6 = vector.broadcast %cst_6 : f32 to vector<8x1xf32>
    %7 = arith.divf %5, %6 : vector<8x1xf32>
    %8 = vector.broadcast %7 : vector<8x1xf32> to vector<8x32xf32>
    %9 = arith.subf %1, %8 : vector<8x32xf32>
    %10 = arith.mulf %9, %9 : vector<8x32xf32>
    %cst_7 = arith.constant dense<0.000000e+00> : vector<8xf32>
    %11 = vector.multi_reduction <add>, %10, %cst_7 [1] : vector<8x32xf32> to vector<8xf32>
    %12 = vector.shape_cast %11 : vector<8xf32> to vector<8x1xf32>
    %cst_8 = arith.constant 3.200000e+01 : f32
    %13 = vector.broadcast %cst_8 : f32 to vector<8x1xf32>
    %14 = arith.divf %12, %13 : vector<8x1xf32>
    %15 = vector.broadcast %7 : vector<8x1xf32> to vector<8x32xf32>
    %16 = arith.subf %1, %15 : vector<8x32xf32>
    %cst_9 = arith.constant 9.99999996E-13 : f32
    %17 = vector.broadcast %cst_9 : f32 to vector<8x1xf32>
    %18 = arith.addf %14, %17 : vector<8x1xf32>
    %19 = math.rsqrt %18 : vector<8x1xf32>
    %20 = vector.broadcast %19 : vector<8x1xf32> to vector<8x32xf32>
    %21 = arith.mulf %16, %20 : vector<8x32xf32>
    %22 = vector.broadcast %2 : vector<1x32xf32> to vector<8x32xf32>
    %23 = arith.mulf %21, %22 : vector<8x32xf32>
    %24 = vector.broadcast %3 : vector<1x32xf32> to vector<8x32xf32>
    %25 = arith.addf %23, %24 : vector<8x32xf32>
    %c0_10 = arith.constant 0 : index
    %c0_11 = arith.constant 0 : index
    %c0_12 = arith.constant 0 : index
    %26 = vector.load %arg2[%c0_10, %c0_11, %c0_12] : memref<1x1x8xf32, #tpu.memory_space<vmem>>, vector<1x1x8xf32>
    %27 = vector.shape_cast %26 : vector<1x1x8xf32> to vector<1x8xf32>
    %cst_13 = arith.constant 1.000000e+00 : f32
    %28 = vector.broadcast %cst_13 : f32 to vector<1x8xf32>
    %29 = arith.subf %27, %28 : vector<1x8xf32>
    %cst_14 = arith.constant 1.000000e+09 : f32
    %30 = vector.broadcast %cst_14 : f32 to vector<1x8xf32>
    %31 = arith.mulf %29, %30 : vector<1x8xf32>
    %32 = arith.truncf %25 : vector<8x32xf32> to vector<8x32xbf16>
    %33 = tpu.transpose %25, [1, 0] : vector<8x32xf32> -> vector<32x8xf32>
    %34 = arith.truncf %33 : vector<32x8xf32> to vector<32x8xbf16>
    %c0_15 = arith.constant 0 : index
    %c0_16 = arith.constant 0 : index
    %c0_17 = arith.constant 0 : index
    %c0_18 = arith.constant 0 : index
    %35 = vector.load %arg7[%c0_15, %c0_16, %c0_17, %c0_18] : memref<2x2x32x16xbf16, #tpu.memory_space<vmem>>, vector<1x1x32x16xbf16>
    %36 = vector.shape_cast %35 : vector<1x1x32x16xbf16> to vector<32x16xbf16>
    %cst_19 = arith.constant dense<0.000000e+00> : vector<8x16xf32>
    %37 = tpu.matmul %32, %36, %cst_19 {dimension_numbers = #tpu.dot_dimension_numbers<[1], [0], [0], [1], [0, 0, 1, 1], [], []>} : vector<8x32xbf16>, vector<32x16xbf16>, vector<8x16xf32> -> vector<8x16xf32>
    %c0_20 = arith.constant 0 : index
    %c0_21 = arith.constant 0 : index
    %c0_22 = arith.constant 0 : index
    %c0_23 = arith.constant 0 : index
    %38 = vector.load %arg8[%c0_20, %c0_21, %c0_22, %c0_23] : memref<2x2x1x16xf32, #tpu.memory_space<vmem>>, vector<1x1x1x16xf32>
    %39 = vector.shape_cast %38 : vector<1x1x1x16xf32> to vector<1x16xf32>
    %40 = vector.broadcast %39 : vector<1x16xf32> to vector<8x16xf32>
    %41 = arith.addf %37, %40 : vector<8x16xf32>
    %c0_24 = arith.constant 0 : index
    %c0_25 = arith.constant 0 : index
    %c0_26 = arith.constant 0 : index
    %c0_27 = arith.constant 0 : index
    %42 = vector.load %arg9[%c0_24, %c0_25, %c0_26, %c0_27] : memref<2x2x16x32xbf16, #tpu.memory_space<vmem>>, vector<1x1x16x32xbf16>
    %43 = vector.shape_cast %42 : vector<1x1x16x32xbf16> to vector<16x32xbf16>
    %cst_28 = arith.constant dense<0.000000e+00> : vector<16x8xf32>
    %44 = tpu.matmul %43, %34, %cst_28 {dimension_numbers = #tpu.dot_dimension_numbers<[1], [0], [0], [1], [0, 0, 1, 1], [], []>} : vector<16x32xbf16>, vector<32x8xbf16>, vector<16x8xf32> -> vector<16x8xf32>
    %c0_29 = arith.constant 0 : index
    %c0_30 = arith.constant 0 : index
    %c0_31 = arith.constant 0 : index
    %c0_32 = arith.constant 0 : index
    %45 = vector.load %arg10[%c0_29, %c0_30, %c0_31, %c0_32] : memref<2x2x16x1xf32, #tpu.memory_space<vmem>>, vector<1x1x16x1xf32>
    %46 = vector.shape_cast %45 : vector<1x1x16x1xf32> to vector<16x1xf32>
    %47 = vector.broadcast %46 : vector<16x1xf32> to vector<16x8xf32>
    %48 = arith.addf %44, %47 : vector<16x8xf32>
    %c0_33 = arith.constant 0 : index
    %c0_34 = arith.constant 0 : index
    %c0_35 = arith.constant 0 : index
    %c0_36 = arith.constant 0 : index
    %49 = vector.load %arg11[%c0_33, %c0_34, %c0_35, %c0_36] : memref<2x2x32x16xbf16, #tpu.memory_space<vmem>>, vector<1x1x32x16xbf16>
    %50 = vector.shape_cast %49 : vector<1x1x32x16xbf16> to vector<32x16xbf16>
    %cst_37 = arith.constant dense<0.000000e+00> : vector<8x16xf32>
    %51 = tpu.matmul %32, %50, %cst_37 {dimension_numbers = #tpu.dot_dimension_numbers<[1], [0], [0], [1], [0, 0, 1, 1], [], []>} : vector<8x32xbf16>, vector<32x16xbf16>, vector<8x16xf32> -> vector<8x16xf32>
    %c0_38 = arith.constant 0 : index
    %c0_39 = arith.constant 0 : index
    %c0_40 = arith.constant 0 : index
    %c0_41 = arith.constant 0 : index
    %52 = vector.load %arg12[%c0_38, %c0_39, %c0_40, %c0_41] : memref<2x2x1x16xf32, #tpu.memory_space<vmem>>, vector<1x1x1x16xf32>
    %53 = vector.shape_cast %52 : vector<1x1x1x16xf32> to vector<1x16xf32>
    %54 = vector.broadcast %53 : vector<1x16xf32> to vector<8x16xf32>
    %55 = arith.addf %51, %54 : vector<8x16xf32>
    %56 = arith.truncf %41 : vector<8x16xf32> to vector<8x16xbf16>
    %57 = arith.truncf %48 : vector<16x8xf32> to vector<16x8xbf16>
    %cst_42 = arith.constant dense<0.000000e+00> : vector<8x8xf32>
    %58 = tpu.matmul %56, %57, %cst_42 {dimension_numbers = #tpu.dot_dimension_numbers<[1], [0], [0], [1], [0, 0, 1, 1], [], []>} : vector<8x16xbf16>, vector<16x8xbf16>, vector<8x8xf32> -> vector<8x8xf32>
    %59 = vector.broadcast %31 : vector<1x8xf32> to vector<8x8xf32>
    %60 = arith.addf %58, %59 : vector<8x8xf32>
    %cst_43 = arith.constant dense<0xFF800000> : vector<8xf32>
    %61 = vector.multi_reduction <maximumf>, %60, %cst_43 [1] : vector<8x8xf32> to vector<8xf32>
    %62 = vector.shape_cast %61 : vector<8xf32> to vector<8x1xf32>
    %63 = vector.broadcast %62 : vector<8x1xf32> to vector<8x8xf32>
    %64 = arith.subf %60, %63 : vector<8x8xf32>
    %65 = math.exp %64 : vector<8x8xf32>
    %cst_44 = arith.constant dense<0.000000e+00> : vector<8xf32>
    %66 = vector.multi_reduction <add>, %65, %cst_44 [1] : vector<8x8xf32> to vector<8xf32>
    %67 = vector.shape_cast %66 : vector<8xf32> to vector<8x1xf32>
    %68 = tpu.reciprocal %67 {approx = true} : vector<8x1xf32> -> vector<8x1xf32>
    %69 = vector.broadcast %68 : vector<8x1xf32> to vector<8x8xf32>
    %70 = arith.mulf %65, %69 : vector<8x8xf32>
    %71 = arith.truncf %70 : vector<8x8xf32> to vector<8x8xbf16>
    %72 = arith.truncf %55 : vector<8x16xf32> to vector<8x16xbf16>
    %cst_45 = arith.constant dense<0.000000e+00> : vector<8x16xf32>
    %73 = tpu.matmul %71, %72, %cst_45 {dimension_numbers = #tpu.dot_dimension_numbers<[1], [0], [0], [1], [0, 0, 1, 1], [], []>} : vector<8x8xbf16>, vector<8x16xbf16>, vector<8x16xf32> -> vector<8x16xf32>
    %74 = arith.truncf %73 : vector<8x16xf32> to vector<8x16xbf16>
    %c0_46 = arith.constant 0 : index
    %c0_47 = arith.constant 0 : index
    %c0_48 = arith.constant 0 : index
    %c0_49 = arith.constant 0 : index
    %75 = vector.load %arg13[%c0_46, %c0_47, %c0_48, %c0_49] : memref<2x2x16x32xbf16, #tpu.memory_space<vmem>>, vector<1x1x16x32xbf16>
    %76 = vector.shape_cast %75 : vector<1x1x16x32xbf16> to vector<16x32xbf16>
    %cst_50 = arith.constant dense<0.000000e+00> : vector<8x32xf32>
    %77 = tpu.matmul %74, %76, %cst_50 {dimension_numbers = #tpu.dot_dimension_numbers<[1], [0], [0], [1], [0, 0, 1, 1], [], []>} : vector<8x16xbf16>, vector<16x32xbf16>, vector<8x32xf32> -> vector<8x32xf32>
    %c0_51 = arith.constant 0 : index
    %c1 = arith.constant 1 : index
    %c0_52 = arith.constant 0 : index
    %c0_53 = arith.constant 0 : index
    %78 = vector.load %arg7[%c0_51, %c1, %c0_52, %c0_53] : memref<2x2x32x16xbf16, #tpu.memory_space<vmem>>, vector<1x1x32x16xbf16>
    %79 = vector.shape_cast %78 : vector<1x1x32x16xbf16> to vector<32x16xbf16>
    %cst_54 = arith.constant dense<0.000000e+00> : vector<8x16xf32>
    %80 = tpu.matmul %32, %79, %cst_54 {dimension_numbers = #tpu.dot_dimension_numbers<[1], [0], [0], [1], [0, 0, 1, 1], [], []>} : vector<8x32xbf16>, vector<32x16xbf16>, vector<8x16xf32> -> vector<8x16xf32>
    %c0_55 = arith.constant 0 : index
    %c1_56 = arith.constant 1 : index
    %c0_57 = arith.constant 0 : index
    %c0_58 = arith.constant 0 : index
    %81 = vector.load %arg8[%c0_55, %c1_56, %c0_57, %c0_58] : memref<2x2x1x16xf32, #tpu.memory_space<vmem>>, vector<1x1x1x16xf32>
    %82 = vector.shape_cast %81 : vector<1x1x1x16xf32> to vector<1x16xf32>
    %83 = vector.broadcast %82 : vector<1x16xf32> to vector<8x16xf32>
    %84 = arith.addf %80, %83 : vector<8x16xf32>
    %c0_59 = arith.constant 0 : index
    %c1_60 = arith.constant 1 : index
    %c0_61 = arith.constant 0 : index
    %c0_62 = arith.constant 0 : index
    %85 = vector.load %arg9[%c0_59, %c1_60, %c0_61, %c0_62] : memref<2x2x16x32xbf16, #tpu.memory_space<vmem>>, vector<1x1x16x32xbf16>
    %86 = vector.shape_cast %85 : vector<1x1x16x32xbf16> to vector<16x32xbf16>
    %cst_63 = arith.constant dense<0.000000e+00> : vector<16x8xf32>
    %87 = tpu.matmul %86, %34, %cst_63 {dimension_numbers = #tpu.dot_dimension_numbers<[1], [0], [0], [1], [0, 0, 1, 1], [], []>} : vector<16x32xbf16>, vector<32x8xbf16>, vector<16x8xf32> -> vector<16x8xf32>
    %c0_64 = arith.constant 0 : index
    %c1_65 = arith.constant 1 : index
    %c0_66 = arith.constant 0 : index
    %c0_67 = arith.constant 0 : index
    %88 = vector.load %arg10[%c0_64, %c1_65, %c0_66, %c0_67] : memref<2x2x16x1xf32, #tpu.memory_space<vmem>>, vector<1x1x16x1xf32>
    %89 = vector.shape_cast %88 : vector<1x1x16x1xf32> to vector<16x1xf32>
    %90 = vector.broadcast %89 : vector<16x1xf32> to vector<16x8xf32>
    %91 = arith.addf %87, %90 : vector<16x8xf32>
    %c0_68 = arith.constant 0 : index
    %c1_69 = arith.constant 1 : index
    %c0_70 = arith.constant 0 : index
    %c0_71 = arith.constant 0 : index
    %92 = vector.load %arg11[%c0_68, %c1_69, %c0_70, %c0_71] : memref<2x2x32x16xbf16, #tpu.memory_space<vmem>>, vector<1x1x32x16xbf16>
    %93 = vector.shape_cast %92 : vector<1x1x32x16xbf16> to vector<32x16xbf16>
    %cst_72 = arith.constant dense<0.000000e+00> : vector<8x16xf32>
    %94 = tpu.matmul %32, %93, %cst_72 {dimension_numbers = #tpu.dot_dimension_numbers<[1], [0], [0], [1], [0, 0, 1, 1], [], []>} : vector<8x32xbf16>, vector<32x16xbf16>, vector<8x16xf32> -> vector<8x16xf32>
    %c0_73 = arith.constant 0 : index
    %c1_74 = arith.constant 1 : index
    %c0_75 = arith.constant 0 : index
    %c0_76 = arith.constant 0 : index
    %95 = vector.load %arg12[%c0_73, %c1_74, %c0_75, %c0_76] : memref<2x2x1x16xf32, #tpu.memory_space<vmem>>, vector<1x1x1x16xf32>
    %96 = vector.shape_cast %95 : vector<1x1x1x16xf32> to vector<1x16xf32>
    %97 = vector.broadcast %96 : vector<1x16xf32> to vector<8x16xf32>
    %98 = arith.addf %94, %97 : vector<8x16xf32>
    %99 = arith.truncf %84 : vector<8x16xf32> to vector<8x16xbf16>
    %100 = arith.truncf %91 : vector<16x8xf32> to vector<16x8xbf16>
    %cst_77 = arith.constant dense<0.000000e+00> : vector<8x8xf32>
    %101 = tpu.matmul %99, %100, %cst_77 {dimension_numbers = #tpu.dot_dimension_numbers<[1], [0], [0], [1], [0, 0, 1, 1], [], []>} : vector<8x16xbf16>, vector<16x8xbf16>, vector<8x8xf32> -> vector<8x8xf32>
    %102 = vector.broadcast %31 : vector<1x8xf32> to vector<8x8xf32>
    %103 = arith.addf %101, %102 : vector<8x8xf32>
    %cst_78 = arith.constant dense<0xFF800000> : vector<8xf32>
    %104 = vector.multi_reduction <maximumf>, %103, %cst_78 [1] : vector<8x8xf32> to vector<8xf32>
    %105 = vector.shape_cast %104 : vector<8xf32> to vector<8x1xf32>
    %106 = vector.broadcast %105 : vector<8x1xf32> to vector<8x8xf32>
    %107 = arith.subf %103, %106 : vector<8x8xf32>
    %108 = math.exp %107 : vector<8x8xf32>
    %cst_79 = arith.constant dense<0.000000e+00> : vector<8xf32>
    %109 = vector.multi_reduction <add>, %108, %cst_79 [1] : vector<8x8xf32> to vector<8xf32>
    %110 = vector.shape_cast %109 : vector<8xf32> to vector<8x1xf32>
    %111 = tpu.reciprocal %110 {approx = true} : vector<8x1xf32> -> vector<8x1xf32>
    %112 = vector.broadcast %111 : vector<8x1xf32> to vector<8x8xf32>
    %113 = arith.mulf %108, %112 : vector<8x8xf32>
    %114 = arith.truncf %113 : vector<8x8xf32> to vector<8x8xbf16>
    %115 = arith.truncf %98 : vector<8x16xf32> to vector<8x16xbf16>
    %cst_80 = arith.constant dense<0.000000e+00> : vector<8x16xf32>
    %116 = tpu.matmul %114, %115, %cst_80 {dimension_numbers = #tpu.dot_dimension_numbers<[1], [0], [0], [1], [0, 0, 1, 1], [], []>} : vector<8x8xbf16>, vector<8x16xbf16>, vector<8x16xf32> -> vector<8x16xf32>
    %117 = arith.truncf %116 : vector<8x16xf32> to vector<8x16xbf16>
    %c0_81 = arith.constant 0 : index
    %c1_82 = arith.constant 1 : index
    %c0_83 = arith.constant 0 : index
    %c0_84 = arith.constant 0 : index
    %118 = vector.load %arg13[%c0_81, %c1_82, %c0_83, %c0_84] : memref<2x2x16x32xbf16, #tpu.memory_space<vmem>>, vector<1x1x16x32xbf16>
    %119 = vector.shape_cast %118 : vector<1x1x16x32xbf16> to vector<16x32xbf16>
    %cst_85 = arith.constant dense<0.000000e+00> : vector<8x32xf32>
    %120 = tpu.matmul %117, %119, %cst_85 {dimension_numbers = #tpu.dot_dimension_numbers<[1], [0], [0], [1], [0, 0, 1, 1], [], []>} : vector<8x16xbf16>, vector<16x32xbf16>, vector<8x32xf32> -> vector<8x32xf32>
    %121 = arith.addf %77, %120 : vector<8x32xf32>
    %122 = arith.addf %25, %121 : vector<8x32xf32>
    %c0_86 = arith.constant 0 : index
    %c0_87 = arith.constant 0 : index
    %c0_88 = arith.constant 0 : index
    %123 = vector.load %arg14[%c0_86, %c0_87, %c0_88] : memref<2x1x32xf32, #tpu.memory_space<vmem>>, vector<1x1x32xf32>
    %124 = vector.shape_cast %123 : vector<1x1x32xf32> to vector<1x32xf32>
    %125 = vector.broadcast %124 : vector<1x32xf32> to vector<8x32xf32>
    %126 = arith.addf %122, %125 : vector<8x32xf32>
    %c0_89 = arith.constant 0 : index
    %c0_90 = arith.constant 0 : index
    %c0_91 = arith.constant 0 : index
    %127 = vector.load %arg15[%c0_89, %c0_90, %c0_91] : memref<2x1x32xf32, #tpu.memory_space<vmem>>, vector<1x1x32xf32>
    %128 = vector.shape_cast %127 : vector<1x1x32xf32> to vector<1x32xf32>
    %c0_92 = arith.constant 0 : index
    %c0_93 = arith.constant 0 : index
    %c0_94 = arith.constant 0 : index
    %129 = vector.load %arg16[%c0_92, %c0_93, %c0_94] : memref<2x1x32xf32, #tpu.memory_space<vmem>>, vector<1x1x32xf32>
    %130 = vector.shape_cast %129 : vector<1x1x32xf32> to vector<1x32xf32>
    %cst_95 = arith.constant dense<0.000000e+00> : vector<8xf32>
    %131 = vector.multi_reduction <add>, %126, %cst_95 [1] : vector<8x32xf32> to vector<8xf32>
    %132 = vector.shape_cast %131 : vector<8xf32> to vector<8x1xf32>
    %cst_96 = arith.constant 3.200000e+01 : f32
    %133 = vector.broadcast %cst_96 : f32 to vector<8x1xf32>
    %134 = arith.divf %132, %133 : vector<8x1xf32>
    %135 = vector.broadcast %134 : vector<8x1xf32> to vector<8x32xf32>
    %136 = arith.subf %126, %135 : vector<8x32xf32>
    %137 = arith.mulf %136, %136 : vector<8x32xf32>
    %cst_97 = arith.constant dense<0.000000e+00> : vector<8xf32>
    %138 = vector.multi_reduction <add>, %137, %cst_97 [1] : vector<8x32xf32> to vector<8xf32>
    %139 = vector.shape_cast %138 : vector<8xf32> to vector<8x1xf32>
    %cst_98 = arith.constant 3.200000e+01 : f32
    %140 = vector.broadcast %cst_98 : f32 to vector<8x1xf32>
    %141 = arith.divf %139, %140 : vector<8x1xf32>
    %142 = vector.broadcast %134 : vector<8x1xf32> to vector<8x32xf32>
    %143 = arith.subf %126, %142 : vector<8x32xf32>
    %cst_99 = arith.constant 9.99999996E-13 : f32
    %144 = vector.broadcast %cst_99 : f32 to vector<8x1xf32>
    %145 = arith.addf %141, %144 : vector<8x1xf32>
    %146 = math.rsqrt %145 : vector<8x1xf32>
    %147 = vector.broadcast %146 : vector<8x1xf32> to vector<8x32xf32>
    %148 = arith.mulf %143, %147 : vector<8x32xf32>
    %149 = vector.broadcast %128 : vector<1x32xf32> to vector<8x32xf32>
    %150 = arith.mulf %148, %149 : vector<8x32xf32>
    %151 = vector.broadcast %130 : vector<1x32xf32> to vector<8x32xf32>
    %152 = arith.addf %150, %151 : vector<8x32xf32>
    %153 = arith.truncf %152 : vector<8x32xf32> to vector<8x32xbf16>
    %c0_100 = arith.constant 0 : index
    %c0_101 = arith.constant 0 : index
    %c0_102 = arith.constant 0 : index
    %154 = vector.load %arg17[%c0_100, %c0_101, %c0_102] : memref<2x32x64xbf16, #tpu.memory_space<vmem>>, vector<1x32x64xbf16>
    %155 = vector.shape_cast %154 : vector<1x32x64xbf16> to vector<32x64xbf16>
    %cst_103 = arith.constant dense<0.000000e+00> : vector<8x64xf32>
    %156 = tpu.matmul %153, %155, %cst_103 {dimension_numbers = #tpu.dot_dimension_numbers<[1], [0], [0], [1], [0, 0, 1, 1], [], []>} : vector<8x32xbf16>, vector<32x64xbf16>, vector<8x64xf32> -> vector<8x64xf32>
    %c0_104 = arith.constant 0 : index
    %c0_105 = arith.constant 0 : index
    %c0_106 = arith.constant 0 : index
    %157 = vector.load %arg18[%c0_104, %c0_105, %c0_106] : memref<2x1x64xf32, #tpu.memory_space<vmem>>, vector<1x1x64xf32>
    %158 = vector.shape_cast %157 : vector<1x1x64xf32> to vector<1x64xf32>
    %159 = vector.broadcast %158 : vector<1x64xf32> to vector<8x64xf32>
    %160 = arith.addf %156, %159 : vector<8x64xf32>
    %161 = arith.mulf %160, %160 : vector<8x64xf32>
    %162 = arith.mulf %160, %161 : vector<8x64xf32>
    %cst_107 = arith.constant 4.471500e-02 : f32
    %163 = vector.broadcast %cst_107 : f32 to vector<8x64xf32>
    %164 = arith.mulf %163, %162 : vector<8x64xf32>
    %165 = arith.addf %160, %164 : vector<8x64xf32>
    %cst_108 = arith.constant 0.797884583 : f32
    %166 = vector.broadcast %cst_108 : f32 to vector<8x64xf32>
    %167 = arith.mulf %166, %165 : vector<8x64xf32>
    %168 = math.tanh %167 : vector<8x64xf32>
    %cst_109 = arith.constant 1.000000e+00 : f32
    %169 = vector.broadcast %cst_109 : f32 to vector<8x64xf32>
    %170 = arith.addf %169, %168 : vector<8x64xf32>
    %cst_110 = arith.constant 5.000000e-01 : f32
    %171 = vector.broadcast %cst_110 : f32 to vector<8x64xf32>
    %172 = arith.mulf %171, %170 : vector<8x64xf32>
    %173 = arith.mulf %160, %172 : vector<8x64xf32>
    %174 = arith.truncf %173 : vector<8x64xf32> to vector<8x64xbf16>
    %c0_111 = arith.constant 0 : index
    %c0_112 = arith.constant 0 : index
    %c0_113 = arith.constant 0 : index
    %175 = vector.load %arg19[%c0_111, %c0_112, %c0_113] : memref<2x64x32xbf16, #tpu.memory_space<vmem>>, vector<1x64x32xbf16>
    %176 = vector.shape_cast %175 : vector<1x64x32xbf16> to vector<64x32xbf16>
    %cst_114 = arith.constant dense<0.000000e+00> : vector<8x32xf32>
    %177 = tpu.matmul %174, %176, %cst_114 {dimension_numbers = #tpu.dot_dimension_numbers<[1], [0], [0], [1], [0, 0, 1, 1], [], []>} : vector<8x64xbf16>, vector<64x32xbf16>, vector<8x32xf32> -> vector<8x32xf32>
    %c0_115 = arith.constant 0 : index
    %c0_116 = arith.constant 0 : index
    %c0_117 = arith.constant 0 : index
    %178 = vector.load %arg20[%c0_115, %c0_116, %c0_117] : memref<2x1x32xf32, #tpu.memory_space<vmem>>, vector<1x1x32xf32>
    %179 = vector.shape_cast %178 : vector<1x1x32xf32> to vector<1x32xf32>
    %180 = vector.broadcast %179 : vector<1x32xf32> to vector<8x32xf32>
    %181 = arith.addf %177, %180 : vector<8x32xf32>
    %182 = arith.addf %152, %181 : vector<8x32xf32>
    %c0_118 = arith.constant 0 : index
    %c0_119 = arith.constant 0 : index
    %c0_120 = arith.constant 0 : index
    %183 = vector.load %arg21[%c0_118, %c0_119, %c0_120] : memref<2x1x32xf32, #tpu.memory_space<vmem>>, vector<1x1x32xf32>
    %184 = vector.shape_cast %183 : vector<1x1x32xf32> to vector<1x32xf32>
    %c0_121 = arith.constant 0 : index
    %c0_122 = arith.constant 0 : index
    %c0_123 = arith.constant 0 : index
    %185 = vector.load %arg22[%c0_121, %c0_122, %c0_123] : memref<2x1x32xf32, #tpu.memory_space<vmem>>, vector<1x1x32xf32>
    %186 = vector.shape_cast %185 : vector<1x1x32xf32> to vector<1x32xf32>
    %cst_124 = arith.constant dense<0.000000e+00> : vector<8xf32>
    %187 = vector.multi_reduction <add>, %182, %cst_124 [1] : vector<8x32xf32> to vector<8xf32>
    %188 = vector.shape_cast %187 : vector<8xf32> to vector<8x1xf32>
    %cst_125 = arith.constant 3.200000e+01 : f32
    %189 = vector.broadcast %cst_125 : f32 to vector<8x1xf32>
    %190 = arith.divf %188, %189 : vector<8x1xf32>
    %191 = vector.broadcast %190 : vector<8x1xf32> to vector<8x32xf32>
    %192 = arith.subf %182, %191 : vector<8x32xf32>
    %193 = arith.mulf %192, %192 : vector<8x32xf32>
    %cst_126 = arith.constant dense<0.000000e+00> : vector<8xf32>
    %194 = vector.multi_reduction <add>, %193, %cst_126 [1] : vector<8x32xf32> to vector<8xf32>
    %195 = vector.shape_cast %194 : vector<8xf32> to vector<8x1xf32>
    %cst_127 = arith.constant 3.200000e+01 : f32
    %196 = vector.broadcast %cst_127 : f32 to vector<8x1xf32>
    %197 = arith.divf %195, %196 : vector<8x1xf32>
    %198 = vector.broadcast %190 : vector<8x1xf32> to vector<8x32xf32>
    %199 = arith.subf %182, %198 : vector<8x32xf32>
    %cst_128 = arith.constant 9.99999996E-13 : f32
    %200 = vector.broadcast %cst_128 : f32 to vector<8x1xf32>
    %201 = arith.addf %197, %200 : vector<8x1xf32>
    %202 = math.rsqrt %201 : vector<8x1xf32>
    %203 = vector.broadcast %202 : vector<8x1xf32> to vector<8x32xf32>
    %204 = arith.mulf %199, %203 : vector<8x32xf32>
    %205 = vector.broadcast %184 : vector<1x32xf32> to vector<8x32xf32>
    %206 = arith.mulf %204, %205 : vector<8x32xf32>
    %207 = vector.broadcast %186 : vector<1x32xf32> to vector<8x32xf32>
    %208 = arith.addf %206, %207 : vector<8x32xf32>
    %209 = arith.truncf %208 : vector<8x32xf32> to vector<8x32xbf16>
    %210 = tpu.transpose %208, [1, 0] : vector<8x32xf32> -> vector<32x8xf32>
    %211 = arith.truncf %210 : vector<32x8xf32> to vector<32x8xbf16>
    %c1_129 = arith.constant 1 : index
    %c0_130 = arith.constant 0 : index
    %c0_131 = arith.constant 0 : index
    %c0_132 = arith.constant 0 : index
    %212 = vector.load %arg7[%c1_129, %c0_130, %c0_131, %c0_132] : memref<2x2x32x16xbf16, #tpu.memory_space<vmem>>, vector<1x1x32x16xbf16>
    %213 = vector.shape_cast %212 : vector<1x1x32x16xbf16> to vector<32x16xbf16>
    %cst_133 = arith.constant dense<0.000000e+00> : vector<8x16xf32>
    %214 = tpu.matmul %209, %213, %cst_133 {dimension_numbers = #tpu.dot_dimension_numbers<[1], [0], [0], [1], [0, 0, 1, 1], [], []>} : vector<8x32xbf16>, vector<32x16xbf16>, vector<8x16xf32> -> vector<8x16xf32>
    %c1_134 = arith.constant 1 : index
    %c0_135 = arith.constant 0 : index
    %c0_136 = arith.constant 0 : index
    %c0_137 = arith.constant 0 : index
    %215 = vector.load %arg8[%c1_134, %c0_135, %c0_136, %c0_137] : memref<2x2x1x16xf32, #tpu.memory_space<vmem>>, vector<1x1x1x16xf32>
    %216 = vector.shape_cast %215 : vector<1x1x1x16xf32> to vector<1x16xf32>
    %217 = vector.broadcast %216 : vector<1x16xf32> to vector<8x16xf32>
    %218 = arith.addf %214, %217 : vector<8x16xf32>
    %c1_138 = arith.constant 1 : index
    %c0_139 = arith.constant 0 : index
    %c0_140 = arith.constant 0 : index
    %c0_141 = arith.constant 0 : index
    %219 = vector.load %arg9[%c1_138, %c0_139, %c0_140, %c0_141] : memref<2x2x16x32xbf16, #tpu.memory_space<vmem>>, vector<1x1x16x32xbf16>
    %220 = vector.shape_cast %219 : vector<1x1x16x32xbf16> to vector<16x32xbf16>
    %cst_142 = arith.constant dense<0.000000e+00> : vector<16x8xf32>
    %221 = tpu.matmul %220, %211, %cst_142 {dimension_numbers = #tpu.dot_dimension_numbers<[1], [0], [0], [1], [0, 0, 1, 1], [], []>} : vector<16x32xbf16>, vector<32x8xbf16>, vector<16x8xf32> -> vector<16x8xf32>
    %c1_143 = arith.constant 1 : index
    %c0_144 = arith.constant 0 : index
    %c0_145 = arith.constant 0 : index
    %c0_146 = arith.constant 0 : index
    %222 = vector.load %arg10[%c1_143, %c0_144, %c0_145, %c0_146] : memref<2x2x16x1xf32, #tpu.memory_space<vmem>>, vector<1x1x16x1xf32>
    %223 = vector.shape_cast %222 : vector<1x1x16x1xf32> to vector<16x1xf32>
    %224 = vector.broadcast %223 : vector<16x1xf32> to vector<16x8xf32>
    %225 = arith.addf %221, %224 : vector<16x8xf32>
    %c1_147 = arith.constant 1 : index
    %c0_148 = arith.constant 0 : index
    %c0_149 = arith.constant 0 : index
    %c0_150 = arith.constant 0 : index
    %226 = vector.load %arg11[%c1_147, %c0_148, %c0_149, %c0_150] : memref<2x2x32x16xbf16, #tpu.memory_space<vmem>>, vector<1x1x32x16xbf16>
    %227 = vector.shape_cast %226 : vector<1x1x32x16xbf16> to vector<32x16xbf16>
    %cst_151 = arith.constant dense<0.000000e+00> : vector<8x16xf32>
    %228 = tpu.matmul %209, %227, %cst_151 {dimension_numbers = #tpu.dot_dimension_numbers<[1], [0], [0], [1], [0, 0, 1, 1], [], []>} : vector<8x32xbf16>, vector<32x16xbf16>, vector<8x16xf32> -> vector<8x16xf32>
    %c1_152 = arith.constant 1 : index
    %c0_153 = arith.constant 0 : index
    %c0_154 = arith.constant 0 : index
    %c0_155 = arith.constant 0 : index
    %229 = vector.load %arg12[%c1_152, %c0_153, %c0_154, %c0_155] : memref<2x2x1x16xf32, #tpu.memory_space<vmem>>, vector<1x1x1x16xf32>
    %230 = vector.shape_cast %229 : vector<1x1x1x16xf32> to vector<1x16xf32>
    %231 = vector.broadcast %230 : vector<1x16xf32> to vector<8x16xf32>
    %232 = arith.addf %228, %231 : vector<8x16xf32>
    %233 = arith.truncf %218 : vector<8x16xf32> to vector<8x16xbf16>
    %234 = arith.truncf %225 : vector<16x8xf32> to vector<16x8xbf16>
    %cst_156 = arith.constant dense<0.000000e+00> : vector<8x8xf32>
    %235 = tpu.matmul %233, %234, %cst_156 {dimension_numbers = #tpu.dot_dimension_numbers<[1], [0], [0], [1], [0, 0, 1, 1], [], []>} : vector<8x16xbf16>, vector<16x8xbf16>, vector<8x8xf32> -> vector<8x8xf32>
    %236 = vector.broadcast %31 : vector<1x8xf32> to vector<8x8xf32>
    %237 = arith.addf %235, %236 : vector<8x8xf32>
    %cst_157 = arith.constant dense<0xFF800000> : vector<8xf32>
    %238 = vector.multi_reduction <maximumf>, %237, %cst_157 [1] : vector<8x8xf32> to vector<8xf32>
    %239 = vector.shape_cast %238 : vector<8xf32> to vector<8x1xf32>
    %240 = vector.broadcast %239 : vector<8x1xf32> to vector<8x8xf32>
    %241 = arith.subf %237, %240 : vector<8x8xf32>
    %242 = math.exp %241 : vector<8x8xf32>
    %cst_158 = arith.constant dense<0.000000e+00> : vector<8xf32>
    %243 = vector.multi_reduction <add>, %242, %cst_158 [1] : vector<8x8xf32> to vector<8xf32>
    %244 = vector.shape_cast %243 : vector<8xf32> to vector<8x1xf32>
    %245 = tpu.reciprocal %244 {approx = true} : vector<8x1xf32> -> vector<8x1xf32>
    %246 = vector.broadcast %245 : vector<8x1xf32> to vector<8x8xf32>
    %247 = arith.mulf %242, %246 : vector<8x8xf32>
    %248 = arith.truncf %247 : vector<8x8xf32> to vector<8x8xbf16>
    %249 = arith.truncf %232 : vector<8x16xf32> to vector<8x16xbf16>
    %cst_159 = arith.constant dense<0.000000e+00> : vector<8x16xf32>
    %250 = tpu.matmul %248, %249, %cst_159 {dimension_numbers = #tpu.dot_dimension_numbers<[1], [0], [0], [1], [0, 0, 1, 1], [], []>} : vector<8x8xbf16>, vector<8x16xbf16>, vector<8x16xf32> -> vector<8x16xf32>
    %251 = arith.truncf %250 : vector<8x16xf32> to vector<8x16xbf16>
    %c1_160 = arith.constant 1 : index
    %c0_161 = arith.constant 0 : index
    %c0_162 = arith.constant 0 : index
    %c0_163 = arith.constant 0 : index
    %252 = vector.load %arg13[%c1_160, %c0_161, %c0_162, %c0_163] : memref<2x2x16x32xbf16, #tpu.memory_space<vmem>>, vector<1x1x16x32xbf16>
    %253 = vector.shape_cast %252 : vector<1x1x16x32xbf16> to vector<16x32xbf16>
    %cst_164 = arith.constant dense<0.000000e+00> : vector<8x32xf32>
    %254 = tpu.matmul %251, %253, %cst_164 {dimension_numbers = #tpu.dot_dimension_numbers<[1], [0], [0], [1], [0, 0, 1, 1], [], []>} : vector<8x16xbf16>, vector<16x32xbf16>, vector<8x32xf32> -> vector<8x32xf32>
    %c1_165 = arith.constant 1 : index
    %c1_166 = arith.constant 1 : index
    %c0_167 = arith.constant 0 : index
    %c0_168 = arith.constant 0 : index
    %255 = vector.load %arg7[%c1_165, %c1_166, %c0_167, %c0_168] : memref<2x2x32x16xbf16, #tpu.memory_space<vmem>>, vector<1x1x32x16xbf16>
    %256 = vector.shape_cast %255 : vector<1x1x32x16xbf16> to vector<32x16xbf16>
    %cst_169 = arith.constant dense<0.000000e+00> : vector<8x16xf32>
    %257 = tpu.matmul %209, %256, %cst_169 {dimension_numbers = #tpu.dot_dimension_numbers<[1], [0], [0], [1], [0, 0, 1, 1], [], []>} : vector<8x32xbf16>, vector<32x16xbf16>, vector<8x16xf32> -> vector<8x16xf32>
    %c1_170 = arith.constant 1 : index
    %c1_171 = arith.constant 1 : index
    %c0_172 = arith.constant 0 : index
    %c0_173 = arith.constant 0 : index
    %258 = vector.load %arg8[%c1_170, %c1_171, %c0_172, %c0_173] : memref<2x2x1x16xf32, #tpu.memory_space<vmem>>, vector<1x1x1x16xf32>
    %259 = vector.shape_cast %258 : vector<1x1x1x16xf32> to vector<1x16xf32>
    %260 = vector.broadcast %259 : vector<1x16xf32> to vector<8x16xf32>
    %261 = arith.addf %257, %260 : vector<8x16xf32>
    %c1_174 = arith.constant 1 : index
    %c1_175 = arith.constant 1 : index
    %c0_176 = arith.constant 0 : index
    %c0_177 = arith.constant 0 : index
    %262 = vector.load %arg9[%c1_174, %c1_175, %c0_176, %c0_177] : memref<2x2x16x32xbf16, #tpu.memory_space<vmem>>, vector<1x1x16x32xbf16>
    %263 = vector.shape_cast %262 : vector<1x1x16x32xbf16> to vector<16x32xbf16>
    %cst_178 = arith.constant dense<0.000000e+00> : vector<16x8xf32>
    %264 = tpu.matmul %263, %211, %cst_178 {dimension_numbers = #tpu.dot_dimension_numbers<[1], [0], [0], [1], [0, 0, 1, 1], [], []>} : vector<16x32xbf16>, vector<32x8xbf16>, vector<16x8xf32> -> vector<16x8xf32>
    %c1_179 = arith.constant 1 : index
    %c1_180 = arith.constant 1 : index
    %c0_181 = arith.constant 0 : index
    %c0_182 = arith.constant 0 : index
    %265 = vector.load %arg10[%c1_179, %c1_180, %c0_181, %c0_182] : memref<2x2x16x1xf32, #tpu.memory_space<vmem>>, vector<1x1x16x1xf32>
    %266 = vector.shape_cast %265 : vector<1x1x16x1xf32> to vector<16x1xf32>
    %267 = vector.broadcast %266 : vector<16x1xf32> to vector<16x8xf32>
    %268 = arith.addf %264, %267 : vector<16x8xf32>
    %c1_183 = arith.constant 1 : index
    %c1_184 = arith.constant 1 : index
    %c0_185 = arith.constant 0 : index
    %c0_186 = arith.constant 0 : index
    %269 = vector.load %arg11[%c1_183, %c1_184, %c0_185, %c0_186] : memref<2x2x32x16xbf16, #tpu.memory_space<vmem>>, vector<1x1x32x16xbf16>
    %270 = vector.shape_cast %269 : vector<1x1x32x16xbf16> to vector<32x16xbf16>
    %cst_187 = arith.constant dense<0.000000e+00> : vector<8x16xf32>
    %271 = tpu.matmul %209, %270, %cst_187 {dimension_numbers = #tpu.dot_dimension_numbers<[1], [0], [0], [1], [0, 0, 1, 1], [], []>} : vector<8x32xbf16>, vector<32x16xbf16>, vector<8x16xf32> -> vector<8x16xf32>
    %c1_188 = arith.constant 1 : index
    %c1_189 = arith.constant 1 : index
    %c0_190 = arith.constant 0 : index
    %c0_191 = arith.constant 0 : index
    %272 = vector.load %arg12[%c1_188, %c1_189, %c0_190, %c0_191] : memref<2x2x1x16xf32, #tpu.memory_space<vmem>>, vector<1x1x1x16xf32>
    %273 = vector.shape_cast %272 : vector<1x1x1x16xf32> to vector<1x16xf32>
    %274 = vector.broadcast %273 : vector<1x16xf32> to vector<8x16xf32>
    %275 = arith.addf %271, %274 : vector<8x16xf32>
    %276 = arith.truncf %261 : vector<8x16xf32> to vector<8x16xbf16>
    %277 = arith.truncf %268 : vector<16x8xf32> to vector<16x8xbf16>
    %cst_192 = arith.constant dense<0.000000e+00> : vector<8x8xf32>
    %278 = tpu.matmul %276, %277, %cst_192 {dimension_numbers = #tpu.dot_dimension_numbers<[1], [0], [0], [1], [0, 0, 1, 1], [], []>} : vector<8x16xbf16>, vector<16x8xbf16>, vector<8x8xf32> -> vector<8x8xf32>
    %279 = vector.broadcast %31 : vector<1x8xf32> to vector<8x8xf32>
    %280 = arith.addf %278, %279 : vector<8x8xf32>
    %cst_193 = arith.constant dense<0xFF800000> : vector<8xf32>
    %281 = vector.multi_reduction <maximumf>, %280, %cst_193 [1] : vector<8x8xf32> to vector<8xf32>
    %282 = vector.shape_cast %281 : vector<8xf32> to vector<8x1xf32>
    %283 = vector.broadcast %282 : vector<8x1xf32> to vector<8x8xf32>
    %284 = arith.subf %280, %283 : vector<8x8xf32>
    %285 = math.exp %284 : vector<8x8xf32>
    %cst_194 = arith.constant dense<0.000000e+00> : vector<8xf32>
    %286 = vector.multi_reduction <add>, %285, %cst_194 [1] : vector<8x8xf32> to vector<8xf32>
    %287 = vector.shape_cast %286 : vector<8xf32> to vector<8x1xf32>
    %288 = tpu.reciprocal %287 {approx = true} : vector<8x1xf32> -> vector<8x1xf32>
    %289 = vector.broadcast %288 : vector<8x1xf32> to vector<8x8xf32>
    %290 = arith.mulf %285, %289 : vector<8x8xf32>
    %291 = arith.truncf %290 : vector<8x8xf32> to vector<8x8xbf16>
    %292 = arith.truncf %275 : vector<8x16xf32> to vector<8x16xbf16>
    %cst_195 = arith.constant dense<0.000000e+00> : vector<8x16xf32>
    %293 = tpu.matmul %291, %292, %cst_195 {dimension_numbers = #tpu.dot_dimension_numbers<[1], [0], [0], [1], [0, 0, 1, 1], [], []>} : vector<8x8xbf16>, vector<8x16xbf16>, vector<8x16xf32> -> vector<8x16xf32>
    %294 = arith.truncf %293 : vector<8x16xf32> to vector<8x16xbf16>
    %c1_196 = arith.constant 1 : index
    %c1_197 = arith.constant 1 : index
    %c0_198 = arith.constant 0 : index
    %c0_199 = arith.constant 0 : index
    %295 = vector.load %arg13[%c1_196, %c1_197, %c0_198, %c0_199] : memref<2x2x16x32xbf16, #tpu.memory_space<vmem>>, vector<1x1x16x32xbf16>
    %296 = vector.shape_cast %295 : vector<1x1x16x32xbf16> to vector<16x32xbf16>
    %cst_200 = arith.constant dense<0.000000e+00> : vector<8x32xf32>
    %297 = tpu.matmul %294, %296, %cst_200 {dimension_numbers = #tpu.dot_dimension_numbers<[1], [0], [0], [1], [0, 0, 1, 1], [], []>} : vector<8x16xbf16>, vector<16x32xbf16>, vector<8x32xf32> -> vector<8x32xf32>
    %298 = arith.addf %254, %297 : vector<8x32xf32>
    %299 = arith.addf %208, %298 : vector<8x32xf32>
    %c1_201 = arith.constant 1 : index
    %c0_202 = arith.constant 0 : index
    %c0_203 = arith.constant 0 : index
    %300 = vector.load %arg14[%c1_201, %c0_202, %c0_203] : memref<2x1x32xf32, #tpu.memory_space<vmem>>, vector<1x1x32xf32>
    %301 = vector.shape_cast %300 : vector<1x1x32xf32> to vector<1x32xf32>
    %302 = vector.broadcast %301 : vector<1x32xf32> to vector<8x32xf32>
    %303 = arith.addf %299, %302 : vector<8x32xf32>
    %c1_204 = arith.constant 1 : index
    %c0_205 = arith.constant 0 : index
    %c0_206 = arith.constant 0 : index
    %304 = vector.load %arg15[%c1_204, %c0_205, %c0_206] : memref<2x1x32xf32, #tpu.memory_space<vmem>>, vector<1x1x32xf32>
    %305 = vector.shape_cast %304 : vector<1x1x32xf32> to vector<1x32xf32>
    %c1_207 = arith.constant 1 : index
    %c0_208 = arith.constant 0 : index
    %c0_209 = arith.constant 0 : index
    %306 = vector.load %arg16[%c1_207, %c0_208, %c0_209] : memref<2x1x32xf32, #tpu.memory_space<vmem>>, vector<1x1x32xf32>
    %307 = vector.shape_cast %306 : vector<1x1x32xf32> to vector<1x32xf32>
    %cst_210 = arith.constant dense<0.000000e+00> : vector<8xf32>
    %308 = vector.multi_reduction <add>, %303, %cst_210 [1] : vector<8x32xf32> to vector<8xf32>
    %309 = vector.shape_cast %308 : vector<8xf32> to vector<8x1xf32>
    %cst_211 = arith.constant 3.200000e+01 : f32
    %310 = vector.broadcast %cst_211 : f32 to vector<8x1xf32>
    %311 = arith.divf %309, %310 : vector<8x1xf32>
    %312 = vector.broadcast %311 : vector<8x1xf32> to vector<8x32xf32>
    %313 = arith.subf %303, %312 : vector<8x32xf32>
    %314 = arith.mulf %313, %313 : vector<8x32xf32>
    %cst_212 = arith.constant dense<0.000000e+00> : vector<8xf32>
    %315 = vector.multi_reduction <add>, %314, %cst_212 [1] : vector<8x32xf32> to vector<8xf32>
    %316 = vector.shape_cast %315 : vector<8xf32> to vector<8x1xf32>
    %cst_213 = arith.constant 3.200000e+01 : f32
    %317 = vector.broadcast %cst_213 : f32 to vector<8x1xf32>
    %318 = arith.divf %316, %317 : vector<8x1xf32>
    %319 = vector.broadcast %311 : vector<8x1xf32> to vector<8x32xf32>
    %320 = arith.subf %303, %319 : vector<8x32xf32>
    %cst_214 = arith.constant 9.99999996E-13 : f32
    %321 = vector.broadcast %cst_214 : f32 to vector<8x1xf32>
    %322 = arith.addf %318, %321 : vector<8x1xf32>
    %323 = math.rsqrt %322 : vector<8x1xf32>
    %324 = vector.broadcast %323 : vector<8x1xf32> to vector<8x32xf32>
    %325 = arith.mulf %320, %324 : vector<8x32xf32>
    %326 = vector.broadcast %305 : vector<1x32xf32> to vector<8x32xf32>
    %327 = arith.mulf %325, %326 : vector<8x32xf32>
    %328 = vector.broadcast %307 : vector<1x32xf32> to vector<8x32xf32>
    %329 = arith.addf %327, %328 : vector<8x32xf32>
    %330 = arith.truncf %329 : vector<8x32xf32> to vector<8x32xbf16>
    %c1_215 = arith.constant 1 : index
    %c0_216 = arith.constant 0 : index
    %c0_217 = arith.constant 0 : index
    %331 = vector.load %arg17[%c1_215, %c0_216, %c0_217] : memref<2x32x64xbf16, #tpu.memory_space<vmem>>, vector<1x32x64xbf16>
    %332 = vector.shape_cast %331 : vector<1x32x64xbf16> to vector<32x64xbf16>
    %cst_218 = arith.constant dense<0.000000e+00> : vector<8x64xf32>
    %333 = tpu.matmul %330, %332, %cst_218 {dimension_numbers = #tpu.dot_dimension_numbers<[1], [0], [0], [1], [0, 0, 1, 1], [], []>} : vector<8x32xbf16>, vector<32x64xbf16>, vector<8x64xf32> -> vector<8x64xf32>
    %c1_219 = arith.constant 1 : index
    %c0_220 = arith.constant 0 : index
    %c0_221 = arith.constant 0 : index
    %334 = vector.load %arg18[%c1_219, %c0_220, %c0_221] : memref<2x1x64xf32, #tpu.memory_space<vmem>>, vector<1x1x64xf32>
    %335 = vector.shape_cast %334 : vector<1x1x64xf32> to vector<1x64xf32>
    %336 = vector.broadcast %335 : vector<1x64xf32> to vector<8x64xf32>
    %337 = arith.addf %333, %336 : vector<8x64xf32>
    %338 = arith.mulf %337, %337 : vector<8x64xf32>
    %339 = arith.mulf %337, %338 : vector<8x64xf32>
    %cst_222 = arith.constant 4.471500e-02 : f32
    %340 = vector.broadcast %cst_222 : f32 to vector<8x64xf32>
    %341 = arith.mulf %340, %339 : vector<8x64xf32>
    %342 = arith.addf %337, %341 : vector<8x64xf32>
    %cst_223 = arith.constant 0.797884583 : f32
    %343 = vector.broadcast %cst_223 : f32 to vector<8x64xf32>
    %344 = arith.mulf %343, %342 : vector<8x64xf32>
    %345 = math.tanh %344 : vector<8x64xf32>
    %cst_224 = arith.constant 1.000000e+00 : f32
    %346 = vector.broadcast %cst_224 : f32 to vector<8x64xf32>
    %347 = arith.addf %346, %345 : vector<8x64xf32>
    %cst_225 = arith.constant 5.000000e-01 : f32
    %348 = vector.broadcast %cst_225 : f32 to vector<8x64xf32>
    %349 = arith.mulf %348, %347 : vector<8x64xf32>
    %350 = arith.mulf %337, %349 : vector<8x64xf32>
    %351 = arith.truncf %350 : vector<8x64xf32> to vector<8x64xbf16>
    %c1_226 = arith.constant 1 : index
    %c0_227 = arith.constant 0 : index
    %c0_228 = arith.constant 0 : index
    %352 = vector.load %arg19[%c1_226, %c0_227, %c0_228] : memref<2x64x32xbf16, #tpu.memory_space<vmem>>, vector<1x64x32xbf16>
    %353 = vector.shape_cast %352 : vector<1x64x32xbf16> to vector<64x32xbf16>
    %cst_229 = arith.constant dense<0.000000e+00> : vector<8x32xf32>
    %354 = tpu.matmul %351, %353, %cst_229 {dimension_numbers = #tpu.dot_dimension_numbers<[1], [0], [0], [1], [0, 0, 1, 1], [], []>} : vector<8x64xbf16>, vector<64x32xbf16>, vector<8x32xf32> -> vector<8x32xf32>
    %c1_230 = arith.constant 1 : index
    %c0_231 = arith.constant 0 : index
    %c0_232 = arith.constant 0 : index
    %355 = vector.load %arg20[%c1_230, %c0_231, %c0_232] : memref<2x1x32xf32, #tpu.memory_space<vmem>>, vector<1x1x32xf32>
    %356 = vector.shape_cast %355 : vector<1x1x32xf32> to vector<1x32xf32>
    %357 = vector.broadcast %356 : vector<1x32xf32> to vector<8x32xf32>
    %358 = arith.addf %354, %357 : vector<8x32xf32>
    %359 = arith.addf %329, %358 : vector<8x32xf32>
    %c1_233 = arith.constant 1 : index
    %c0_234 = arith.constant 0 : index
    %c0_235 = arith.constant 0 : index
    %360 = vector.load %arg21[%c1_233, %c0_234, %c0_235] : memref<2x1x32xf32, #tpu.memory_space<vmem>>, vector<1x1x32xf32>
    %361 = vector.shape_cast %360 : vector<1x1x32xf32> to vector<1x32xf32>
    %c1_236 = arith.constant 1 : index
    %c0_237 = arith.constant 0 : index
    %c0_238 = arith.constant 0 : index
    %362 = vector.load %arg22[%c1_236, %c0_237, %c0_238] : memref<2x1x32xf32, #tpu.memory_space<vmem>>, vector<1x1x32xf32>
    %363 = vector.shape_cast %362 : vector<1x1x32xf32> to vector<1x32xf32>
    %cst_239 = arith.constant dense<0.000000e+00> : vector<8xf32>
    %364 = vector.multi_reduction <add>, %359, %cst_239 [1] : vector<8x32xf32> to vector<8xf32>
    %365 = vector.shape_cast %364 : vector<8xf32> to vector<8x1xf32>
    %cst_240 = arith.constant 3.200000e+01 : f32
    %366 = vector.broadcast %cst_240 : f32 to vector<8x1xf32>
    %367 = arith.divf %365, %366 : vector<8x1xf32>
    %368 = vector.broadcast %367 : vector<8x1xf32> to vector<8x32xf32>
    %369 = arith.subf %359, %368 : vector<8x32xf32>
    %370 = arith.mulf %369, %369 : vector<8x32xf32>
    %cst_241 = arith.constant dense<0.000000e+00> : vector<8xf32>
    %371 = vector.multi_reduction <add>, %370, %cst_241 [1] : vector<8x32xf32> to vector<8xf32>
    %372 = vector.shape_cast %371 : vector<8xf32> to vector<8x1xf32>
    %cst_242 = arith.constant 3.200000e+01 : f32
    %373 = vector.broadcast %cst_242 : f32 to vector<8x1xf32>
    %374 = arith.divf %372, %373 : vector<8x1xf32>
    %375 = vector.broadcast %367 : vector<8x1xf32> to vector<8x32xf32>
    %376 = arith.subf %359, %375 : vector<8x32xf32>
    %cst_243 = arith.constant 9.99999996E-13 : f32
    %377 = vector.broadcast %cst_243 : f32 to vector<8x1xf32>
    %378 = arith.addf %374, %377 : vector<8x1xf32>
    %379 = math.rsqrt %378 : vector<8x1xf32>
    %380 = vector.broadcast %379 : vector<8x1xf32> to vector<8x32xf32>
    %381 = arith.mulf %376, %380 : vector<8x32xf32>
    %382 = vector.broadcast %361 : vector<1x32xf32> to vector<8x32xf32>
    %383 = arith.mulf %381, %382 : vector<8x32xf32>
    %384 = vector.broadcast %363 : vector<1x32xf32> to vector<8x32xf32>
    %385 = arith.addf %383, %384 : vector<8x32xf32>
    %386 = vector.extract_strided_slice %385 {offsets = [0, 0], sizes = [1, 32], strides = [1, 1]} : vector<8x32xf32> to vector<1x32xf32>
    %387 = arith.truncf %386 : vector<1x32xf32> to vector<1x32xbf16>
    %c0_244 = arith.constant 0 : index
    %c0_245 = arith.constant 0 : index
    %388 = vector.load %arg23[%c0_244, %c0_245] : memref<32x32xbf16, #tpu.memory_space<vmem>>, vector<32x32xbf16>
    %cst_246 = arith.constant dense<0.000000e+00> : vector<1x32xf32>
    %389 = tpu.matmul %387, %388, %cst_246 {dimension_numbers = #tpu.dot_dimension_numbers<[1], [0], [0], [1], [0, 0, 1, 1], [], []>} : vector<1x32xbf16>, vector<32x32xbf16>, vector<1x32xf32> -> vector<1x32xf32>
    %c0_247 = arith.constant 0 : index
    %c0_248 = arith.constant 0 : index
    %390 = vector.load %arg24[%c0_247, %c0_248] : memref<1x32xf32, #tpu.memory_space<vmem>>, vector<1x32xf32>
    %391 = arith.addf %389, %390 : vector<1x32xf32>
    %392 = math.tanh %391 : vector<1x32xf32>
    %c0_249 = arith.constant 0 : index
    %c0_250 = arith.constant 0 : index
    %393 = vector.load %arg25[%c0_249, %c0_250] : memref<1x32xf32, #tpu.memory_space<vmem>>, vector<1x32xf32>
    %394 = arith.mulf %392, %393 : vector<1x32xf32>
    %cst_251 = arith.constant dense<0.000000e+00> : vector<1xf32>
    %395 = vector.multi_reduction <add>, %394, %cst_251 [1] : vector<1x32xf32> to vector<1xf32>
    %396 = vector.shape_cast %395 : vector<1xf32> to vector<1x1xf32>
    %c0_252 = arith.constant 0 : index
    %c0_253 = arith.constant 0 : index
    %c0_254 = arith.constant 0 : index
    %397 = vector.load %arg3[%c0_252, %c0_253, %c0_254] : memref<1x1x4xf32, #tpu.memory_space<vmem>>, vector<1x1x4xf32>
    %398 = vector.shape_cast %397 : vector<1x1x4xf32> to vector<1x4xf32>
    %c0_255 = arith.constant 0 : index
    %c0_256 = arith.constant 0 : index
    %399 = vector.load %arg26[%c0_255, %c0_256] : memref<1x4xf32, #tpu.memory_space<vmem>>, vector<1x4xf32>
    %400 = arith.mulf %398, %399 : vector<1x4xf32>
    %cst_257 = arith.constant dense<0.000000e+00> : vector<1xf32>
    %401 = vector.multi_reduction <add>, %400, %cst_257 [1] : vector<1x4xf32> to vector<1xf32>
    %402 = vector.shape_cast %401 : vector<1xf32> to vector<1x1xf32>
    %403 = arith.addf %396, %402 : vector<1x1xf32>
    %c0_258 = arith.constant 0 : index
    %c0_259 = arith.constant 0 : index
    %404 = vector.load %arg27[%c0_258, %c0_259] : memref<1x1xf32, #tpu.memory_space<vmem>>, vector<1x1xf32>
    %405 = arith.addf %403, %404 : vector<1x1xf32>
    %406 = arith.negf %405 : vector<1x1xf32>
    %407 = math.exp %406 : vector<1x1xf32>
    %cst_260 = arith.constant 1.000000e+00 : f32
    %408 = vector.broadcast %cst_260 : f32 to vector<1x1xf32>
    %409 = arith.addf %408, %407 : vector<1x1xf32>
    %410 = arith.divf %408, %409 : vector<1x1xf32>
    %c0_261 = arith.constant 0 : index
    %c0_262 = arith.constant 0 : index
    %c0_263 = arith.constant 0 : index
    %411 = vector.load %arg28[%c0_261, %c0_262, %c0_263] : memref<1x1x1xf32, #tpu.memory_space<vmem>>, vector<1x1x1xf32>
    %412 = vector.shape_cast %411 : vector<1x1x1xf32> to vector<1x1xf32>
    %413 = vector.shape_cast %410 : vector<1x1xf32> to vector<1x1x1xf32>
    tpu.vector_store %arg28[%c0_261, %c0_262, %c0_263], %413 {strides = array<i32>} : memref<1x1x1xf32, #tpu.memory_space<vmem>>, vector<1x1x1xf32>,
    %c0_264 = arith.constant 0 : index
    %c0_265 = arith.constant 0 : index
    %c0_266 = arith.constant 0 : index
    %414 = vector.load %arg4[%c0_264, %c0_265, %c0_266] : memref<1x1x1xf32, #tpu.memory_space<vmem>>, vector<1x1x1xf32>
    %415 = vector.shape_cast %414 : vector<1x1x1xf32> to vector<1x1xf32>
    %416 = math.log %410 : vector<1x1xf32>
    %cst_267 = arith.constant -1.000000e+02 : f32
    %417 = vector.broadcast %cst_267 : f32 to vector<1x1xf32>
    %418 = arith.maximumf %416, %417 : vector<1x1xf32>
    %419 = arith.mulf %415, %418 : vector<1x1xf32>
    %cst_268 = arith.constant 1.000000e+00 : f32
    %420 = vector.broadcast %cst_268 : f32 to vector<1x1xf32>
    %421 = arith.subf %420, %415 : vector<1x1xf32>
    %cst_269 = arith.constant 1.000000e+00 : f32
    %422 = vector.broadcast %cst_269 : f32 to vector<1x1xf32>
    %423 = arith.subf %422, %410 : vector<1x1xf32>
    %424 = math.log %423 : vector<1x1xf32>
    %cst_270 = arith.constant -1.000000e+02 : f32
    %425 = vector.broadcast %cst_270 : f32 to vector<1x1xf32>
    %426 = arith.maximumf %424, %425 : vector<1x1xf32>
    %427 = arith.mulf %421, %426 : vector<1x1xf32>
    %428 = arith.addf %419, %427 : vector<1x1xf32>
    %cst_271 = arith.constant 0.000000e+00 : f32
    %429 = vector.broadcast %cst_271 : f32 to vector<1x1xf32>
    %430 = arith.subf %429, %428 : vector<1x1xf32>
    %c0_272 = arith.constant 0 : index
    %c0_273 = arith.constant 0 : index
    %c0_274 = arith.constant 0 : index
    %431 = vector.load %arg29[%c0_272, %c0_273, %c0_274] : memref<1x1x1xf32, #tpu.memory_space<vmem>>, vector<1x1x1xf32>
    %432 = vector.shape_cast %431 : vector<1x1x1xf32> to vector<1x1xf32>
    %433 = vector.shape_cast %430 : vector<1x1xf32> to vector<1x1x1xf32>
    tpu.vector_store %arg29[%c0_272, %c0_273, %c0_274], %433 {strides = array<i32>} : memref<1x1x1xf32, #tpu.memory_space<vmem>>, vector<1x1x1xf32>,
    return
  }
  func.func @transform_0(%arg0: i32) -> (i32, i32, i32) {
    %c0_i32 = arith.constant 0 : i32
    %c0_i32_0 = arith.constant 0 : i32
    %c0_i32_1 = arith.constant 0 : i32
    return %arg0, %c0_i32, %c0_i32_0 : i32, i32, i32
  }
  func.func @transform_1(%arg0: i32) -> (i32, i32, i32) {
    %c0_i32 = arith.constant 0 : i32
    %c0_i32_0 = arith.constant 0 : i32
    %c0_i32_1 = arith.constant 0 : i32
    return %arg0, %c0_i32, %c0_i32_0 : i32, i32, i32
  }
  func.func @transform_2(%arg0: i32) -> (i32, i32, i32) {
    %c0_i32 = arith.constant 0 : i32
    %c0_i32_0 = arith.constant 0 : i32
    %c0_i32_1 = arith.constant 0 : i32
    return %arg0, %c0_i32, %c0_i32_0 : i32, i32, i32
  }
  func.func @transform_3(%arg0: i32) -> (i32, i32, i32) {
    %c0_i32 = arith.constant 0 : i32
    %c0_i32_0 = arith.constant 0 : i32
    %c0_i32_1 = arith.constant 0 : i32
    return %arg0, %c0_i32, %c0_i32_0 : i32, i32, i32
  }
  func.func @transform_4(%arg0: i32) -> (i32, i32) {
    %c0_i32 = arith.constant 0 : i32
    %c0_i32_0 = arith.constant 0 : i32
    %c0_i32_1 = arith.constant 0 : i32
    return %c0_i32, %c0_i32_0 : i32, i32
  }
  func.func @transform_5(%arg0: i32) -> (i32, i32) {
    %c0_i32 = arith.constant 0 : i32
    %c0_i32_0 = arith.constant 0 : i32
    %c0_i32_1 = arith.constant 0 : i32
    return %c0_i32, %c0_i32_0 : i32, i32
  }
  func.func @transform_6(%arg0: i32) -> (i32, i32, i32, i32) {
    %c0_i32 = arith.constant 0 : i32
    %c0_i32_0 = arith.constant 0 : i32
    %c0_i32_1 = arith.constant 0 : i32
    %c0_i32_2 = arith.constant 0 : i32
    %c0_i32_3 = arith.constant 0 : i32
    return %c0_i32, %c0_i32_0, %c0_i32_1, %c0_i32_2 : i32, i32, i32, i32
  }
  func.func @transform_7(%arg0: i32) -> (i32, i32, i32, i32) {
    %c0_i32 = arith.constant 0 : i32
    %c0_i32_0 = arith.constant 0 : i32
    %c0_i32_1 = arith.constant 0 : i32
    %c0_i32_2 = arith.constant 0 : i32
    %c0_i32_3 = arith.constant 0 : i32
    return %c0_i32, %c0_i32_0, %c0_i32_1, %c0_i32_2 : i32, i32, i32, i32
  }
  func.func @transform_8(%arg0: i32) -> (i32, i32, i32, i32) {
    %c0_i32 = arith.constant 0 : i32
    %c0_i32_0 = arith.constant 0 : i32
    %c0_i32_1 = arith.constant 0 : i32
    %c0_i32_2 = arith.constant 0 : i32
    %c0_i32_3 = arith.constant 0 : i32
    return %c0_i32, %c0_i32_0, %c0_i32_1, %c0_i32_2 : i32, i32, i32, i32
  }
  func.func @transform_9(%arg0: i32) -> (i32, i32, i32, i32) {
    %c0_i32 = arith.constant 0 : i32
    %c0_i32_0 = arith.constant 0 : i32
    %c0_i32_1 = arith.constant 0 : i32
    %c0_i32_2 = arith.constant 0 : i32
    %c0_i32_3 = arith.constant 0 : i32
    return %c0_i32, %c0_i32_0, %c0_i32_1, %c0_i32_2 : i32, i32, i32, i32
  }
  func.func @transform_10(%arg0: i32) -> (i32, i32, i32, i32) {
    %c0_i32 = arith.constant 0 : i32
    %c0_i32_0 = arith.constant 0 : i32
    %c0_i32_1 = arith.constant 0 : i32
    %c0_i32_2 = arith.constant 0 : i32
    %c0_i32_3 = arith.constant 0 : i32
    return %c0_i32, %c0_i32_0, %c0_i32_1, %c0_i32_2 : i32, i32, i32, i32
  }
  func.func @transform_11(%arg0: i32) -> (i32, i32, i32, i32) {
    %c0_i32 = arith.constant 0 : i32
    %c0_i32_0 = arith.constant 0 : i32
    %c0_i32_1 = arith.constant 0 : i32
    %c0_i32_2 = arith.constant 0 : i32
    %c0_i32_3 = arith.constant 0 : i32
    return %c0_i32, %c0_i32_0, %c0_i32_1, %c0_i32_2 : i32, i32, i32, i32
  }
  func.func @transform_12(%arg0: i32) -> (i32, i32, i32, i32) {
    %c0_i32 = arith.constant 0 : i32
    %c0_i32_0 = arith.constant 0 : i32
    %c0_i32_1 = arith.constant 0 : i32
    %c0_i32_2 = arith.constant 0 : i32
    %c0_i32_3 = arith.constant 0 : i32
    return %c0_i32, %c0_i32_0, %c0_i32_1, %c0_i32_2 : i32, i32, i32, i32
  }
  func.func @transform_13(%arg0: i32) -> (i32, i32, i32) {
    %c0_i32 = arith.constant 0 : i32
    %c0_i32_0 = arith.constant 0 : i32
    %c0_i32_1 = arith.constant 0 : i32
    %c0_i32_2 = arith.constant 0 : i32
    return %c0_i32, %c0_i32_0, %c0_i32_1 : i32, i32, i32
  }
  func.func @transform_14(%arg0: i32) -> (i32, i32, i32) {
    %c0_i32 = arith.constant 0 : i32
    %c0_i32_0 = arith.constant 0 : i32
    %c0_i32_1 = arith.constant 0 : i32
    %c0_i32_2 = arith.constant 0 : i32
    return %c0_i32, %c0_i32_0, %c0_i32_1 : i32, i32, i32
  }
  func.func @transform_15(%arg0: i32) -> (i32, i32, i32) {
    %c0_i32 = arith.constant 0 : i32
    %c0_i32_0 = arith.constant 0 : i32
    %c0_i32_1 = arith.constant 0 : i32
    %c0_i32_2 = arith.constant 0 : i32
    return %c0_i32, %c0_i32_0, %c0_i32_1 : i32, i32, i32
  }
  func.func @transform_16(%arg0: i32) -> (i32, i32, i32) {
    %c0_i32 = arith.constant 0 : i32
    %c0_i32_0 = arith.constant 0 : i32
    %c0_i32_1 = arith.constant 0 : i32
    %c0_i32_2 = arith.constant 0 : i32
    return %c0_i32, %c0_i32_0, %c0_i32_1 : i32, i32, i32
  }
  func.func @transform_17(%arg0: i32) -> (i32, i32, i32) {
    %c0_i32 = arith.constant 0 : i32
    %c0_i32_0 = arith.constant 0 : i32
    %c0_i32_1 = arith.constant 0 : i32
    %c0_i32_2 = arith.constant 0 : i32
    return %c0_i32, %c0_i32_0, %c0_i32_1 : i32, i32, i32
  }
  func.func @transform_18(%arg0: i32) -> (i32, i32, i32) {
    %c0_i32 = arith.constant 0 : i32
    %c0_i32_0 = arith.constant 0 : i32
    %c0_i32_1 = arith.constant 0 : i32
    %c0_i32_2 = arith.constant 0 : i32
    return %c0_i32, %c0_i32_0, %c0_i32_1 : i32, i32, i32
  }
  func.func @transform_19(%arg0: i32) -> (i32, i32, i32) {
    %c0_i32 = arith.constant 0 : i32
    %c0_i32_0 = arith.constant 0 : i32
    %c0_i32_1 = arith.constant 0 : i32
    %c0_i32_2 = arith.constant 0 : i32
    return %c0_i32, %c0_i32_0, %c0_i32_1 : i32, i32, i32
  }
  func.func @transform_20(%arg0: i32) -> (i32, i32, i32) {
    %c0_i32 = arith.constant 0 : i32
    %c0_i32_0 = arith.constant 0 : i32
    %c0_i32_1 = arith.constant 0 : i32
    %c0_i32_2 = arith.constant 0 : i32
    return %c0_i32, %c0_i32_0, %c0_i32_1 : i32, i32, i32
  }
  func.func @transform_21(%arg0: i32) -> (i32, i32, i32) {
    %c0_i32 = arith.constant 0 : i32
    %c0_i32_0 = arith.constant 0 : i32
    %c0_i32_1 = arith.constant 0 : i32
    %c0_i32_2 = arith.constant 0 : i32
    return %c0_i32, %c0_i32_0, %c0_i32_1 : i32, i32, i32
  }
  func.func @transform_22(%arg0: i32) -> (i32, i32) {
    %c0_i32 = arith.constant 0 : i32
    %c0_i32_0 = arith.constant 0 : i32
    %c0_i32_1 = arith.constant 0 : i32
    return %c0_i32, %c0_i32_0 : i32, i32
  }
  func.func @transform_23(%arg0: i32) -> (i32, i32) {
    %c0_i32 = arith.constant 0 : i32
    %c0_i32_0 = arith.constant 0 : i32
    %c0_i32_1 = arith.constant 0 : i32
    return %c0_i32, %c0_i32_0 : i32, i32
  }
  func.func @transform_24(%arg0: i32) -> (i32, i32) {
    %c0_i32 = arith.constant 0 : i32
    %c0_i32_0 = arith.constant 0 : i32
    %c0_i32_1 = arith.constant 0 : i32
    return %c0_i32, %c0_i32_0 : i32, i32
  }
  func.func @transform_25(%arg0: i32) -> (i32, i32) {
    %c0_i32 = arith.constant 0 : i32
    %c0_i32_0 = arith.constant 0 : i32
    %c0_i32_1 = arith.constant 0 : i32
    return %c0_i32, %c0_i32_0 : i32, i32
  }
  func.func @transform_26(%arg0: i32) -> (i32, i32) {
    %c0_i32 = arith.constant 0 : i32
    %c0_i32_0 = arith.constant 0 : i32
    %c0_i32_1 = arith.constant 0 : i32
    return %c0_i32, %c0_i32_0 : i32, i32
  }
  func.func @transform_27(%arg0: i32) -> (i32, i32, i32) {
    %c0_i32 = arith.constant 0 : i32
    %c0_i32_0 = arith.constant 0 : i32
    %c0_i32_1 = arith.constant 0 : i32
    return %arg0, %c0_i32, %c0_i32_0 : i32, i32, i32
  }
  func.func @transform_28(%arg0: i32) -> (i32, i32, i32) {
    %c0_i32 = arith.constant 0 : i32
    %c0_i32_0 = arith.constant 0 : i32
    %c0_i32_1 = arith.constant 0 : i32
    return %arg0, %c0_i32, %c0_i32_0 : i32, i32, i32
  }
}

</mosaic_0001>

<llo_original>
// kernel: tpu_custom_call.1
$region0: #{tpu_custom_call.1}
  #allocation0 [shape = 'u32[]', space=smem, size = 0x4, offset = 0x4, fixed_abs, tag = 'smem constant byte address 0x4 - core index']
  #allocation1 [shape = 'u32[144,128]{1,0:T(1,128)}', space=vmem, size = 0x12000, scoped, tag = 'internal scratch']
  #allocation2 [shape = 'f32[1,1]{1,0:T(1,128)S(1)}', space=vmem, size = 0x200, scoped, tag = 'scoped memory for tpu_custom_call.1']
  %s0 = inlined_call_operand.vmem [shape: f32[2,8,32], index: 0, kind: input, shape index: {}]
  %s1 = inlined_call_operand.vmem [shape: f32[2,1,8], index: 1, kind: input, shape index: {}]
  %s2 = inlined_call_operand.vmem [shape: f32[2,1,4], index: 2, kind: input, shape index: {}]
  %s3 = inlined_call_operand.vmem [shape: f32[2,1,1], index: 3, kind: input, shape index: {}]
  %s4 = inlined_call_operand.vmem [shape: f32[1,32], index: 4, kind: input, shape index: {}]
  %s5 = inlined_call_operand.vmem [shape: f32[1,32], index: 5, kind: input, shape index: {}]
  %s6 = inlined_call_operand.vmem [shape: bf16[2,2,32,16], index: 6, kind: input, shape index: {}]
  %s7 = inlined_call_operand.vmem [shape: f32[2,2,1,16], index: 7, kind: input, shape index: {}]
  %s8 = inlined_call_operand.vmem [shape: bf16[2,2,16,32], index: 8, kind: input, shape index: {}]
  %s9 = inlined_call_operand.vmem [shape: f32[2,2,16,1], index: 9, kind: input, shape index: {}]
  %s10 = inlined_call_operand.vmem [shape: bf16[2,2,32,16], index: 10, kind: input, shape index: {}]
  %s11 = inlined_call_operand.vmem [shape: f32[2,2,1,16], index: 11, kind: input, shape index: {}]
  %s12 = inlined_call_operand.vmem [shape: bf16[2,2,16,32], index: 12, kind: input, shape index: {}]
  %s13 = inlined_call_operand.vmem [shape: f32[2,1,32], index: 13, kind: input, shape index: {}]
  %s14 = inlined_call_operand.vmem [shape: f32[2,1,32], index: 14, kind: input, shape index: {}]
  %s15 = inlined_call_operand.vmem [shape: f32[2,1,32], index: 15, kind: input, shape index: {}]
  %s16 = inlined_call_operand.vmem [shape: bf16[2,32,64], index: 16, kind: input, shape index: {}]
  %s17 = inlined_call_operand.vmem [shape: f32[2,1,64], index: 17, kind: input, shape index: {}]
  %s18 = inlined_call_operand.vmem [shape: bf16[2,64,32], index: 18, kind: input, shape index: {}]
  %s19 = inlined_call_operand.vmem [shape: f32[2,1,32], index: 19, kind: input, shape index: {}]
  %s20 = inlined_call_operand.vmem [shape: f32[2,1,32], index: 20, kind: input, shape index: {}]
  %s21 = inlined_call_operand.vmem [shape: f32[2,1,32], index: 21, kind: input, shape index: {}]
  %s22 = inlined_call_operand.vmem [shape: bf16[32,32], index: 22, kind: input, shape index: {}]
  %s23 = inlined_call_operand.vmem [shape: f32[1,32], index: 23, kind: input, shape index: {}]
  %s24 = inlined_call_operand.vmem [shape: f32[1,32], index: 24, kind: input, shape index: {}]
  %s25 = inlined_call_operand.vmem [shape: f32[1,4], index: 25, kind: input, shape index: {}]
  %s26 = inlined_call_operand.<no memory space> [shape: f32[1,1], index: 26, kind: input, shape index: {}]
  %s27 = inlined_call_operand.vmem [shape: f32[2,1,1], index: 27, kind: output, shape index: {0}]
  %s28 = inlined_call_operand.vmem [shape: f32[2,1,1], index: 28, kind: output, shape index: {1}]
  %29 = xla_tuple %s27, %s28
  %s30 = sld [smem:[#allocation0]]
  $region149: #{tpu_custom_call.1} parent=0
    _
  %s32 = ssub.s32 1, %s30
  %s33 = scalar_select 0, %s32, %s30
  %v34 = vstv %s26
  %35 = vst [vmem:[#allocation2] sm:$0x1] %v34
  loop: start=0, step=1, limit=4
  $region2: #{tpu_custom_call.1} parent=0 // loop_pre_header
    _
  $region3: #{tpu_custom_call.1} parent=0 // loop_header
    %s37 = sphi 0, %s41
    %p38 = scmp.ge.s32.totalorder %s37, 4
    %s47 = sphi 0, %s49
    %s50 = sphi 0, %s47
    %s51 = sphi 0, %s50
    %s67 = sphi 0, %s51
    %s73 = sphi 0, %s75
    %s76 = sphi 0, %s73
    %s77 = sphi 0, %s76
    %s93 = sphi 0, %s77
    %s99 = sphi 0, %s101
    %s102 = sphi 0, %s99
    %s103 = sphi 0, %s102
    %s119 = sphi 0, %s103
    %s125 = sphi 0, %s127
    %s128 = sphi 0, %s125
    %s129 = sphi 0, %s128
    %s145 = sphi 0, %s129
    %s149 = sphi 0, %s149
    %s151 = sphi 0, %s149
    %s152 = sphi 0, %s151
    %s166 = sphi 0, %s152
    %s170 = sphi 0, %s170
    %s172 = sphi 0, %s170
    %s173 = sphi 0, %s172
    %s187 = sphi 0, %s173
    %s191 = sphi 0, %s191
    %s193 = sphi 0, %s191
    %s194 = sphi 0, %s193
    %s208 = sphi 0, %s194
    %s212 = sphi 0, %s212
    %s214 = sphi 0, %s212
    %s215 = sphi 0, %s214
    %s229 = sphi 0, %s215
    %s233 = sphi 0, %s233
    %s235 = sphi 0, %s233
    %s236 = sphi 0, %s235
    %s250 = sphi 0, %s236
    %s254 = sphi 0, %s254
    %s256 = sphi 0, %s254
    %s257 = sphi 0, %s256
    %s271 = sphi 0, %s257
    %s275 = sphi 0, %s275
    %s277 = sphi 0, %s275
    %s278 = sphi 0, %s277
    %s292 = sphi 0, %s278
    %s296 = sphi 0, %s296
    %s298 = sphi 0, %s296
    %s299 = sphi 0, %s298
    %s313 = sphi 0, %s299
    %s317 = sphi 0, %s317
    %s319 = sphi 0, %s317
    %s320 = sphi 0, %s319
    %s334 = sphi 0, %s320
    %s338 = sphi 0, %s338
    %s340 = sphi 0, %s338
    %s341 = sphi 0, %s340
    %s355 = sphi 0, %s341
    %s359 = sphi 0, %s359
    %s361 = sphi 0, %s359
    %s362 = sphi 0, %s361
    %s376 = sphi 0, %s362
    %s380 = sphi 0, %s380
    %s382 = sphi 0, %s380
    %s383 = sphi 0, %s382
    %s397 = sphi 0, %s383
    %s401 = sphi 0, %s401
    %s403 = sphi 0, %s401
    %s404 = sphi 0, %s403
    %s418 = sphi 0, %s404
    %s422 = sphi 0, %s422
    %s424 = sphi 0, %s422
    %s425 = sphi 0, %s424
    %s439 = sphi 0, %s425
    %s443 = sphi 0, %s443
    %s445 = sphi 0, %s443
    %s446 = sphi 0, %s445
    %s460 = sphi 0, %s446
    %s464 = sphi 0, %s464
    %s466 = sphi 0, %s464
    %s467 = sphi 0, %s466
    %s481 = sphi 0, %s467
    %s485 = sphi 0, %s485
    %s487 = sphi 0, %s485
    %s488 = sphi 0, %s487
    %s502 = sphi 0, %s488
    %s506 = sphi 0, %s506
    %s508 = sphi 0, %s506
    %s509 = sphi 0, %s508
    %s523 = sphi 0, %s509
    %s527 = sphi 0, %s527
    %s529 = sphi 0, %s527
    %s530 = sphi 0, %s529
    %s544 = sphi 0, %s530
    %s548 = sphi 0, %s548
    %s550 = sphi 0, %s548
    %s551 = sphi 0, %s550
    %s565 = sphi 0, %s551
    %s569 = sphi 0, %s569
    %s571 = sphi 0, %s569
    %s572 = sphi 0, %s571
    %s586 = sphi 0, %s572
    %s590 = sphi 0, %s590
    %s592 = sphi 0, %s590
    %s593 = sphi 0, %s592
    %s607 = sphi 0, %s593
    %s611 = sphi 0, %s611
    %s613 = sphi 0, %s611
    %s614 = sphi 0, %s613
    %s628 = sphi 0, %s614
    %s634 = sphi 0, %s636
    %s637 = sphi 0, %s634
    %s638 = sphi 0, %s637
    %s654 = sphi 0, %s638
    %s660 = sphi 0, %s662
    %s663 = sphi 0, %s660
    %s664 = sphi 0, %s663
    %s680 = sphi 0, %s664
  $region4: #{tpu_custom_call.1} parent=0 // loop_header_branch
    %40 = sbr.rel (%p38) target = $region8
  $region5: #{tpu_custom_call.1} parent=0 // loop_body
    %s42 = ssub.s32 %s37, 1
    %s43 = ssub.s32 %s37, 2
    %s44 = sadd.s32 %s37, 1
    %s45 = ssub.s32 %s37, %s44
    %p46 = scmp.eq.s32.totalorder %s45, 0
    %s48 = sadd.s32 %s47, 1
    %s49 = scalar_select %p46, %s47, %s48
    %p52 = pneg %p46
    %p53 = scmp.eq.s32.totalorder %s37, 1
    %p54 = por %p52, %p53
    %p55 = scmp.ne.s32.totalorder %s47, %s50
    %p56 = scmp.eq.s32.totalorder %s37, 0
    %p57 = por %p55, %p56
    %p58 = scmp.ne.s32.totalorder %s47, %s50
    %p59 = scmp.eq.s32.totalorder %s42, 1
    %p60 = por %p58, %p59
    %p61 = scmp.ne.s32.totalorder %s50, %s51
    %p62 = scmp.eq.s32.totalorder %s42, 0
    %p63 = por %p61, %p62
    %p64 = scmp.ne.s32.totalorder %s50, %s51
    %p65 = scmp.eq.s32.totalorder %s43, 1
    %p66 = por %p64, %p65
    %p68 = scmp.ne.s32.totalorder %s51, %s67
    %p69 = scmp.eq.s32.totalorder %s43, 0
    %p70 = por %p68, %p69
    %s71 = ssub.s32 %s37, %s44
    %p72 = scmp.eq.s32.totalorder %s71, 0
    %s74 = sadd.s32 %s73, 1
    %s75 = scalar_select %p72, %s73, %s74
    %p78 = pneg %p72
    %p79 = scmp.eq.s32.totalorder %s37, 1
    %p80 = por %p78, %p79
    %p81 = scmp.ne.s32.totalorder %s73, %s76
    %p82 = scmp.eq.s32.totalorder %s37, 0
    %p83 = por %p81, %p82
    %p84 = scmp.ne.s32.totalorder %s73, %s76
    %p85 = scmp.eq.s32.totalorder %s42, 1
    %p86 = por %p84, %p85
    %p87 = scmp.ne.s32.totalorder %s76, %s77
    %p88 = scmp.eq.s32.totalorder %s42, 0
    %p89 = por %p87, %p88
    %p90 = scmp.ne.s32.totalorder %s76, %s77
    %p91 = scmp.eq.s32.totalorder %s43, 1
    %p92 = por %p90, %p91
    %p94 = scmp.ne.s32.totalorder %s77, %s93
    %p95 = scmp.eq.s32.totalorder %s43, 0
    %p96 = por %p94, %p95
    %s97 = ssub.s32 %s37, %s44
    %p98 = scmp.eq.s32.totalorder %s97, 0
    %s100 = sadd.s32 %s99, 1
    %s101 = scalar_select %p98, %s99, %s100
    %p104 = pneg %p98
    %p105 = scmp.eq.s32.totalorder %s37, 1
    %p106 = por %p104, %p105
    %p107 = scmp.ne.s32.totalorder %s99, %s102
    %p108 = scmp.eq.s32.totalorder %s37, 0
    %p109 = por %p107, %p108
    %p110 = scmp.ne.s32.totalorder %s99, %s102
    %p111 = scmp.eq.s32.totalorder %s42, 1
    %p112 = por %p110, %p111
    %p113 = scmp.ne.s32.totalorder %s102, %s103
    %p114 = scmp.eq.s32.totalorder %s42, 0
    %p115 = por %p113, %p114
    %p116 = scmp.ne.s32.totalorder %s102, %s103
    %p117 = scmp.eq.s32.totalorder %s43, 1
    %p118 = por %p116, %p117
    %p120 = scmp.ne.s32.totalorder %s103, %s119
    %p121 = scmp.eq.s32.totalorder %s43, 0
    %p122 = por %p120, %p121
    %s123 = ssub.s32 %s37, %s44
    %p124 = scmp.eq.s32.totalorder %s123, 0
    %s126 = sadd.s32 %s125, 1
    %s127 = scalar_select %p124, %s125, %s126
    %p130 = pneg %p124
    %p131 = scmp.eq.s32.totalorder %s37, 1
    %p132 = por %p130, %p131
    %p133 = scmp.ne.s32.totalorder %s125, %s128
    %p134 = scmp.eq.s32.totalorder %s37, 0
    %p135 = por %p133, %p134
    %p136 = scmp.ne.s32.totalorder %s125, %s128
    %p137 = scmp.eq.s32.totalorder %s42, 1
    %p138 = por %p136, %p137
    %p139 = scmp.ne.s32.totalorder %s128, %s129
    %p140 = scmp.eq.s32.totalorder %s42, 0
    %p141 = por %p139, %p140
    %p142 = scmp.ne.s32.totalorder %s128, %s129
    %p143 = scmp.eq.s32.totalorder %s43, 1
    %p144 = por %p142, %p143
    %p146 = scmp.ne.s32.totalorder %s129, %s145
    %p147 = scmp.eq.s32.totalorder %s43, 0
    %p148 = por %p146, %p147
    %s150 = sadd.s32 %s149, 1
    %p153 = scmp.eq.s32.totalorder %s37, 1
    %p154 = scmp.ne.s32.totalorder %s149, %s151
    %p155 = scmp.eq.s32.totalorder %s37, 0
    %p156 = por %p154, %p155
    %p157 = scmp.ne.s32.totalorder %s149, %s151
    %p158 = scmp.eq.s32.totalorder %s42, 1
    %p159 = por %p157, %p158
    %p160 = scmp.ne.s32.totalorder %s151, %s152
    %p161 = scmp.eq.s32.totalorder %s42, 0
    %p162 = por %p160, %p161
    %p163 = scmp.ne.s32.totalorder %s151, %s152
    %p164 = scmp.eq.s32.totalorder %s43, 1
    %p165 = por %p163, %p164
    %p167 = scmp.ne.s32.totalorder %s152, %s166
    %p168 = scmp.eq.s32.totalorder %s43, 0
    %p169 = por %p167, %p168
    %s171 = sadd.s32 %s170, 1
    %p174 = scmp.eq.s32.totalorder %s37, 1
    %p175 = scmp.ne.s32.totalorder %s170, %s172
    %p176 = scmp.eq.s32.totalorder %s37, 0
    %p177 = por %p175, %p176
    %p178 = scmp.ne.s32.totalorder %s170, %s172
    %p179 = scmp.eq.s32.totalorder %s42, 1
    %p180 = por %p178, %p179
    %p181 = scmp.ne.s32.totalorder %s172, %s173
    %p182 = scmp.eq.s32.totalorder %s42, 0
    %p183 = por %p181, %p182
    %p184 = scmp.ne.s32.totalorder %s172, %s173
    %p185 = scmp.eq.s32.totalorder %s43, 1
    %p186 = por %p184, %p185
    %p188 = scmp.ne.s32.totalorder %s173, %s187
    %p189 = scmp.eq.s32.totalorder %s43, 0
    %p190 = por %p188, %p189
    %s192 = sadd.s32 %s191, 1
    %p195 = scmp.eq.s32.totalorder %s37, 1
    %p196 = scmp.ne.s32.totalorder %s191, %s193
    %p197 = scmp.eq.s32.totalorder %s37, 0
    %p198 = por %p196, %p197
    %p199 = scmp.ne.s32.totalorder %s191, %s193
    %p200 = scmp.eq.s32.totalorder %s42, 1
    %p201 = por %p199, %p200
    %p202 = scmp.ne.s32.totalorder %s193, %s194
    %p203 = scmp.eq.s32.totalorder %s42, 0
    %p204 = por %p202, %p203
    %p205 = scmp.ne.s32.totalorder %s193, %s194
    %p206 = scmp.eq.s32.totalorder %s43, 1
    %p207 = por %p205, %p206
    %p209 = scmp.ne.s32.totalorder %s194, %s208
    %p210 = scmp.eq.s32.totalorder %s43, 0
    %p211 = por %p209, %p210
    %s213 = sadd.s32 %s212, 1
    %p216 = scmp.eq.s32.totalorder %s37, 1
    %p217 = scmp.ne.s32.totalorder %s212, %s214
    %p218 = scmp.eq.s32.totalorder %s37, 0
    %p219 = por %p217, %p218
    %p220 = scmp.ne.s32.totalorder %s212, %s214
    %p221 = scmp.eq.s32.totalorder %s42, 1
    %p222 = por %p220, %p221
    %p223 = scmp.ne.s32.totalorder %s214, %s215
    %p224 = scmp.eq.s32.totalorder %s42, 0
    %p225 = por %p223, %p224
    %p226 = scmp.ne.s32.totalorder %s214, %s215
    %p227 = scmp.eq.s32.totalorder %s43, 1
    %p228 = por %p226, %p227
    %p230 = scmp.ne.s32.totalorder %s215, %s229
    %p231 = scmp.eq.s32.totalorder %s43, 0
    %p232 = por %p230, %p231
    %s234 = sadd.s32 %s233, 1
    %p237 = scmp.eq.s32.totalorder %s37, 1
    %p238 = scmp.ne.s32.totalorder %s233, %s235
    %p239 = scmp.eq.s32.totalorder %s37, 0
    %p240 = por %p238, %p239
    %p241 = scmp.ne.s32.totalorder %s233, %s235
    %p242 = scmp.eq.s32.totalorder %s42, 1
    %p243 = por %p241, %p242
    %p244 = scmp.ne.s32.totalorder %s235, %s236
    %p245 = scmp.eq.s32.totalorder %s42, 0
    %p246 = por %p244, %p245
    %p247 = scmp.ne.s32.totalorder %s235, %s236
    %p248 = scmp.eq.s32.totalorder %s43, 1
    %p249 = por %p247, %p248
    %p251 = scmp.ne.s32.totalorder %s236, %s250
    %p252 = scmp.eq.s32.totalorder %s43, 0
    %p253 = por %p251, %p252
    %s255 = sadd.s32 %s254, 1
    %p258 = scmp.eq.s32.totalorder %s37, 1
    %p259 = scmp.ne.s32.totalorder %s254, %s256
    %p260 = scmp.eq.s32.totalorder %s37, 0
    %p261 = por %p259, %p260
    %p262 = scmp.ne.s32.totalorder %s254, %s256
    %p263 = scmp.eq.s32.totalorder %s42, 1
    %p264 = por %p262, %p263
    %p265 = scmp.ne.s32.totalorder %s256, %s257
    %p266 = scmp.eq.s32.totalorder %s42, 0
    %p267 = por %p265, %p266
    %p268 = scmp.ne.s32.totalorder %s256, %s257
    %p269 = scmp.eq.s32.totalorder %s43, 1
    %p270 = por %p268, %p269
    %p272 = scmp.ne.s32.totalorder %s257, %s271
    %p273 = scmp.eq.s32.totalorder %s43, 0
    %p274 = por %p272, %p273
    %s276 = sadd.s32 %s275, 1
    %p279 = scmp.eq.s32.totalorder %s37, 1
    %p280 = scmp.ne.s32.totalorder %s275, %s277
    %p281 = scmp.eq.s32.totalorder %s37, 0
    %p282 = por %p280, %p281
    %p283 = scmp.ne.s32.totalorder %s275, %s277
    %p284 = scmp.eq.s32.totalorder %s42, 1
    %p285 = por %p283, %p284
    %p286 = scmp.ne.s32.totalorder %s277, %s278
    %p287 = scmp.eq.s32.totalorder %s42, 0
    %p288 = por %p286, %p287
    %p289 = scmp.ne.s32.totalorder %s277, %s278
    %p290 = scmp.eq.s32.totalorder %s43, 1
    %p291 = por %p289, %p290
    %p293 = scmp.ne.s32.totalorder %s278, %s292
    %p294 = scmp.eq.s32.totalorder %s43, 0
    %p295 = por %p293, %p294
    %s297 = sadd.s32 %s296, 1
    %p300 = scmp.eq.s32.totalorder %s37, 1
    %p301 = scmp.ne.s32.totalorder %s296, %s298
    %p302 = scmp.eq.s32.totalorder %s37, 0
    %p303 = por %p301, %p302
    %p304 = scmp.ne.s32.totalorder %s296, %s298
    %p305 = scmp.eq.s32.totalorder %s42, 1
    %p306 = por %p304, %p305
    %p307 = scmp.ne.s32.totalorder %s298, %s299
    %p308 = scmp.eq.s32.totalorder %s42, 0
    %p309 = por %p307, %p308
    %p310 = scmp.ne.s32.totalorder %s298, %s299
    %p311 = scmp.eq.s32.totalorder %s43, 1
    %p312 = por %p310, %p311
    %p314 = scmp.ne.s32.totalorder %s299, %s313
    %p315 = scmp.eq.s32.totalorder %s43, 0
    %p316 = por %p314, %p315
    %s318 = sadd.s32 %s317, 1
    %p321 = scmp.eq.s32.totalorder %s37, 1
    %p322 = scmp.ne.s32.totalorder %s317, %s319
    %p323 = scmp.eq.s32.totalorder %s37, 0
    %p324 = por %p322, %p323
    %p325 = scmp.ne.s32.totalorder %s317, %s319
    %p326 = scmp.eq.s32.totalorder %s42, 1
    %p327 = por %p325, %p326
    %p328 = scmp.ne.s32.totalorder %s319, %s320
    %p329 = scmp.eq.s32.totalorder %s42, 0
    %p330 = por %p328, %p329
    %p331 = scmp.ne.s32.totalorder %s319, %s320
    %p332 = scmp.eq.s32.totalorder %s43, 1
    %p333 = por %p331, %p332
    %p335 = scmp.ne.s32.totalorder %s320, %s334
    %p336 = scmp.eq.s32.totalorder %s43, 0
    %p337 = por %p335, %p336
    %s339 = sadd.s32 %s338, 1
    %p342 = scmp.eq.s32.totalorder %s37, 1
    %p343 = scmp.ne.s32.totalorder %s338, %s340
    %p344 = scmp.eq.s32.totalorder %s37, 0
    %p345 = por %p343, %p344
    %p346 = scmp.ne.s32.totalorder %s338, %s340
    %p347 = scmp.eq.s32.totalorder %s42, 1
    %p348 = por %p346, %p347
    %p349 = scmp.ne.s32.totalorder %s340, %s341
    %p350 = scmp.eq.s32.totalorder %s42, 0
    %p351 = por %p349, %p350
    %p352 = scmp.ne.s32.totalorder %s340, %s341
    %p353 = scmp.eq.s32.totalorder %s43, 1
    %p354 = por %p352, %p353
    %p356 = scmp.ne.s32.totalorder %s341, %s355
    %p357 = scmp.eq.s32.totalorder %s43, 0
    %p358 = por %p356, %p357
    %s360 = sadd.s32 %s359, 1
    %p363 = scmp.eq.s32.totalorder %s37, 1
    %p364 = scmp.ne.s32.totalorder %s359, %s361
    %p365 = scmp.eq.s32.totalorder %s37, 0
    %p366 = por %p364, %p365
    %p367 = scmp.ne.s32.totalorder %s359, %s361
    %p368 = scmp.eq.s32.totalorder %s42, 1
    %p369 = por %p367, %p368
    %p370 = scmp.ne.s32.totalorder %s361, %s362
    %p371 = scmp.eq.s32.totalorder %s42, 0
    %p372 = por %p370, %p371
    %p373 = scmp.ne.s32.totalorder %s361, %s362
    %p374 = scmp.eq.s32.totalorder %s43, 1
    %p375 = por %p373, %p374
    %p377 = scmp.ne.s32.totalorder %s362, %s376
    %p378 = scmp.eq.s32.totalorder %s43, 0
    %p379 = por %p377, %p378
    %s381 = sadd.s32 %s380, 1
    %p384 = scmp.eq.s32.totalorder %s37, 1
    %p385 = scmp.ne.s32.totalorder %s380, %s382
    %p386 = scmp.eq.s32.totalorder %s37, 0
    %p387 = por %p385, %p386
    %p388 = scmp.ne.s32.totalorder %s380, %s382
    %p389 = scmp.eq.s32.totalorder %s42, 1
    %p390 = por %p388, %p389
    %p391 = scmp.ne.s32.totalorder %s382, %s383
    %p392 = scmp.eq.s32.totalorder %s42, 0
    %p393 = por %p391, %p392
    %p394 = scmp.ne.s32.totalorder %s382, %s383
    %p395 = scmp.eq.s32.totalorder %s43, 1
    %p396 = por %p394, %p395
    %p398 = scmp.ne.s32.totalorder %s383, %s397
    %p399 = scmp.eq.s32.totalorder %s43, 0
    %p400 = por %p398, %p399
    %s402 = sadd.s32 %s401, 1
    %p405 = scmp.eq.s32.totalorder %s37, 1
    %p406 = scmp.ne.s32.totalorder %s401, %s403
    %p407 = scmp.eq.s32.totalorder %s37, 0
    %p408 = por %p406, %p407
    %p409 = scmp.ne.s32.totalorder %s401, %s403
    %p410 = scmp.eq.s32.totalorder %s42, 1
    %p411 = por %p409, %p410
    %p412 = scmp.ne.s32.totalorder %s403, %s404
    %p413 = scmp.eq.s32.totalorder %s42, 0
    %p414 = por %p412, %p413
    %p415 = scmp.ne.s32.totalorder %s403, %s404
    %p416 = scmp.eq.s32.totalorder %s43, 1
    %p417 = por %p415, %p416
    %p419 = scmp.ne.s32.totalorder %s404, %s418
    %p420 = scmp.eq.s32.totalorder %s43, 0
    %p421 = por %p419, %p420
    %s423 = sadd.s32 %s422, 1
    %p426 = scmp.eq.s32.totalorder %s37, 1
    %p427 = scmp.ne.s32.totalorder %s422, %s424
    %p428 = scmp.eq.s32.totalorder %s37, 0
    %p429 = por %p427, %p428
    %p430 = scmp.ne.s32.totalorder %s422, %s424
    %p431 = scmp.eq.s32.totalorder %s42, 1
    %p432 = por %p430, %p431
    %p433 = scmp.ne.s32.totalorder %s424, %s425
    %p434 = scmp.eq.s32.totalorder %s42, 0
    %p435 = por %p433, %p434
    %p436 = scmp.ne.s32.totalorder %s424, %s425
    %p437 = scmp.eq.s32.totalorder %s43, 1
    %p438 = por %p436, %p437
    %p440 = scmp.ne.s32.totalorder %s425, %s439
    %p441 = scmp.eq.s32.totalorder %s43, 0
    %p442 = por %p440, %p441
    %s444 = sadd.s32 %s443, 1
    %p447 = scmp.eq.s32.totalorder %s37, 1
    %p448 = scmp.ne.s32.totalorder %s443, %s445
    %p449 = scmp.eq.s32.totalorder %s37, 0
    %p450 = por %p448, %p449
    %p451 = scmp.ne.s32.totalorder %s443, %s445
    %p452 = scmp.eq.s32.totalorder %s42, 1
    %p453 = por %p451, %p452
    %p454 = scmp.ne.s32.totalorder %s445, %s446
    %p455 = scmp.eq.s32.totalorder %s42, 0
    %p456 = por %p454, %p455
    %p457 = scmp.ne.s32.totalorder %s445, %s446
    %p458 = scmp.eq.s32.totalorder %s43, 1
    %p459 = por %p457, %p458
    %p461 = scmp.ne.s32.totalorder %s446, %s460
    %p462 = scmp.eq.s32.totalorder %s43, 0
    %p463 = por %p461, %p462
    %s465 = sadd.s32 %s464, 1
    %p468 = scmp.eq.s32.totalorder %s37, 1
    %p469 = scmp.ne.s32.totalorder %s464, %s466
    %p470 = scmp.eq.s32.totalorder %s37, 0
    %p471 = por %p469, %p470
    %p472 = scmp.ne.s32.totalorder %s464, %s466
    %p473 = scmp.eq.s32.totalorder %s42, 1
    %p474 = por %p472, %p473
    %p475 = scmp.ne.s32.totalorder %s466, %s467
    %p476 = scmp.eq.s32.totalorder %s42, 0
    %p477 = por %p475, %p476
    %p478 = scmp.ne.s32.totalorder %s466, %s467
    %p479 = scmp.eq.s32.totalorder %s43, 1
    %p480 = por %p478, %p479
    %p482 = scmp.ne.s32.totalorder %s467, %s481
    %p483 = scmp.eq.s32.totalorder %s43, 0
    %p484 = por %p482, %p483
    %s486 = sadd.s32 %s485, 1
    %p489 = scmp.eq.s32.totalorder %s37, 1
    %p490 = scmp.ne.s32.totalorder %s485, %s487
    %p491 = scmp.eq.s32.totalorder %s37, 0
    %p492 = por %p490, %p491
    %p493 = scmp.ne.s32.totalorder %s485, %s487
    %p494 = scmp.eq.s32.totalorder %s42, 1
    %p495 = por %p493, %p494
    %p496 = scmp.ne.s32.totalorder %s487, %s488
    %p497 = scmp.eq.s32.totalorder %s42, 0
    %p498 = por %p496, %p497
    %p499 = scmp.ne.s32.totalorder %s487, %s488
    %p500 = scmp.eq.s32.totalorder %s43, 1
    %p501 = por %p499, %p500
    %p503 = scmp.ne.s32.totalorder %s488, %s502
    %p504 = scmp.eq.s32.totalorder %s43, 0
    %p505 = por %p503, %p504
    %s507 = sadd.s32 %s506, 1
    %p510 = scmp.eq.s32.totalorder %s37, 1
    %p511 = scmp.ne.s32.totalorder %s506, %s508
    %p512 = scmp.eq.s32.totalorder %s37, 0
    %p513 = por %p511, %p512
    %p514 = scmp.ne.s32.totalorder %s506, %s508
    %p515 = scmp.eq.s32.totalorder %s42, 1
    %p516 = por %p514, %p515
    %p517 = scmp.ne.s32.totalorder %s508, %s509
    %p518 = scmp.eq.s32.totalorder %s42, 0
    %p519 = por %p517, %p518
    %p520 = scmp.ne.s32.totalorder %s508, %s509
    %p521 = scmp.eq.s32.totalorder %s43, 1
    %p522 = por %p520, %p521
    %p524 = scmp.ne.s32.totalorder %s509, %s523
    %p525 = scmp.eq.s32.totalorder %s43, 0
    %p526 = por %p524, %p525
    %s528 = sadd.s32 %s527, 1
    %p531 = scmp.eq.s32.totalorder %s37, 1
    %p532 = scmp.ne.s32.totalorder %s527, %s529
    %p533 = scmp.eq.s32.totalorder %s37, 0
    %p534 = por %p532, %p533
    %p535 = scmp.ne.s32.totalorder %s527, %s529
    %p536 = scmp.eq.s32.totalorder %s42, 1
    %p537 = por %p535, %p536
    %p538 = scmp.ne.s32.totalorder %s529, %s530
    %p539 = scmp.eq.s32.totalorder %s42, 0
    %p540 = por %p538, %p539
    %p541 = scmp.ne.s32.totalorder %s529, %s530
    %p542 = scmp.eq.s32.totalorder %s43, 1
    %p543 = por %p541, %p542
    %p545 = scmp.ne.s32.totalorder %s530, %s544
    %p546 = scmp.eq.s32.totalorder %s43, 0
    %p547 = por %p545, %p546
    %s549 = sadd.s32 %s548, 1
    %p552 = scmp.eq.s32.totalorder %s37, 1
    %p553 = scmp.ne.s32.totalorder %s548, %s550
    %p554 = scmp.eq.s32.totalorder %s37, 0
    %p555 = por %p553, %p554
    %p556 = scmp.ne.s32.totalorder %s548, %s550
    %p557 = scmp.eq.s32.totalorder %s42, 1
    %p558 = por %p556, %p557
    %p559 = scmp.ne.s32.totalorder %s550, %s551
    %p560 = scmp.eq.s32.totalorder %s42, 0
    %p561 = por %p559, %p560
    %p562 = scmp.ne.s32.totalorder %s550, %s551
    %p563 = scmp.eq.s32.totalorder %s43, 1
    %p564 = por %p562, %p563
    %p566 = scmp.ne.s32.totalorder %s551, %s565
    %p567 = scmp.eq.s32.totalorder %s43, 0
    %p568 = por %p566, %p567
    %s570 = sadd.s32 %s569, 1
    %p573 = scmp.eq.s32.totalorder %s37, 1
    %p574 = scmp.ne.s32.totalorder %s569, %s571
    %p575 = scmp.eq.s32.totalorder %s37, 0
    %p576 = por %p574, %p575
    %p577 = scmp.ne.s32.totalorder %s569, %s571
    %p578 = scmp.eq.s32.totalorder %s42, 1
    %p579 = por %p577, %p578
    %p580 = scmp.ne.s32.totalorder %s571, %s572
    %p581 = scmp.eq.s32.totalorder %s42, 0
    %p582 = por %p580, %p581
    %p583 = scmp.ne.s32.totalorder %s571, %s572
    %p584 = scmp.eq.s32.totalorder %s43, 1
    %p585 = por %p583, %p584
    %p587 = scmp.ne.s32.totalorder %s572, %s586
    %p588 = scmp.eq.s32.totalorder %s43, 0
    %p589 = por %p587, %p588
    %s591 = sadd.s32 %s590, 1
    %p594 = scmp.eq.s32.totalorder %s37, 1
    %p595 = scmp.ne.s32.totalorder %s590, %s592
    %p596 = scmp.eq.s32.totalorder %s37, 0
    %p597 = por %p595, %p596
    %p598 = scmp.ne.s32.totalorder %s590, %s592
    %p599 = scmp.eq.s32.totalorder %s42, 1
    %p600 = por %p598, %p599
    %p601 = scmp.ne.s32.totalorder %s592, %s593
    %p602 = scmp.eq.s32.totalorder %s42, 0
    %p603 = por %p601, %p602
    %p604 = scmp.ne.s32.totalorder %s592, %s593
    %p605 = scmp.eq.s32.totalorder %s43, 1
    %p606 = por %p604, %p605
    %p608 = scmp.ne.s32.totalorder %s593, %s607
    %p609 = scmp.eq.s32.totalorder %s43, 0
    %p610 = por %p608, %p609
    %s612 = sadd.s32 %s611, 1
    %p615 = scmp.eq.s32.totalorder %s37, 1
    %p616 = scmp.ne.s32.totalorder %s611, %s613
    %p617 = scmp.eq.s32.totalorder %s37, 0
    %p618 = por %p616, %p617
    %p619 = scmp.ne.s32.totalorder %s611, %s613
    %p620 = scmp.eq.s32.totalorder %s42, 1
    %p621 = por %p619, %p620
    %p622 = scmp.ne.s32.totalorder %s613, %s614
    %p623 = scmp.eq.s32.totalorder %s42, 0
    %p624 = por %p622, %p623
    %p625 = scmp.ne.s32.totalorder %s613, %s614
    %p626 = scmp.eq.s32.totalorder %s43, 1
    %p627 = por %p625, %p626
    %p629 = scmp.ne.s32.totalorder %s614, %s628
    %p630 = scmp.eq.s32.totalorder %s43, 0
    %p631 = por %p629, %p630
    %s632 = ssub.s32 %s37, %s44
    %p633 = scmp.eq.s32.totalorder %s632, 0
    %s635 = sadd.s32 %s634, 1
    %s636 = scalar_select %p633, %s634, %s635
    %p639 = pneg %p633
    %p640 = scmp.eq.s32.totalorder %s37, 1
    %p641 = por %p639, %p640
    %p642 = scmp.ne.s32.totalorder %s634, %s637
    %p643 = scmp.eq.s32.totalorder %s37, 0
    %p644 = por %p642, %p643
    %p645 = scmp.ne.s32.totalorder %s634, %s637
    %p646 = scmp.eq.s32.totalorder %s42, 1
    %p647 = por %p645, %p646
    %p648 = scmp.ne.s32.totalorder %s637, %s638
    %p649 = scmp.eq.s32.totalorder %s42, 0
    %p650 = por %p648, %p649
    %p651 = scmp.ne.s32.totalorder %s637, %s638
    %p652 = scmp.eq.s32.totalorder %s43, 1
    %p653 = por %p651, %p652
    %p655 = scmp.ne.s32.totalorder %s638, %s654
    %p656 = scmp.eq.s32.totalorder %s43, 0
    %p657 = por %p655, %p656
    %s658 = ssub.s32 %s37, %s44
    %p659 = scmp.eq.s32.totalorder %s658, 0
    %s661 = sadd.s32 %s660, 1
    %s662 = scalar_select %p659, %s660, %s661
    %p665 = pneg %p659
    %p666 = scmp.eq.s32.totalorder %s37, 1
    %p667 = por %p665, %p666
    %p668 = scmp.ne.s32.totalorder %s660, %s663
    %p669 = scmp.eq.s32.totalorder %s37, 0
    %p670 = por %p668, %p669
    %p671 = scmp.ne.s32.totalorder %s660, %s663
    %p672 = scmp.eq.s32.totalorder %s42, 1
    %p673 = por %p671, %p672
    %p674 = scmp.ne.s32.totalorder %s663, %s664
    %p675 = scmp.eq.s32.totalorder %s42, 0
    %p676 = por %p674, %p675
    %p677 = scmp.ne.s32.totalorder %s663, %s664
    %p678 = scmp.eq.s32.totalorder %s43, 1
    %p679 = por %p677, %p678
    %p681 = scmp.ne.s32.totalorder %s664, %s680
    %p682 = scmp.eq.s32.totalorder %s43, 0
    %p683 = por %p681, %p682
    %p684 = scmp.le.s32.totalorder 1, %s37
    %p685 = scmp.lt.s32.totalorder %s37, 3
    %p686 = pnand %p684, %p685
    %p687 = pneg %p686
    // Predicated region
    $region9: #{tpu_custom_call.1} parent=5 // pred_check
      _
    $region10: #{tpu_custom_call.1} parent=5 // pred_check_branch
      %689 = sbr.rel (%p686) target = $region12
    $region11: #{tpu_custom_call.1} parent=5 // pred_region
      %s690 = ssub.s32 %s37, 1
      // Predicated region
      $region13: #{tpu_custom_call.1} parent=11 // pred_check
        %p691 = pneg %p162
      $region14: #{tpu_custom_call.1} parent=11 // pred_check_branch
        %693 = sbr.rel (%p691) target = $region16
      $region15: #{tpu_custom_call.1} parent=11 // pred_region
        _
      $region16: #{tpu_custom_call.1} parent=11 // pred_fallthru
        _
      // Predicated region
      $region17: #{tpu_custom_call.1} parent=11 // pred_check
        %p694 = pneg %p183
      $region18: #{tpu_custom_call.1} parent=11 // pred_check_branch
        %696 = sbr.rel (%p694) target = $region20
      $region19: #{tpu_custom_call.1} parent=11 // pred_region
        _
      $region20: #{tpu_custom_call.1} parent=11 // pred_fallthru
        _
      // Predicated region
      $region21: #{tpu_custom_call.1} parent=11 // pred_check
        %p697 = pneg %p204
      $region22: #{tpu_custom_call.1} parent=11 // pred_check_branch
        %699 = sbr.rel (%p697) target = $region24
      $region23: #{tpu_custom_call.1} parent=11 // pred_region
        _
      $region24: #{tpu_custom_call.1} parent=11 // pred_fallthru
        _
      // Predicated region
      $region25: #{tpu_custom_call.1} parent=11 // pred_check
        %p700 = pneg %p225
      $region26: #{tpu_custom_call.1} parent=11 // pred_check_branch
        %702 = sbr.rel (%p700) target = $region28
      $region27: #{tpu_custom_call.1} parent=11 // pred_region
        _
      $region28: #{tpu_custom_call.1} parent=11 // pred_fallthru
        _
      // Predicated region
      $region29: #{tpu_custom_call.1} parent=11 // pred_check
        %p703 = pneg %p246
      $region30: #{tpu_custom_call.1} parent=11 // pred_check_branch
        %705 = sbr.rel (%p703) target = $region32
      $region31: #{tpu_custom_call.1} parent=11 // pred_region
        _
      $region32: #{tpu_custom_call.1} parent=11 // pred_fallthru
        _
      // Predicated region
      $region33: #{tpu_custom_call.1} parent=11 // pred_check
        %p706 = pneg %p267
      $region34: #{tpu_custom_call.1} parent=11 // pred_check_branch
        %708 = sbr.rel (%p706) target = $region36
      $region35: #{tpu_custom_call.1} parent=11 // pred_region
        _
      $region36: #{tpu_custom_call.1} parent=11 // pred_fallthru
        _
      // Predicated region
      $region37: #{tpu_custom_call.1} parent=11 // pred_check
        %p709 = pneg %p288
      $region38: #{tpu_custom_call.1} parent=11 // pred_check_branch
        %711 = sbr.rel (%p709) target = $region40
      $region39: #{tpu_custom_call.1} parent=11 // pred_region
        _
      $region40: #{tpu_custom_call.1} parent=11 // pred_fallthru
        _
      // Predicated region
      $region41: #{tpu_custom_call.1} parent=11 // pred_check
        %p712 = pneg %p309
      $region42: #{tpu_custom_call.1} parent=11 // pred_check_branch
        %714 = sbr.rel (%p712) target = $region44
      $region43: #{tpu_custom_call.1} parent=11 // pred_region
        _
      $region44: #{tpu_custom_call.1} parent=11 // pred_fallthru
        _
      // Predicated region
      $region45: #{tpu_custom_call.1} parent=11 // pred_check
        %p715 = pneg %p330
      $region46: #{tpu_custom_call.1} parent=11 // pred_check_branch
        %717 = sbr.rel (%p715) target = $region48
      $region47: #{tpu_custom_call.1} parent=11 // pred_region
        _
      $region48: #{tpu_custom_call.1} parent=11 // pred_fallthru
        _
      // Predicated region
      $region49: #{tpu_custom_call.1} parent=11 // pred_check
        %p718 = pneg %p351
      $region50: #{tpu_custom_call.1} parent=11 // pred_check_branch
        %720 = sbr.rel (%p718) target = $region52
      $region51: #{tpu_custom_call.1} parent=11 // pred_region
        _
      $region52: #{tpu_custom_call.1} parent=11 // pred_fallthru
        _
      // Predicated region
      $region53: #{tpu_custom_call.1} parent=11 // pred_check
        %p721 = pneg %p372
      $region54: #{tpu_custom_call.1} parent=11 // pred_check_branch
        %723 = sbr.rel (%p721) target = $region56
      $region55: #{tpu_custom_call.1} parent=11 // pred_region
        _
      $region56: #{tpu_custom_call.1} parent=11 // pred_fallthru
        _
      // Predicated region
      $region57: #{tpu_custom_call.1} parent=11 // pred_check
        %p724 = pneg %p393
      $region58: #{tpu_custom_call.1} parent=11 // pred_check_branch
        %726 = sbr.rel (%p724) target = $region60
      $region59: #{tpu_custom_call.1} parent=11 // pred_region
        _
      $region60: #{tpu_custom_call.1} parent=11 // pred_fallthru
        _
      // Predicated region
      $region61: #{tpu_custom_call.1} parent=11 // pred_check
        %p727 = pneg %p414
      $region62: #{tpu_custom_call.1} parent=11 // pred_check_branch
        %729 = sbr.rel (%p727) target = $region64
      $region63: #{tpu_custom_call.1} parent=11 // pred_region
        _
      $region64: #{tpu_custom_call.1} parent=11 // pred_fallthru
        _
      // Predicated region
      $region65: #{tpu_custom_call.1} parent=11 // pred_check
        %p730 = pneg %p435
      $region66: #{tpu_custom_call.1} parent=11 // pred_check_branch
        %732 = sbr.rel (%p730) target = $region68
      $region67: #{tpu_custom_call.1} parent=11 // pred_region
        _
      $region68: #{tpu_custom_call.1} parent=11 // pred_fallthru
        _
      // Predicated region
      $region69: #{tpu_custom_call.1} parent=11 // pred_check
        %p733 = pneg %p456
      $region70: #{tpu_custom_call.1} parent=11 // pred_check_branch
        %735 = sbr.rel (%p733) target = $region72
      $region71: #{tpu_custom_call.1} parent=11 // pred_region
        _
      $region72: #{tpu_custom_call.1} parent=11 // pred_fallthru
        _
      // Predicated region
      $region73: #{tpu_custom_call.1} parent=11 // pred_check
        %p736 = pneg %p477
      $region74: #{tpu_custom_call.1} parent=11 // pred_check_branch
        %738 = sbr.rel (%p736) target = $region76
      $region75: #{tpu_custom_call.1} parent=11 // pred_region
        _
      $region76: #{tpu_custom_call.1} parent=11 // pred_fallthru
        _
      // Predicated region
      $region77: #{tpu_custom_call.1} parent=11 // pred_check
        %p739 = pneg %p498
      $region78: #{tpu_custom_call.1} parent=11 // pred_check_branch
        %741 = sbr.rel (%p739) target = $region80
      $region79: #{tpu_custom_call.1} parent=11 // pred_region
        _
      $region80: #{tpu_custom_call.1} parent=11 // pred_fallthru
        _
      // Predicated region
      $region81: #{tpu_custom_call.1} parent=11 // pred_check
        %p742 = pneg %p519
      $region82: #{tpu_custom_call.1} parent=11 // pred_check_branch
        %744 = sbr.rel (%p742) target = $region84
      $region83: #{tpu_custom_call.1} parent=11 // pred_region
        _
      $region84: #{tpu_custom_call.1} parent=11 // pred_fallthru
        _
      // Predicated region
      $region85: #{tpu_custom_call.1} parent=11 // pred_check
        %p745 = pneg %p540
      $region86: #{tpu_custom_call.1} parent=11 // pred_check_branch
        %747 = sbr.rel (%p745) target = $region88
      $region87: #{tpu_custom_call.1} parent=11 // pred_region
        _
      $region88: #{tpu_custom_call.1} parent=11 // pred_fallthru
        _
      // Predicated region
      $region89: #{tpu_custom_call.1} parent=11 // pred_check
        %p748 = pneg %p561
      $region90: #{tpu_custom_call.1} parent=11 // pred_check_branch
        %750 = sbr.rel (%p748) target = $region92
      $region91: #{tpu_custom_call.1} parent=11 // pred_region
        _
      $region92: #{tpu_custom_call.1} parent=11 // pred_fallthru
        _
      // Predicated region
      $region93: #{tpu_custom_call.1} parent=11 // pred_check
        %p751 = pneg %p582
      $region94: #{tpu_custom_call.1} parent=11 // pred_check_branch
        %753 = sbr.rel (%p751) target = $region96
      $region95: #{tpu_custom_call.1} parent=11 // pred_region
        _
      $region96: #{tpu_custom_call.1} parent=11 // pred_fallthru
        _
      // Predicated region
      $region97: #{tpu_custom_call.1} parent=11 // pred_check
        %p754 = pneg %p603
      $region98: #{tpu_custom_call.1} parent=11 // pred_check_branch
        %756 = sbr.rel (%p754) target = $region100
      $region99: #{tpu_custom_call.1} parent=11 // pred_region
        _
      $region100: #{tpu_custom_call.1} parent=11 // pred_fallthru
        _
      // Predicated region
      $region101: #{tpu_custom_call.1} parent=11 // pred_check
        %p757 = pneg %p624
      $region102: #{tpu_custom_call.1} parent=11 // pred_check_branch
        %759 = sbr.rel (%p757) target = $region104
      $region103: #{tpu_custom_call.1} parent=11 // pred_region
        _
      $region104: #{tpu_custom_call.1} parent=11 // pred_fallthru
        _
    $region12: #{tpu_custom_call.1} parent=5 // pred_fallthru
      _
    %p760 = scmp.lt.s32.totalorder %s37, 2
    // Predicated region
    $region105: #{tpu_custom_call.1} parent=5 // pred_check
      %p761 = pneg %p760
    $region106: #{tpu_custom_call.1} parent=5 // pred_check_branch
      %763 = sbr.rel (%p761) target = $region108
    $region107: #{tpu_custom_call.1} parent=5 // pred_region
      // Predicated region
      $region109: #{tpu_custom_call.1} parent=107 // pred_check
        %p764 = pneg %p57
      $region110: #{tpu_custom_call.1} parent=107 // pred_check_branch
        %766 = sbr.rel (%p764) target = $region112
      $region111: #{tpu_custom_call.1} parent=107 // pred_region
        %p767 = scmp.lt.s32.totalorder %s37, 1
        %s768 = scalar_select %p767, %s37, 1
        %s769 = smul.addr %s768, 8
        %s770 = scalar_lea.vmem %s0, %s769
      $region112: #{tpu_custom_call.1} parent=107 // pred_fallthru
        _
      // Predicated region
      $region113: #{tpu_custom_call.1} parent=107 // pred_check
        %p771 = pneg %p83
      $region114: #{tpu_custom_call.1} parent=107 // pred_check_branch
        %773 = sbr.rel (%p771) target = $region116
      $region115: #{tpu_custom_call.1} parent=107 // pred_region
        %p774 = scmp.lt.s32.totalorder %s37, 1
        %s775 = scalar_select %p774, %s37, 1
        %s776 = scalar_lea.vmem %s1, %s775
      $region116: #{tpu_custom_call.1} parent=107 // pred_fallthru
        _
      // Predicated region
      $region117: #{tpu_custom_call.1} parent=107 // pred_check
        %p777 = pneg %p109
      $region118: #{tpu_custom_call.1} parent=107 // pred_check_branch
        %779 = sbr.rel (%p777) target = $region120
      $region119: #{tpu_custom_call.1} parent=107 // pred_region
        %p780 = scmp.lt.s32.totalorder %s37, 1
        %s781 = scalar_select %p780, %s37, 1
        %s782 = scalar_lea.vmem %s2, %s781
      $region120: #{tpu_custom_call.1} parent=107 // pred_fallthru
        _
      // Predicated region
      $region121: #{tpu_custom_call.1} parent=107 // pred_check
        %p783 = pneg %p135
      $region122: #{tpu_custom_call.1} parent=107 // pred_check_branch
        %785 = sbr.rel (%p783) target = $region124
      $region123: #{tpu_custom_call.1} parent=107 // pred_region
        %p786 = scmp.lt.s32.totalorder %s37, 1
        %s787 = scalar_select %p786, %s37, 1
        %s788 = scalar_lea.vmem %s3, %s787
      $region124: #{tpu_custom_call.1} parent=107 // pred_fallthru
        _
    $region108: #{tpu_custom_call.1} parent=5 // pred_fallthru
      _
    %p789 = scmp.le.s32.totalorder 1, %s37
    %p790 = scmp.lt.s32.totalorder %s37, 3
    %p791 = pnand %p789, %p790
    %p792 = pneg %p791
    // Predicated region
    $region125: #{tpu_custom_call.1} parent=5 // pred_check
      _
    $region126: #{tpu_custom_call.1} parent=5 // pred_check_branch
      %794 = sbr.rel (%p791) target = $region128
    $region127: #{tpu_custom_call.1} parent=5 // pred_region
      %s795 = ssub.s32 %s37, 1
      %p796 = scmp.lt.s32.totalorder %s42, 1
      %s797 = scalar_select %p796, %s42, 1
      %s798 = smul.addr %s797, 8
      %s799 = scalar_lea.vmem %s0, %s798
      %p800 = pneg %p63
      %p801 = pneg %p60
      %p802 = scmp.lt.s32.totalorder %s42, 1
      %s803 = scalar_select %p802, %s42, 1
      %s804 = scalar_lea.vmem %s1, %s803
      %p805 = pneg %p89
      %p806 = pneg %p86
      %p807 = scmp.lt.s32.totalorder %s42, 1
      %s808 = scalar_select %p807, %s42, 1
      %s809 = scalar_lea.vmem %s2, %s808
      %p810 = pneg %p115
      %p811 = pneg %p112
      %p812 = scmp.lt.s32.totalorder %s42, 1
      %s813 = scalar_select %p812, %s42, 1
      %s814 = scalar_lea.vmem %s3, %s813
      %p815 = pneg %p141
      %p816 = pneg %p138
      %p817 = pneg %p162
      %p818 = pneg %p159
      %p819 = pneg %p183
      %p820 = pneg %p180
      %p821 = pneg %p204
      %p822 = pneg %p201
      %p823 = pneg %p225
      %p824 = pneg %p222
      %p825 = pneg %p246
      %p826 = pneg %p243
      %p827 = pneg %p267
      %p828 = pneg %p264
      %p829 = pneg %p288
      %p830 = pneg %p285
      %p831 = pneg %p309
      %p832 = pneg %p306
      %p833 = pneg %p330
      %p834 = pneg %p327
      %p835 = pneg %p351
      %p836 = pneg %p348
      %p837 = pneg %p372
      %p838 = pneg %p369
      %p839 = pneg %p393
      %p840 = pneg %p390
      %p841 = pneg %p414
      %p842 = pneg %p411
      %p843 = pneg %p435
      %p844 = pneg %p432
      %p845 = pneg %p456
      %p846 = pneg %p453
      %p847 = pneg %p477
      %p848 = pneg %p474
      %p849 = pneg %p498
      %p850 = pneg %p495
      %p851 = pneg %p519
      %p852 = pneg %p516
      %p853 = pneg %p540
      %p854 = pneg %p537
      %p855 = pneg %p561
      %p856 = pneg %p558
      %p857 = pneg %p582
      %p858 = pneg %p579
      %p859 = pneg %p603
      %p860 = pneg %p600
      %p861 = pneg %p624
      %p862 = pneg %p621
      %p863 = pneg %p650
      %p864 = pneg %p647
      %p865 = scmp.lt.s32.totalorder %s42, 1
      %s866 = scalar_select %p865, %s42, 1
      %s867 = scalar_lea.vmem %s27, %s866
      %p868 = pneg %p676
      %p869 = pneg %p673
      %p870 = scmp.lt.s32.totalorder %s42, 1
      %s871 = scalar_select %p870, %s42, 1
      %s872 = scalar_lea.vmem %s28, %s871
      %p873 = scmp.lt.s32.totalorder %s42, 1
      %s874 = scalar_select %p873, %s42, 1
      %s875 = smul.addr %s874, 8
      %s876 = scalar_lea.vmem %s0, %s875
      %p877 = scmp.lt.s32.totalorder %s42, 1
      %s878 = scalar_select %p877, %s42, 1
      %s879 = scalar_lea.vmem %s1, %s878
      %p880 = scmp.lt.s32.totalorder %s42, 1
      %s881 = scalar_select %p880, %s42, 1
      %s882 = scalar_lea.vmem %s2, %s881
      %p883 = scmp.lt.s32.totalorder %s42, 1
      %s884 = scalar_select %p883, %s42, 1
      %s885 = scalar_lea.vmem %s3, %s884
      %p886 = scmp.lt.s32.totalorder %s42, 1
      %s887 = scalar_select %p886, %s42, 1
      %s888 = scalar_lea.vmem %s27, %s887
      %p889 = scmp.lt.s32.totalorder %s42, 1
      %s890 = scalar_select %p889, %s42, 1
      %s891 = scalar_lea.vmem %s28, %s890
      %v893 = vld [vmem:[%s876] sm:$0xff]
      %v894 = vld [vmem:[%s4] sm:$0x1]
      %v895 = vld [vmem:[%s5] sm:$0x1]
      %vm896 = vcmask 261120
      %v897 = vsel %vm896, %v893, 0.0
      %898 = vadd.xlane.f32.xlu0 %v897
      %v899 = vpop.xlane.xlu0 %898
      %v900 = vrcp.pop 32.0
      %v901 = vmul.f32 %v899, %v900
      %v902 = vsub.f32 %v893, %v901
      %v903 = vmul.f32 %v902, %v902
      %v904 = vsel %vm896, %v903, 0.0
      %905 = vadd.xlane.f32.xlu0 %v904
      %v906 = vpop.xlane.xlu0 %905
      %v907 = vmul.f32 %v906, %v900
      %v908 = vadd.f32 %v907, 1e-12
      %v909 = vrsqrt.pop %v908
      %v910 = vmul.f32 %v902, %v909
      %v912 = vlaneseq
      %v913 = vshrl.u32 %v912, 7
      %v914 = vsub.s32 0, %v913
      %v915 = vrot.slane %v894, %v914
      %v917 = vmul.f32 %v910, %v915
      %v919 = vlaneseq
      %v920 = vshrl.u32 %v919, 7
      %v921 = vsub.s32 0, %v920
      %v922 = vrot.slane %v895, %v921
      %v924 = vadd.f32 %v917, %v922
      %v925 = vld [vmem:[%s879] sm:$0x1]
      %v926 = vsub.f32 %v925, 1.0
      %v927 = vmul.f32 %v926, 1e+09
      %v928 = vpack.c.bf16 %v924, %v924
      %929 = vxpose.xlu0.b32.start [1/16] %v924, 128
      %930 = vxpose.xlu0.b32.cont [2/16] 0.0, 128
      %931 = vxpose.xlu0.b32.cont [3/16] 0.0, 128
      %932 = vxpose.xlu0.b32.cont [4/16] 0.0, 128
      %933 = vxpose.xlu0.b32.cont [5/16] 0.0, 128
      %934 = vxpose.xlu0.b32.cont [6/16] 0.0, 128
      %935 = vxpose.xlu0.b32.cont [7/16] 0.0, 128
      %936 = vxpose.xlu0.b32.cont [8/16] 0.0, 128
      %937 = vxpose.xlu0.b32.cont [9/16] 0.0, 128
      %938 = vxpose.xlu0.b32.cont [10/16] 0.0, 128
      %939 = vxpose.xlu0.b32.cont [11/16] 0.0, 128
      %940 = vxpose.xlu0.b32.cont [12/16] 0.0, 128
      %941 = vxpose.xlu0.b32.cont [13/16] 0.0, 128
      %942 = vxpose.xlu0.b32.cont [14/16] 0.0, 128
      %943 = vxpose.xlu0.b32.cont [15/16] 0.0, 128
      %944 = vxpose.xlu0.b32.end [16/16] 0.0, 128
      %v945 = vpop.trf.xlu0
      %v946 = vpop.trf.xlu0
      %v947 = vpop.trf.xlu0
      %v948 = vpop.trf.xlu0
      %v949 = vpop.trf.xlu0
      %v950 = vpop.trf.xlu0
      %v951 = vpop.trf.xlu0
      %v952 = vpop.trf.xlu0
      %v953 = vpop.trf.xlu0
      %v954 = vpop.trf.xlu0
      %v955 = vpop.trf.xlu0
      %v956 = vpop.trf.xlu0
      %v957 = vpop.trf.xlu0
      %v958 = vpop.trf.xlu0
      %v959 = vpop.trf.xlu0
      %v960 = vpop.trf.xlu0
      %v961 = vpack.c.bf16 %v946, %v945
      %v962 = vpack.c.bf16 %v948, %v947
      %v963 = vld [vmem:[%s6] sm:$0xf]
      %v964 = vld [vmem:[%s6 + $0x4] sm:$0xf]
      %v965 = vld [vmem:[%s6 + $0x8] sm:$0xf]
      %v966 = vld [vmem:[%s6 + $0xc] sm:$0xf]
      %v967 = vld [vmem:[%s7] sm:$0x1]
      %v969 = vlaneseq
      %v970 = vshrl.u32 %v969, 7
      %v971 = vsub.s32 0, %v970
      %v972 = vrot.slane %v967, %v971
      %v978 = vunpack.c.l.b16 %v963
      %v979 = vunpack.c.l.b16 %v964
      %v980 = vunpack.c.l.b16 %v965
      %v981 = vunpack.c.l.b16 %v966
      %v982 = vpack.c.b16 %v979, %v978
      %v983 = vpack.c.b16 %v981, %v980
      %v987 = vsel %vm896, %v928, 0
      %989 = vmatprep.subr.bf16.mxu0 0
      %990 = vmatpush1.bf16.msra.mxu0 %v982
      %991 = vmatprep.subr.bf16.mxu0 0
      %992 = vmatpush1.bf16.msra.mxu0 %v983
      %993 = vmatprep.subr.bf16.mxu0 0
      %994 = vmatpush1.bf16.msra.mxu0 0
      %995 = vmatprep.subr.bf16.mxu0 0
      %996 = vmatpush1.bf16.msra.mxu0 0
      %997 = vmatprep.subr.bf16.mxu0 0
      %998 = vmatpush1.bf16.msra.mxu0 0
      %999 = vmatprep.subr.bf16.mxu0 0
      %1000 = vmatpush1.bf16.msra.mxu0 0
      %1001 = vmatprep.subr.bf16.mxu0 0
      %1002 = vmatpush1.bf16.msra.mxu0 0
      %1003 = vmatprep.subr.bf16.mxu0 0
      %1004 = vmatpush1.bf16.msra.mxu0 0
      %1005 = vmatprep.subr.bf16.mxu0 0
      %1006 = vmatpush1.bf16.msra.mxu0 0
      %1007 = vmatprep.subr.bf16.mxu0 0
      %1008 = vmatpush1.bf16.msra.mxu0 0
      %1009 = vmatprep.subr.bf16.mxu0 0
      %1010 = vmatpush1.bf16.msra.mxu0 0
      %1011 = vmatprep.subr.bf16.mxu0 0
      %1012 = vmatpush1.bf16.msra.mxu0 0
      %1013 = vmatprep.subr.bf16.mxu0 0
      %1014 = vmatpush1.bf16.msra.mxu0 0
      %1015 = vmatprep.subr.bf16.mxu0 0
      %1016 = vmatpush1.bf16.msra.mxu0 0
      %1017 = vmatprep.subr.bf16.mxu0 0
      %1018 = vmatpush1.bf16.msra.mxu0 0
      %1019 = vmatprep.subr.bf16.mxu0 0
      %1020 = vmatpush1.bf16.msra.mxu0 0
      %1021 = vmatprep.mubr.bf16.mxu0 0
      %1022 = vmatmul.mubr.bf16.gmra.mrb[0].mxu0 %v987
      %v1023 = vpop.f32.mrb[0].mxu0
      %v1024 = vadd.f32 %v972, %v1023
      %v1025 = vpop.f32.mrb[0].mxu0
      %v1026 = vpop.f32.mrb[0].mxu0
      %v1027 = vpop.f32.mrb[0].mxu0
      %1028 = vdwg.mxu0
      %v1029 = vld [vmem:[%s8] sm:$0xf]
      %v1030 = vld [vmem:[%s8 + $0x4] sm:$0xf]
      %v1031 = vld [vmem:[%s9] sm:$0xff]
      %v1032 = vld [vmem:[%s9 + $0x8] sm:$0xff]
      %1034 = vset.pattern.permute.xlu0 0
      %1035 = vperm.xlu0 %1034, %v1031
      %v1036 = vpop.permute.xlu0 %1035
      %1039 = vset.pattern.permute.xlu0 0
      %1040 = vperm.xlu0 %1039, %v1032
      %v1041 = vpop.permute.xlu0 %1040
      %v1045 = vunpack.c.l.b16 %v1029
      %v1046 = vunpack.c.l.b16 %v1030
      %v1047 = vpack.c.b16 %v1046, %v1045
      %v1049 = vsel %vm896, %v1047, 0
      %1051 = vmatprep.subr.bf16.mxu0 0
      %1052 = vmatpush1.bf16.msra.mxu0 %v961
      %1053 = vmatprep.subr.bf16.mxu0 0
      %1054 = vmatpush1.bf16.msra.mxu0 %v962
      %1055 = vmatprep.subr.bf16.mxu0 0
      %1056 = vmatpush1.bf16.msra.mxu0 0
      %1057 = vmatprep.subr.bf16.mxu0 0
      %1058 = vmatpush1.bf16.msra.mxu0 0
      %1059 = vmatprep.subr.bf16.mxu0 0
      %1060 = vmatpush1.bf16.msra.mxu0 0
      %1061 = vmatprep.subr.bf16.mxu0 0
      %1062 = vmatpush1.bf16.msra.mxu0 0
      %1063 = vmatprep.subr.bf16.mxu0 0
      %1064 = vmatpush1.bf16.msra.mxu0 0
      %1065 = vmatprep.subr.bf16.mxu0 0
      %1066 = vmatpush1.bf16.msra.mxu0 0
      %1067 = vmatprep.subr.bf16.mxu0 0
      %1068 = vmatpush1.bf16.msra.mxu0 0
      %1069 = vmatprep.subr.bf16.mxu0 0
      %1070 = vmatpush1.bf16.msra.mxu0 0
      %1071 = vmatprep.subr.bf16.mxu0 0
      %1072 = vmatpush1.bf16.msra.mxu0 0
      %1073 = vmatprep.subr.bf16.mxu0 0
      %1074 = vmatpush1.bf16.msra.mxu0 0
      %1075 = vmatprep.subr.bf16.mxu0 0
      %1076 = vmatpush1.bf16.msra.mxu0 0
      %1077 = vmatprep.subr.bf16.mxu0 0
      %1078 = vmatpush1.bf16.msra.mxu0 0
      %1079 = vmatprep.subr.bf16.mxu0 0
      %1080 = vmatpush1.bf16.msra.mxu0 0
      %1081 = vmatprep.subr.bf16.mxu0 0
      %1082 = vmatpush1.bf16.msra.mxu0 0
      %1083 = vmatprep.mubr.bf16.mxu0 0
      %1084 = vmatmul.mubr.bf16.gmra.mrb[0].mxu0 %v1049
      %v1085 = vpop.f32.mrb[0].mxu0
      %v1086 = vadd.f32 %v1036, %v1085
      %v1087 = vpop.f32.mrb[0].mxu0
      %v1088 = vpop.f32.mrb[0].mxu0
      %v1089 = vadd.f32 %v1041, %v1088
      %v1090 = vpop.f32.mrb[0].mxu0
      %1091 = vdwg.mxu0
      %v1092 = vld [vmem:[%s10] sm:$0xf]
      %v1093 = vld [vmem:[%s10 + $0x4] sm:$0xf]
      %v1094 = vld [vmem:[%s10 + $0x8] sm:$0xf]
      %v1095 = vld [vmem:[%s10 + $0xc] sm:$0xf]
      %v1096 = vld [vmem:[%s11] sm:$0x1]
      %v1098 = vlaneseq
      %v1099 = vshrl.u32 %v1098, 7
      %v1100 = vsub.s32 0, %v1099
      %v1101 = vrot.slane %v1096, %v1100
      %v1107 = vunpack.c.l.b16 %v1092
      %v1108 = vunpack.c.l.b16 %v1093
      %v1109 = vunpack.c.l.b16 %v1094
      %v1110 = vunpack.c.l.b16 %v1095
      %v1111 = vpack.c.b16 %v1108, %v1107
      %v1112 = vpack.c.b16 %v1110, %v1109
      %1115 = vmatprep.subr.bf16.mxu0 0
      %1116 = vmatpush1.bf16.msra.mxu0 %v1111
      %1117 = vmatprep.subr.bf16.mxu0 0
      %1118 = vmatpush1.bf16.msra.mxu0 %v1112
      %1119 = vmatprep.subr.bf16.mxu0 0
      %1120 = vmatpush1.bf16.msra.mxu0 0
      %1121 = vmatprep.subr.bf16.mxu0 0
      %1122 = vmatpush1.bf16.msra.mxu0 0
      %1123 = vmatprep.subr.bf16.mxu0 0
      %1124 = vmatpush1.bf16.msra.mxu0 0
      %1125 = vmatprep.subr.bf16.mxu0 0
      %1126 = vmatpush1.bf16.msra.mxu0 0
      %1127 = vmatprep.subr.bf16.mxu0 0
      %1128 = vmatpush1.bf16.msra.mxu0 0
      %1129 = vmatprep.subr.bf16.mxu0 0
      %1130 = vmatpush1.bf16.msra.mxu0 0
      %1131 = vmatprep.subr.bf16.mxu0 0
      %1132 = vmatpush1.bf16.msra.mxu0 0
      %1133 = vmatprep.subr.bf16.mxu0 0
      %1134 = vmatpush1.bf16.msra.mxu0 0
      %1135 = vmatprep.subr.bf16.mxu0 0
      %1136 = vmatpush1.bf16.msra.mxu0 0
      %1137 = vmatprep.subr.bf16.mxu0 0
      %1138 = vmatpush1.bf16.msra.mxu0 0
      %1139 = vmatprep.subr.bf16.mxu0 0
      %1140 = vmatpush1.bf16.msra.mxu0 0
      %1141 = vmatprep.subr.bf16.mxu0 0
      %1142 = vmatpush1.bf16.msra.mxu0 0
      %1143 = vmatprep.subr.bf16.mxu0 0
      %1144 = vmatpush1.bf16.msra.mxu0 0
      %1145 = vmatprep.subr.bf16.mxu0 0
      %1146 = vmatpush1.bf16.msra.mxu0 0
      %1147 = vmatprep.mubr.bf16.mxu0 0
      %1148 = vmatmul.mubr.bf16.gmra.mrb[0].mxu0 %v987
      %v1149 = vpop.f32.mrb[0].mxu0
      %v1150 = vadd.f32 %v1101, %v1149
      %v1151 = vpop.f32.mrb[0].mxu0
      %v1152 = vpop.f32.mrb[0].mxu0
      %v1153 = vpop.f32.mrb[0].mxu0
      %1154 = vdwg.mxu0
      %v1155 = vpack.c.bf16 %v1024, %v1024
      %v1156 = vpack.c.bf16 %v1089, %v1086
      %v1158 = vlaneseq
      %v1159 = vshrl.u32 %v1158, 7
      %v1160 = vsub.s32 0, %v1159
      %v1161 = vrot.slane %v927, %v1160
      %vm1163 = vcmask 130048
      %v1165 = vsel %vm1163, %v1155, 0
      %1167 = vmatprep.subr.bf16.mxu0 0
      %1168 = vmatpush1.bf16.msra.mxu0 %v1156
      %1169 = vmatprep.subr.bf16.mxu0 0
      %1170 = vmatpush1.bf16.msra.mxu0 0
      %1171 = vmatprep.subr.bf16.mxu0 0
      %1172 = vmatpush1.bf16.msra.mxu0 0
      %1173 = vmatprep.subr.bf16.mxu0 0
      %1174 = vmatpush1.bf16.msra.mxu0 0
      %1175 = vmatprep.subr.bf16.mxu0 0
      %1176 = vmatpush1.bf16.msra.mxu0 0
      %1177 = vmatprep.subr.bf16.mxu0 0
      %1178 = vmatpush1.bf16.msra.mxu0 0
      %1179 = vmatprep.subr.bf16.mxu0 0
      %1180 = vmatpush1.bf16.msra.mxu0 0
      %1181 = vmatprep.subr.bf16.mxu0 0
      %1182 = vmatpush1.bf16.msra.mxu0 0
      %1183 = vmatprep.subr.bf16.mxu0 0
      %1184 = vmatpush1.bf16.msra.mxu0 0
      %1185 = vmatprep.subr.bf16.mxu0 0
      %1186 = vmatpush1.bf16.msra.mxu0 0
      %1187 = vmatprep.subr.bf16.mxu0 0
      %1188 = vmatpush1.bf16.msra.mxu0 0
      %1189 = vmatprep.subr.bf16.mxu0 0
      %1190 = vmatpush1.bf16.msra.mxu0 0
      %1191 = vmatprep.subr.bf16.mxu0 0
      %1192 = vmatpush1.bf16.msra.mxu0 0
      %1193 = vmatprep.subr.bf16.mxu0 0
      %1194 = vmatpush1.bf16.msra.mxu0 0
      %1195 = vmatprep.subr.bf16.mxu0 0
      %1196 = vmatpush1.bf16.msra.mxu0 0
      %1197 = vmatprep.subr.bf16.mxu0 0
      %1198 = vmatpush1.bf16.msra.mxu0 0
      %1199 = vmatprep.mubr.bf16.mxu0 0
      %1200 = vmatmul.mubr.bf16.gmra.mrb[0].mxu0 %v1165
      %v1201 = vpop.f32.mrb[0].mxu0
      %v1202 = vadd.f32 %v1161, %v1201
      %v1203 = vpop.f32.mrb[0].mxu0
      %v1204 = vpop.f32.mrb[0].mxu0
      %v1205 = vpop.f32.mrb[0].mxu0
      %1206 = vdwg.mxu0
      %vm1207 = vcmask 64512
      %v1208 = vsel %vm1207, %v1202, -inf
      %1209 = vmax.xlane.f32.xlu0 %v1208
      %v1210 = vpop.xlane.xlu0 %1209
      %v1211 = vsub.f32 %v1202, %v1210
      %v1212 = vmul.f32 %v1211, 1.442695
      %v1213 = vpow.pop %v1212
      %v1214 = vsel %vm1207, %v1213, 0.0
      %1215 = vadd.xlane.f32.xlu0 %v1214
      %v1216 = vpop.xlane.xlu0 %1215
      %v1217 = vrcp.pop %v1216
      %v1218 = vmul.f32 %v1213, %v1217
      %v1219 = vpack.c.bf16 %v1218, %v1218
      %v1220 = vpack.c.bf16 %v1150, %v1150
      %v1222 = vsel %vm1207, %v1219, 0
      %vm1224 = vcmask 1043456
      %v1226 = vsel %vm1224, %v1220, 0
      %1228 = vmatprep.subr.bf16.mxu0 0
      %1229 = vmatpush1.bf16.msra.mxu0 %v1226
      %1230 = vmatprep.subr.bf16.mxu0 0
      %1231 = vmatpush1.bf16.msra.mxu0 0
      %1232 = vmatprep.subr.bf16.mxu0 0
      %1233 = vmatpush1.bf16.msra.mxu0 0
      %1234 = vmatprep.subr.bf16.mxu0 0
      %1235 = vmatpush1.bf16.msra.mxu0 0
      %1236 = vmatprep.subr.bf16.mxu0 0
      %1237 = vmatpush1.bf16.msra.mxu0 0
      %1238 = vmatprep.subr.bf16.mxu0 0
      %1239 = vmatpush1.bf16.msra.mxu0 0
      %1240 = vmatprep.subr.bf16.mxu0 0
      %1241 = vmatpush1.bf16.msra.mxu0 0
      %1242 = vmatprep.subr.bf16.mxu0 0
      %1243 = vmatpush1.bf16.msra.mxu0 0
      %1244 = vmatprep.subr.bf16.mxu0 0
      %1245 = vmatpush1.bf16.msra.mxu0 0
      %1246 = vmatprep.subr.bf16.mxu0 0
      %1247 = vmatpush1.bf16.msra.mxu0 0
      %1248 = vmatprep.subr.bf16.mxu0 0
      %1249 = vmatpush1.bf16.msra.mxu0 0
      %1250 = vmatprep.subr.bf16.mxu0 0
      %1251 = vmatpush1.bf16.msra.mxu0 0
      %1252 = vmatprep.subr.bf16.mxu0 0
      %1253 = vmatpush1.bf16.msra.mxu0 0
      %1254 = vmatprep.subr.bf16.mxu0 0
      %1255 = vmatpush1.bf16.msra.mxu0 0
      %1256 = vmatprep.subr.bf16.mxu0 0
      %1257 = vmatpush1.bf16.msra.mxu0 0
      %1258 = vmatprep.subr.bf16.mxu0 0
      %1259 = vmatpush1.bf16.msra.mxu0 0
      %1260 = vmatprep.mubr.bf16.mxu0 0
      %1261 = vmatmul.mubr.bf16.gmra.mrb[0].mxu0 %v1222
      %v1262 = vpop.f32.mrb[0].mxu0
      %v1263 = vadd.f32 0.0, %v1262
      %v1264 = vpop.f32.mrb[0].mxu0
      %v1265 = vpop.f32.mrb[0].mxu0
      %v1266 = vpop.f32.mrb[0].mxu0
      %1267 = vdwg.mxu0
      %v1268 = vpack.c.bf16 %v1263, %v1263
      %v1269 = vld [vmem:[%s12] sm:$0xf]
      %v1270 = vld [vmem:[%s12 + $0x4] sm:$0xf]
      %s1271 = scalar_lea.vmem %s6, 16
      %v1272 = vld [vmem:[%s1271] sm:$0xf]
      %v1273 = vld [vmem:[%s1271 + $0x4] sm:$0xf]
      %v1274 = vld [vmem:[%s1271 + $0x8] sm:$0xf]
      %v1275 = vld [vmem:[%s1271 + $0xc] sm:$0xf]
      %s1276 = scalar_lea.vmem %s7, 1
      %v1277 = vld [vmem:[%s1276] sm:$0x1]
      %v1279 = vlaneseq
      %v1280 = vshrl.u32 %v1279, 7
      %v1281 = vsub.s32 0, %v1280
      %v1282 = vrot.slane %v1277, %v1281
      %v1288 = vunpack.c.l.b16 %v1272
      %v1289 = vunpack.c.l.b16 %v1273
      %v1290 = vunpack.c.l.b16 %v1274
      %v1291 = vunpack.c.l.b16 %v1275
      %v1292 = vpack.c.b16 %v1289, %v1288
      %v1293 = vpack.c.b16 %v1291, %v1290
      %1296 = vmatprep.subr.bf16.mxu0 0
      %1297 = vmatpush1.bf16.msra.mxu0 %v1292
      %1298 = vmatprep.subr.bf16.mxu0 0
      %1299 = vmatpush1.bf16.msra.mxu0 %v1293
      %1300 = vmatprep.subr.bf16.mxu0 0
      %1301 = vmatpush1.bf16.msra.mxu0 0
      %1302 = vmatprep.subr.bf16.mxu0 0
      %1303 = vmatpush1.bf16.msra.mxu0 0
      %1304 = vmatprep.subr.bf16.mxu0 0
      %1305 = vmatpush1.bf16.msra.mxu0 0
      %1306 = vmatprep.subr.bf16.mxu0 0
      %1307 = vmatpush1.bf16.msra.mxu0 0
      %1308 = vmatprep.subr.bf16.mxu0 0
      %1309 = vmatpush1.bf16.msra.mxu0 0
      %1310 = vmatprep.subr.bf16.mxu0 0
      %1311 = vmatpush1.bf16.msra.mxu0 0
      %1312 = vmatprep.subr.bf16.mxu0 0
      %1313 = vmatpush1.bf16.msra.mxu0 0
      %1314 = vmatprep.subr.bf16.mxu0 0
      %1315 = vmatpush1.bf16.msra.mxu0 0
      %1316 = vmatprep.subr.bf16.mxu0 0
      %1317 = vmatpush1.bf16.msra.mxu0 0
      %1318 = vmatprep.subr.bf16.mxu0 0
      %1319 = vmatpush1.bf16.msra.mxu0 0
      %1320 = vmatprep.subr.bf16.mxu0 0
      %1321 = vmatpush1.bf16.msra.mxu0 0
      %1322 = vmatprep.subr.bf16.mxu0 0
      %1323 = vmatpush1.bf16.msra.mxu0 0
      %1324 = vmatprep.subr.bf16.mxu0 0
      %1325 = vmatpush1.bf16.msra.mxu0 0
      %1326 = vmatprep.subr.bf16.mxu0 0
      %1327 = vmatpush1.bf16.msra.mxu0 0
      %1328 = vmatprep.mubr.bf16.mxu0 0
      %1329 = vmatmul.mubr.bf16.gmra.mrb[0].mxu0 %v987
      %v1330 = vpop.f32.mrb[0].mxu0
      %v1331 = vadd.f32 %v1282, %v1330
      %v1332 = vpop.f32.mrb[0].mxu0
      %v1333 = vpop.f32.mrb[0].mxu0
      %v1334 = vpop.f32.mrb[0].mxu0
      %1335 = vdwg.mxu0
      %s1336 = scalar_lea.vmem %s8, 8
      %v1337 = vld [vmem:[%s1336] sm:$0xf]
      %v1338 = vld [vmem:[%s1336 + $0x4] sm:$0xf]
      %s1339 = scalar_lea.vmem %s9, 16
      %v1340 = vld [vmem:[%s1339] sm:$0xff]
      %v1341 = vld [vmem:[%s1339 + $0x8] sm:$0xff]
      %1343 = vset.pattern.permute.xlu0 0
      %1344 = vperm.xlu0 %1343, %v1340
      %v1345 = vpop.permute.xlu0 %1344
      %1348 = vset.pattern.permute.xlu0 0
      %1349 = vperm.xlu0 %1348, %v1341
      %v1350 = vpop.permute.xlu0 %1349
      %v1354 = vunpack.c.l.b16 %v1337
      %v1355 = vunpack.c.l.b16 %v1338
      %v1356 = vpack.c.b16 %v1355, %v1354
      %v1358 = vsel %vm896, %v1356, 0
      %1360 = vmatprep.subr.bf16.mxu0 0
      %1361 = vmatpush1.bf16.msra.mxu0 %v961
      %1362 = vmatprep.subr.bf16.mxu0 0
      %1363 = vmatpush1.bf16.msra.mxu0 %v962
      %1364 = vmatprep.subr.bf16.mxu0 0
      %1365 = vmatpush1.bf16.msra.mxu0 0
      %1366 = vmatprep.subr.bf16.mxu0 0
      %1367 = vmatpush1.bf16.msra.mxu0 0
      %1368 = vmatprep.subr.bf16.mxu0 0
      %1369 = vmatpush1.bf16.msra.mxu0 0
      %1370 = vmatprep.subr.bf16.mxu0 0
      %1371 = vmatpush1.bf16.msra.mxu0 0
      %1372 = vmatprep.subr.bf16.mxu0 0
      %1373 = vmatpush1.bf16.msra.mxu0 0
      %1374 = vmatprep.subr.bf16.mxu0 0
      %1375 = vmatpush1.bf16.msra.mxu0 0
      %1376 = vmatprep.subr.bf16.mxu0 0
      %1377 = vmatpush1.bf16.msra.mxu0 0
      %1378 = vmatprep.subr.bf16.mxu0 0
      %1379 = vmatpush1.bf16.msra.mxu0 0
      %1380 = vmatprep.subr.bf16.mxu0 0
      %1381 = vmatpush1.bf16.msra.mxu0 0
      %1382 = vmatprep.subr.bf16.mxu0 0
      %1383 = vmatpush1.bf16.msra.mxu0 0
      %1384 = vmatprep.subr.bf16.mxu0 0
      %1385 = vmatpush1.bf16.msra.mxu0 0
      %1386 = vmatprep.subr.bf16.mxu0 0
      %1387 = vmatpush1.bf16.msra.mxu0 0
      %1388 = vmatprep.subr.bf16.mxu0 0
      %1389 = vmatpush1.bf16.msra.mxu0 0
      %1390 = vmatprep.subr.bf16.mxu0 0
      %1391 = vmatpush1.bf16.msra.mxu0 0
      %1392 = vmatprep.mubr.bf16.mxu0 0
      %1393 = vmatmul.mubr.bf16.gmra.mrb[0].mxu0 %v1358
      %v1394 = vpop.f32.mrb[0].mxu0
      %v1395 = vadd.f32 %v1345, %v1394
      %v1396 = vpop.f32.mrb[0].mxu0
      %v1397 = vpop.f32.mrb[0].mxu0
      %v1398 = vadd.f32 %v1350, %v1397
      %v1399 = vpop.f32.mrb[0].mxu0
      %1400 = vdwg.mxu0
      %s1401 = scalar_lea.vmem %s10, 16
      %v1402 = vld [vmem:[%s1401] sm:$0xf]
      %v1403 = vld [vmem:[%s1401 + $0x4] sm:$0xf]
      %v1404 = vld [vmem:[%s1401 + $0x8] sm:$0xf]
      %v1405 = vld [vmem:[%s1401 + $0xc] sm:$0xf]
      %s1406 = scalar_lea.vmem %s11, 1
      %v1407 = vld [vmem:[%s1406] sm:$0x1]
      %v1409 = vlaneseq
      %v1410 = vshrl.u32 %v1409, 7
      %v1411 = vsub.s32 0, %v1410
      %v1412 = vrot.slane %v1407, %v1411
      %v1418 = vunpack.c.l.b16 %v1402
      %v1419 = vunpack.c.l.b16 %v1403
      %v1420 = vunpack.c.l.b16 %v1404
      %v1421 = vunpack.c.l.b16 %v1405
      %v1422 = vpack.c.b16 %v1419, %v1418
      %v1423 = vpack.c.b16 %v1421, %v1420
      %1426 = vmatprep.subr.bf16.mxu0 0
      %1427 = vmatpush1.bf16.msra.mxu0 %v1422
      %1428 = vmatprep.subr.bf16.mxu0 0
      %1429 = vmatpush1.bf16.msra.mxu0 %v1423
      %1430 = vmatprep.subr.bf16.mxu0 0
      %1431 = vmatpush1.bf16.msra.mxu0 0
      %1432 = vmatprep.subr.bf16.mxu0 0
      %1433 = vmatpush1.bf16.msra.mxu0 0
      %1434 = vmatprep.subr.bf16.mxu0 0
      %1435 = vmatpush1.bf16.msra.mxu0 0
      %1436 = vmatprep.subr.bf16.mxu0 0
      %1437 = vmatpush1.bf16.msra.mxu0 0
      %1438 = vmatprep.subr.bf16.mxu0 0
      %1439 = vmatpush1.bf16.msra.mxu0 0
      %1440 = vmatprep.subr.bf16.mxu0 0
      %1441 = vmatpush1.bf16.msra.mxu0 0
      %1442 = vmatprep.subr.bf16.mxu0 0
      %1443 = vmatpush1.bf16.msra.mxu0 0
      %1444 = vmatprep.subr.bf16.mxu0 0
      %1445 = vmatpush1.bf16.msra.mxu0 0
      %1446 = vmatprep.subr.bf16.mxu0 0
      %1447 = vmatpush1.bf16.msra.mxu0 0
      %1448 = vmatprep.subr.bf16.mxu0 0
      %1449 = vmatpush1.bf16.msra.mxu0 0
      %1450 = vmatprep.subr.bf16.mxu0 0
      %1451 = vmatpush1.bf16.msra.mxu0 0
      %1452 = vmatprep.subr.bf16.mxu0 0
      %1453 = vmatpush1.bf16.msra.mxu0 0
      %1454 = vmatprep.subr.bf16.mxu0 0
      %1455 = vmatpush1.bf16.msra.mxu0 0
      %1456 = vmatprep.subr.bf16.mxu0 0
      %1457 = vmatpush1.bf16.msra.mxu0 0
      %1458 = vmatprep.mubr.bf16.mxu0 0
      %1459 = vmatmul.mubr.bf16.gmra.mrb[0].mxu0 %v987
      %v1460 = vpop.f32.mrb[0].mxu0
      %v1461 = vadd.f32 %v1412, %v1460
      %v1462 = vpop.f32.mrb[0].mxu0
      %v1463 = vpop.f32.mrb[0].mxu0
      %v1464 = vpop.f32.mrb[0].mxu0
      %1465 = vdwg.mxu0
      %v1466 = vpack.c.bf16 %v1331, %v1331
      %v1467 = vpack.c.bf16 %v1398, %v1395
      %v1469 = vsel %vm1163, %v1466, 0
      %1471 = vmatprep.subr.bf16.mxu0 0
      %1472 = vmatpush1.bf16.msra.mxu0 %v1467
      %1473 = vmatprep.subr.bf16.mxu0 0
      %1474 = vmatpush1.bf16.msra.mxu0 0
      %1475 = vmatprep.subr.bf16.mxu0 0
      %1476 = vmatpush1.bf16.msra.mxu0 0
      %1477 = vmatprep.subr.bf16.mxu0 0
      %1478 = vmatpush1.bf16.msra.mxu0 0
      %1479 = vmatprep.subr.bf16.mxu0 0
      %1480 = vmatpush1.bf16.msra.mxu0 0
      %1481 = vmatprep.subr.bf16.mxu0 0
      %1482 = vmatpush1.bf16.msra.mxu0 0
      %1483 = vmatprep.subr.bf16.mxu0 0
      %1484 = vmatpush1.bf16.msra.mxu0 0
      %1485 = vmatprep.subr.bf16.mxu0 0
      %1486 = vmatpush1.bf16.msra.mxu0 0
      %1487 = vmatprep.subr.bf16.mxu0 0
      %1488 = vmatpush1.bf16.msra.mxu0 0
      %1489 = vmatprep.subr.bf16.mxu0 0
      %1490 = vmatpush1.bf16.msra.mxu0 0
      %1491 = vmatprep.subr.bf16.mxu0 0
      %1492 = vmatpush1.bf16.msra.mxu0 0
      %1493 = vmatprep.subr.bf16.mxu0 0
      %1494 = vmatpush1.bf16.msra.mxu0 0
      %1495 = vmatprep.subr.bf16.mxu0 0
      %1496 = vmatpush1.bf16.msra.mxu0 0
      %1497 = vmatprep.subr.bf16.mxu0 0
      %1498 = vmatpush1.bf16.msra.mxu0 0
      %1499 = vmatprep.subr.bf16.mxu0 0
      %1500 = vmatpush1.bf16.msra.mxu0 0
      %1501 = vmatprep.subr.bf16.mxu0 0
      %1502 = vmatpush1.bf16.msra.mxu0 0
      %1503 = vmatprep.mubr.bf16.mxu0 0
      %1504 = vmatmul.mubr.bf16.gmra.mrb[0].mxu0 %v1469
      %v1505 = vpop.f32.mrb[0].mxu0
      %v1506 = vadd.f32 %v1161, %v1505
      %v1507 = vpop.f32.mrb[0].mxu0
      %v1508 = vpop.f32.mrb[0].mxu0
      %v1509 = vpop.f32.mrb[0].mxu0
      %1510 = vdwg.mxu0
      %v1511 = vsel %vm1207, %v1506, -inf
      %1512 = vmax.xlane.f32.xlu0 %v1511
      %v1513 = vpop.xlane.xlu0 %1512
      %v1514 = vsub.f32 %v1506, %v1513
      %v1515 = vmul.f32 %v1514, 1.442695
      %v1516 = vpow.pop %v1515
      %v1517 = vsel %vm1207, %v1516, 0.0
      %1518 = vadd.xlane.f32.xlu0 %v1517
      %v1519 = vpop.xlane.xlu0 %1518
      %v1520 = vrcp.pop %v1519
      %v1521 = vmul.f32 %v1516, %v1520
      %v1522 = vpack.c.bf16 %v1521, %v1521
      %v1523 = vpack.c.bf16 %v1461, %v1461
      %v1525 = vsel %vm1207, %v1522, 0
      %v1528 = vsel %vm1224, %v1523, 0
      %1530 = vmatprep.subr.bf16.mxu0 0
      %1531 = vmatpush1.bf16.msra.mxu0 %v1528
      %1532 = vmatprep.subr.bf16.mxu0 0
      %1533 = vmatpush1.bf16.msra.mxu0 0
      %1534 = vmatprep.subr.bf16.mxu0 0
      %1535 = vmatpush1.bf16.msra.mxu0 0
      %1536 = vmatprep.subr.bf16.mxu0 0
      %1537 = vmatpush1.bf16.msra.mxu0 0
      %1538 = vmatprep.subr.bf16.mxu0 0
      %1539 = vmatpush1.bf16.msra.mxu0 0
      %1540 = vmatprep.subr.bf16.mxu0 0
      %1541 = vmatpush1.bf16.msra.mxu0 0
      %1542 = vmatprep.subr.bf16.mxu0 0
      %1543 = vmatpush1.bf16.msra.mxu0 0
      %1544 = vmatprep.subr.bf16.mxu0 0
      %1545 = vmatpush1.bf16.msra.mxu0 0
      %1546 = vmatprep.subr.bf16.mxu0 0
      %1547 = vmatpush1.bf16.msra.mxu0 0
      %1548 = vmatprep.subr.bf16.mxu0 0
      %1549 = vmatpush1.bf16.msra.mxu0 0
      %1550 = vmatprep.subr.bf16.mxu0 0
      %1551 = vmatpush1.bf16.msra.mxu0 0
      %1552 = vmatprep.subr.bf16.mxu0 0
      %1553 = vmatpush1.bf16.msra.mxu0 0
      %1554 = vmatprep.subr.bf16.mxu0 0
      %1555 = vmatpush1.bf16.msra.mxu0 0
      %1556 = vmatprep.subr.bf16.mxu0 0
      %1557 = vmatpush1.bf16.msra.mxu0 0
      %1558 = vmatprep.subr.bf16.mxu0 0
      %1559 = vmatpush1.bf16.msra.mxu0 0
      %1560 = vmatprep.subr.bf16.mxu0 0
      %1561 = vmatpush1.bf16.msra.mxu0 0
      %1562 = vmatprep.mubr.bf16.mxu0 0
      %1563 = vmatmul.mubr.bf16.gmra.mrb[0].mxu0 %v1525
      %v1564 = vpop.f32.mrb[0].mxu0
      %v1565 = vadd.f32 0.0, %v1564
      %v1566 = vpop.f32.mrb[0].mxu0
      %v1567 = vpop.f32.mrb[0].mxu0
      %v1568 = vpop.f32.mrb[0].mxu0
      %1569 = vdwg.mxu0
      %v1570 = vpack.c.bf16 %v1565, %v1565
      %s1571 = scalar_lea.vmem %s12, 8
      %v1572 = vld [vmem:[%s1571] sm:$0xf]
      %v1573 = vld [vmem:[%s1571 + $0x4] sm:$0xf]
      %v1576 = vunpack.c.l.b16 %v1572
      %v1577 = vunpack.c.l.b16 %v1573
      %v1578 = vpack.c.b16 %v1577, %v1576
      %v1581 = vsel %vm1163, %v1570, 0
      %1583 = vmatprep.subr.bf16.mxu0 0
      %1584 = vmatpush1.bf16.msra.mxu0 %v1578
      %1585 = vmatprep.subr.bf16.mxu0 0
      %1586 = vmatpush1.bf16.msra.mxu0 0
      %1587 = vmatprep.subr.bf16.mxu0 0
      %1588 = vmatpush1.bf16.msra.mxu0 0
      %1589 = vmatprep.subr.bf16.mxu0 0
      %1590 = vmatpush1.bf16.msra.mxu0 0
      %1591 = vmatprep.subr.bf16.mxu0 0
      %1592 = vmatpush1.bf16.msra.mxu0 0
      %1593 = vmatprep.subr.bf16.mxu0 0
      %1594 = vmatpush1.bf16.msra.mxu0 0
      %1595 = vmatprep.subr.bf16.mxu0 0
      %1596 = vmatpush1.bf16.msra.mxu0 0
      %1597 = vmatprep.subr.bf16.mxu0 0
      %1598 = vmatpush1.bf16.msra.mxu0 0
      %1599 = vmatprep.subr.bf16.mxu0 0
      %1600 = vmatpush1.bf16.msra.mxu0 0
      %1601 = vmatprep.subr.bf16.mxu0 0
      %1602 = vmatpush1.bf16.msra.mxu0 0
      %1603 = vmatprep.subr.bf16.mxu0 0
      %1604 = vmatpush1.bf16.msra.mxu0 0
      %1605 = vmatprep.subr.bf16.mxu0 0
      %1606 = vmatpush1.bf16.msra.mxu0 0
      %1607 = vmatprep.subr.bf16.mxu0 0
      %1608 = vmatpush1.bf16.msra.mxu0 0
      %1609 = vmatprep.subr.bf16.mxu0 0
      %1610 = vmatpush1.bf16.msra.mxu0 0
      %1611 = vmatprep.subr.bf16.mxu0 0
      %1612 = vmatpush1.bf16.msra.mxu0 0
      %1613 = vmatprep.subr.bf16.mxu0 0
      %1614 = vmatpush1.bf16.msra.mxu0 0
      %1615 = vmatprep.mubr.bf16.mxu0 0
      %1616 = vmatmul.mubr.bf16.gmra.mrb[0].mxu0 %v1581
      %v1617 = vpop.f32.mrb[0].mxu0
      %v1618 = vadd.f32 0.0, %v1617
      %v1619 = vpop.f32.mrb[0].mxu0
      %v1620 = vpop.f32.mrb[0].mxu0
      %v1621 = vpop.f32.mrb[0].mxu0
      %1622 = vdwg.mxu0
      %v1625 = vunpack.c.l.b16 %v1269
      %v1626 = vunpack.c.l.b16 %v1270
      %v1627 = vpack.c.b16 %v1626, %v1625
      %v1630 = vsel %vm1163, %v1268, 0
      %1632 = vmatprep.subr.bf16.mxu0 0
      %1633 = vmatpush1.bf16.msra.mxu0 %v1627
      %1634 = vmatprep.subr.bf16.mxu0 0
      %1635 = vmatpush1.bf16.msra.mxu0 0
      %1636 = vmatprep.subr.bf16.mxu0 0
      %1637 = vmatpush1.bf16.msra.mxu0 0
      %1638 = vmatprep.subr.bf16.mxu0 0
      %1639 = vmatpush1.bf16.msra.mxu0 0
      %1640 = vmatprep.subr.bf16.mxu0 0
      %1641 = vmatpush1.bf16.msra.mxu0 0
      %1642 = vmatprep.subr.bf16.mxu0 0
      %1643 = vmatpush1.bf16.msra.mxu0 0
      %1644 = vmatprep.subr.bf16.mxu0 0
      %1645 = vmatpush1.bf16.msra.mxu0 0
      %1646 = vmatprep.subr.bf16.mxu0 0
      %1647 = vmatpush1.bf16.msra.mxu0 0
      %1648 = vmatprep.subr.bf16.mxu0 0
      %1649 = vmatpush1.bf16.msra.mxu0 0
      %1650 = vmatprep.subr.bf16.mxu0 0
      %1651 = vmatpush1.bf16.msra.mxu0 0
      %1652 = vmatprep.subr.bf16.mxu0 0
      %1653 = vmatpush1.bf16.msra.mxu0 0
      %1654 = vmatprep.subr.bf16.mxu0 0
      %1655 = vmatpush1.bf16.msra.mxu0 0
      %1656 = vmatprep.subr.bf16.mxu0 0
      %1657 = vmatpush1.bf16.msra.mxu0 0
      %1658 = vmatprep.subr.bf16.mxu0 0
      %1659 = vmatpush1.bf16.msra.mxu0 0
      %1660 = vmatprep.subr.bf16.mxu0 0
      %1661 = vmatpush1.bf16.msra.mxu0 0
      %1662 = vmatprep.subr.bf16.mxu0 0
      %1663 = vmatpush1.bf16.msra.mxu0 0
      %1664 = vmatprep.mubr.bf16.mxu0 0
      %1665 = vmatmul.mubr.bf16.gmra.mrb[0].mxu0 %v1630
      %v1666 = vpop.f32.mrb[0].mxu0
      %v1667 = vadd.f32 %v1618, %v1666
      %v1668 = vpop.f32.mrb[0].mxu0
      %v1669 = vpop.f32.mrb[0].mxu0
      %v1670 = vpop.f32.mrb[0].mxu0
      %1671 = vdwg.mxu0
      %v1672 = vadd.f32 %v924, %v1667
      %v1673 = vld [vmem:[%s13] sm:$0x1]
      %v1675 = vlaneseq
      %v1676 = vshrl.u32 %v1675, 7
      %v1677 = vsub.s32 0, %v1676
      %v1678 = vrot.slane %v1673, %v1677
      %v1680 = vadd.f32 %v1672, %v1678
      %v1681 = vld [vmem:[%s14] sm:$0x1]
      %v1682 = vld [vmem:[%s15] sm:$0x1]
      %v1683 = vsel %vm896, %v1680, 0.0
      %1684 = vadd.xlane.f32.xlu0 %v1683
      %v1685 = vpop.xlane.xlu0 %1684
      %v1686 = vmul.f32 %v1685, %v900
      %v1687 = vsub.f32 %v1680, %v1686
      %v1688 = vmul.f32 %v1687, %v1687
      %v1689 = vsel %vm896, %v1688, 0.0
      %1690 = vadd.xlane.f32.xlu0 %v1689
      %v1691 = vpop.xlane.xlu0 %1690
      %v1692 = vmul.f32 %v1691, %v900
      %v1693 = vadd.f32 %v1692, 1e-12
      %v1694 = vrsqrt.pop %v1693
      %v1695 = vmul.f32 %v1687, %v1694
      %v1697 = vlaneseq
      %v1698 = vshrl.u32 %v1697, 7
      %v1699 = vsub.s32 0, %v1698
      %v1700 = vrot.slane %v1681, %v1699
      %v1702 = vmul.f32 %v1695, %v1700
      %v1704 = vlaneseq
      %v1705 = vshrl.u32 %v1704, 7
      %v1706 = vsub.s32 0, %v1705
      %v1707 = vrot.slane %v1682, %v1706
      %v1709 = vadd.f32 %v1702, %v1707
      %v1710 = vpack.c.bf16 %v1709, %v1709
      %v1711 = vld [vmem:[%s16] sm:$0xf]
      %v1712 = vld [vmem:[%s16 + $0x4] sm:$0xf]
      %v1713 = vld [vmem:[%s16 + $0x8] sm:$0xf]
      %v1714 = vld [vmem:[%s16 + $0xc] sm:$0xf]
      %v1715 = vld [vmem:[%s17] sm:$0x1]
      %v1717 = vlaneseq
      %v1718 = vshrl.u32 %v1717, 7
      %v1719 = vsub.s32 0, %v1718
      %v1720 = vrot.slane %v1715, %v1719
      %v1726 = vunpack.c.l.b16 %v1711
      %v1727 = vunpack.c.l.b16 %v1712
      %v1728 = vunpack.c.l.b16 %v1713
      %v1729 = vunpack.c.l.b16 %v1714
      %v1730 = vpack.c.b16 %v1727, %v1726
      %v1731 = vpack.c.b16 %v1729, %v1728
      %v1735 = vsel %vm896, %v1710, 0
      %1737 = vmatprep.subr.bf16.mxu0 0
      %1738 = vmatpush1.bf16.msra.mxu0 %v1730
      %1739 = vmatprep.subr.bf16.mxu0 0
      %1740 = vmatpush1.bf16.msra.mxu0 %v1731
      %1741 = vmatprep.subr.bf16.mxu0 0
      %1742 = vmatpush1.bf16.msra.mxu0 0
      %1743 = vmatprep.subr.bf16.mxu0 0
      %1744 = vmatpush1.bf16.msra.mxu0 0
      %1745 = vmatprep.subr.bf16.mxu0 0
      %1746 = vmatpush1.bf16.msra.mxu0 0
      %1747 = vmatprep.subr.bf16.mxu0 0
      %1748 = vmatpush1.bf16.msra.mxu0 0
      %1749 = vmatprep.subr.bf16.mxu0 0
      %1750 = vmatpush1.bf16.msra.mxu0 0
      %1751 = vmatprep.subr.bf16.mxu0 0
      %1752 = vmatpush1.bf16.msra.mxu0 0
      %1753 = vmatprep.subr.bf16.mxu0 0
      %1754 = vmatpush1.bf16.msra.mxu0 0
      %1755 = vmatprep.subr.bf16.mxu0 0
      %1756 = vmatpush1.bf16.msra.mxu0 0
      %1757 = vmatprep.subr.bf16.mxu0 0
      %1758 = vmatpush1.bf16.msra.mxu0 0
      %1759 = vmatprep.subr.bf16.mxu0 0
      %1760 = vmatpush1.bf16.msra.mxu0 0
      %1761 = vmatprep.subr.bf16.mxu0 0
      %1762 = vmatpush1.bf16.msra.mxu0 0
      %1763 = vmatprep.subr.bf16.mxu0 0
      %1764 = vmatpush1.bf16.msra.mxu0 0
      %1765 = vmatprep.subr.bf16.mxu0 0
      %1766 = vmatpush1.bf16.msra.mxu0 0
      %1767 = vmatprep.subr.bf16.mxu0 0
      %1768 = vmatpush1.bf16.msra.mxu0 0
      %1769 = vmatprep.mubr.bf16.mxu0 0
      %1770 = vmatmul.mubr.bf16.gmra.mrb[0].mxu0 %v1735
      %v1771 = vpop.f32.mrb[0].mxu0
      %v1772 = vadd.f32 %v1720, %v1771
      %v1773 = vpop.f32.mrb[0].mxu0
      %v1774 = vpop.f32.mrb[0].mxu0
      %v1775 = vpop.f32.mrb[0].mxu0
      %1776 = vdwg.mxu0
      %v1777 = vmul.f32 %v1772, %v1772
      %v1778 = vmul.f32 %v1772, %v1777
      %v1779 = vmul.f32 %v1778, 0.044715
      %v1780 = vadd.f32 %v1772, %v1779
      %v1781 = vmul.f32 %v1780, 0.7978846
      %v1782 = vtanh.pop %v1781
      %v1783 = vadd.f32 %v1782, 1.0
      %v1784 = vmul.f32 %v1783, 0.5
      %v1785 = vmul.f32 %v1772, %v1784
      %v1786 = vpack.c.bf16 %v1785, %v1785
      %v1787 = vld [vmem:[%s18] sm:$0xf]
      %v1788 = vld [vmem:[%s18 + $0x4] sm:$0xf]
      %v1789 = vld [vmem:[%s18 + $0x8] sm:$0xf]
      %v1790 = vld [vmem:[%s18 + $0xc] sm:$0xf]
      %v1791 = vld [vmem:[%s18 + $0x10] sm:$0xf]
      %v1792 = vld [vmem:[%s18 + $0x14] sm:$0xf]
      %v1793 = vld [vmem:[%s18 + $0x18] sm:$0xf]
      %v1794 = vld [vmem:[%s18 + $0x1c] sm:$0xf]
      %v1795 = vld [vmem:[%s19] sm:$0x1]
      %v1797 = vlaneseq
      %v1798 = vshrl.u32 %v1797, 7
      %v1799 = vsub.s32 0, %v1798
      %v1800 = vrot.slane %v1795, %v1799
      %v1810 = vunpack.c.l.b16 %v1787
      %v1811 = vunpack.c.l.b16 %v1788
      %v1812 = vunpack.c.l.b16 %v1789
      %v1813 = vunpack.c.l.b16 %v1790
      %v1814 = vunpack.c.l.b16 %v1791
      %v1815 = vunpack.c.l.b16 %v1792
      %v1816 = vunpack.c.l.b16 %v1793
      %v1817 = vunpack.c.l.b16 %v1794
      %v1818 = vpack.c.b16 %v1811, %v1810
      %v1819 = vpack.c.b16 %v1813, %v1812
      %v1820 = vpack.c.b16 %v1815, %v1814
      %v1821 = vpack.c.b16 %v1817, %v1816
      %vm1826 = vcmask 523264
      %v1828 = vsel %vm1826, %v1786, 0
      %1830 = vmatprep.subr.bf16.mxu0 0
      %1831 = vmatpush1.bf16.msra.mxu0 %v1818
      %1832 = vmatprep.subr.bf16.mxu0 0
      %1833 = vmatpush1.bf16.msra.mxu0 %v1819
      %1834 = vmatprep.subr.bf16.mxu0 0
      %1835 = vmatpush1.bf16.msra.mxu0 %v1820
      %1836 = vmatprep.subr.bf16.mxu0 0
      %1837 = vmatpush1.bf16.msra.mxu0 %v1821
      %1838 = vmatprep.subr.bf16.mxu0 0
      %1839 = vmatpush1.bf16.msra.mxu0 0
      %1840 = vmatprep.subr.bf16.mxu0 0
      %1841 = vmatpush1.bf16.msra.mxu0 0
      %1842 = vmatprep.subr.bf16.mxu0 0
      %1843 = vmatpush1.bf16.msra.mxu0 0
      %1844 = vmatprep.subr.bf16.mxu0 0
      %1845 = vmatpush1.bf16.msra.mxu0 0
      %1846 = vmatprep.subr.bf16.mxu0 0
      %1847 = vmatpush1.bf16.msra.mxu0 0
      %1848 = vmatprep.subr.bf16.mxu0 0
      %1849 = vmatpush1.bf16.msra.mxu0 0
      %1850 = vmatprep.subr.bf16.mxu0 0
      %1851 = vmatpush1.bf16.msra.mxu0 0
      %1852 = vmatprep.subr.bf16.mxu0 0
      %1853 = vmatpush1.bf16.msra.mxu0 0
      %1854 = vmatprep.subr.bf16.mxu0 0
      %1855 = vmatpush1.bf16.msra.mxu0 0
      %1856 = vmatprep.subr.bf16.mxu0 0
      %1857 = vmatpush1.bf16.msra.mxu0 0
      %1858 = vmatprep.subr.bf16.mxu0 0
      %1859 = vmatpush1.bf16.msra.mxu0 0
      %1860 = vmatprep.subr.bf16.mxu0 0
      %1861 = vmatpush1.bf16.msra.mxu0 0
      %1862 = vmatprep.mubr.bf16.mxu0 0
      %1863 = vmatmul.mubr.bf16.gmra.mrb[0].mxu0 %v1828
      %v1864 = vpop.f32.mrb[0].mxu0
      %v1865 = vadd.f32 %v1800, %v1864
      %v1866 = vpop.f32.mrb[0].mxu0
      %v1867 = vpop.f32.mrb[0].mxu0
      %v1868 = vpop.f32.mrb[0].mxu0
      %1869 = vdwg.mxu0
      %v1870 = vadd.f32 %v1709, %v1865
      %v1871 = vld [vmem:[%s20] sm:$0x1]
      %v1872 = vld [vmem:[%s21] sm:$0x1]
      %v1873 = vsel %vm896, %v1870, 0.0
      %1874 = vadd.xlane.f32.xlu0 %v1873
      %v1875 = vpop.xlane.xlu0 %1874
      %v1876 = vmul.f32 %v1875, %v900
      %v1877 = vsub.f32 %v1870, %v1876
      %v1878 = vmul.f32 %v1877, %v1877
      %v1879 = vsel %vm896, %v1878, 0.0
      %1880 = vadd.xlane.f32.xlu0 %v1879
      %v1881 = vpop.xlane.xlu0 %1880
      %v1882 = vmul.f32 %v1881, %v900
      %v1883 = vadd.f32 %v1882, 1e-12
      %v1884 = vrsqrt.pop %v1883
      %v1885 = vmul.f32 %v1877, %v1884
      %v1887 = vlaneseq
      %v1888 = vshrl.u32 %v1887, 7
      %v1889 = vsub.s32 0, %v1888
      %v1890 = vrot.slane %v1871, %v1889
      %v1892 = vmul.f32 %v1885, %v1890
      %v1894 = vlaneseq
      %v1895 = vshrl.u32 %v1894, 7
      %v1896 = vsub.s32 0, %v1895
      %v1897 = vrot.slane %v1872, %v1896
      %v1899 = vadd.f32 %v1892, %v1897
      %v1900 = vpack.c.bf16 %v1899, %v1899
      %1901 = vxpose.xlu0.b32.start [1/16] %v1899, 128
      %1902 = vxpose.xlu0.b32.cont [2/16] 0.0, 128
      %1903 = vxpose.xlu0.b32.cont [3/16] 0.0, 128
      %1904 = vxpose.xlu0.b32.cont [4/16] 0.0, 128
      %1905 = vxpose.xlu0.b32.cont [5/16] 0.0, 128
      %1906 = vxpose.xlu0.b32.cont [6/16] 0.0, 128
      %1907 = vxpose.xlu0.b32.cont [7/16] 0.0, 128
      %1908 = vxpose.xlu0.b32.cont [8/16] 0.0, 128
      %1909 = vxpose.xlu0.b32.cont [9/16] 0.0, 128
      %1910 = vxpose.xlu0.b32.cont [10/16] 0.0, 128
      %1911 = vxpose.xlu0.b32.cont [11/16] 0.0, 128
      %1912 = vxpose.xlu0.b32.cont [12/16] 0.0, 128
      %1913 = vxpose.xlu0.b32.cont [13/16] 0.0, 128
      %1914 = vxpose.xlu0.b32.cont [14/16] 0.0, 128
      %1915 = vxpose.xlu0.b32.cont [15/16] 0.0, 128
      %1916 = vxpose.xlu0.b32.end [16/16] 0.0, 128
      %v1917 = vpop.trf.xlu0
      %v1918 = vpop.trf.xlu0
      %v1919 = vpop.trf.xlu0
      %v1920 = vpop.trf.xlu0
      %v1921 = vpop.trf.xlu0
      %v1922 = vpop.trf.xlu0
      %v1923 = vpop.trf.xlu0
      %v1924 = vpop.trf.xlu0
      %v1925 = vpop.trf.xlu0
      %v1926 = vpop.trf.xlu0
      %v1927 = vpop.trf.xlu0
      %v1928 = vpop.trf.xlu0
      %v1929 = vpop.trf.xlu0
      %v1930 = vpop.trf.xlu0
      %v1931 = vpop.trf.xlu0
      %v1932 = vpop.trf.xlu0
      %v1933 = vpack.c.bf16 %v1918, %v1917
      %v1934 = vpack.c.bf16 %v1920, %v1919
      %s1935 = scalar_lea.vmem %s6, 32
      %v1936 = vld [vmem:[%s1935] sm:$0xf]
      %v1937 = vld [vmem:[%s1935 + $0x4] sm:$0xf]
      %v1938 = vld [vmem:[%s1935 + $0x8] sm:$0xf]
      %v1939 = vld [vmem:[%s1935 + $0xc] sm:$0xf]
      %s1940 = scalar_lea.vmem %s7, 2
      %v1941 = vld [vmem:[%s1940] sm:$0x1]
      %v1943 = vlaneseq
      %v1944 = vshrl.u32 %v1943, 7
      %v1945 = vsub.s32 0, %v1944
      %v1946 = vrot.slane %v1941, %v1945
      %v1952 = vunpack.c.l.b16 %v1936
      %v1953 = vunpack.c.l.b16 %v1937
      %v1954 = vunpack.c.l.b16 %v1938
      %v1955 = vunpack.c.l.b16 %v1939
      %v1956 = vpack.c.b16 %v1953, %v1952
      %v1957 = vpack.c.b16 %v1955, %v1954
      %v1961 = vsel %vm896, %v1900, 0
      %1963 = vmatprep.subr.bf16.mxu0 0
      %1964 = vmatpush1.bf16.msra.mxu0 %v1956
      %1965 = vmatprep.subr.bf16.mxu0 0
      %1966 = vmatpush1.bf16.msra.mxu0 %v1957
      %1967 = vmatprep.subr.bf16.mxu0 0
      %1968 = vmatpush1.bf16.msra.mxu0 0
      %1969 = vmatprep.subr.bf16.mxu0 0
      %1970 = vmatpush1.bf16.msra.mxu0 0
      %1971 = vmatprep.subr.bf16.mxu0 0
      %1972 = vmatpush1.bf16.msra.mxu0 0
      %1973 = vmatprep.subr.bf16.mxu0 0
      %1974 = vmatpush1.bf16.msra.mxu0 0
      %1975 = vmatprep.subr.bf16.mxu0 0
      %1976 = vmatpush1.bf16.msra.mxu0 0
      %1977 = vmatprep.subr.bf16.mxu0 0
      %1978 = vmatpush1.bf16.msra.mxu0 0
      %1979 = vmatprep.subr.bf16.mxu0 0
      %1980 = vmatpush1.bf16.msra.mxu0 0
      %1981 = vmatprep.subr.bf16.mxu0 0
      %1982 = vmatpush1.bf16.msra.mxu0 0
      %1983 = vmatprep.subr.bf16.mxu0 0
      %1984 = vmatpush1.bf16.msra.mxu0 0
      %1985 = vmatprep.subr.bf16.mxu0 0
      %1986 = vmatpush1.bf16.msra.mxu0 0
      %1987 = vmatprep.subr.bf16.mxu0 0
      %1988 = vmatpush1.bf16.msra.mxu0 0
      %1989 = vmatprep.subr.bf16.mxu0 0
      %1990 = vmatpush1.bf16.msra.mxu0 0
      %1991 = vmatprep.subr.bf16.mxu0 0
      %1992 = vmatpush1.bf16.msra.mxu0 0
      %1993 = vmatprep.subr.bf16.mxu0 0
      %1994 = vmatpush1.bf16.msra.mxu0 0
      %1995 = vmatprep.mubr.bf16.mxu0 0
      %1996 = vmatmul.mubr.bf16.gmra.mrb[0].mxu0 %v1961
      %v1997 = vpop.f32.mrb[0].mxu0
      %v1998 = vadd.f32 %v1946, %v1997
      %v1999 = vpop.f32.mrb[0].mxu0
      %v2000 = vpop.f32.mrb[0].mxu0
      %v2001 = vpop.f32.mrb[0].mxu0
      %2002 = vdwg.mxu0
      %s2003 = scalar_lea.vmem %s8, 16
      %v2004 = vld [vmem:[%s2003] sm:$0xf]
      %v2005 = vld [vmem:[%s2003 + $0x4] sm:$0xf]
      %s2006 = scalar_lea.vmem %s9, 32
      %v2007 = vld [vmem:[%s2006] sm:$0xff]
      %v2008 = vld [vmem:[%s2006 + $0x8] sm:$0xff]
      %2010 = vset.pattern.permute.xlu0 0
      %2011 = vperm.xlu0 %2010, %v2007
      %v2012 = vpop.permute.xlu0 %2011
      %2015 = vset.pattern.permute.xlu0 0
      %2016 = vperm.xlu0 %2015, %v2008
      %v2017 = vpop.permute.xlu0 %2016
      %v2021 = vunpack.c.l.b16 %v2004
      %v2022 = vunpack.c.l.b16 %v2005
      %v2023 = vpack.c.b16 %v2022, %v2021
      %v2025 = vsel %vm896, %v2023, 0
      %2027 = vmatprep.subr.bf16.mxu0 0
      %2028 = vmatpush1.bf16.msra.mxu0 %v1933
      %2029 = vmatprep.subr.bf16.mxu0 0
      %2030 = vmatpush1.bf16.msra.mxu0 %v1934
      %2031 = vmatprep.subr.bf16.mxu0 0
      %2032 = vmatpush1.bf16.msra.mxu0 0
      %2033 = vmatprep.subr.bf16.mxu0 0
      %2034 = vmatpush1.bf16.msra.mxu0 0
      %2035 = vmatprep.subr.bf16.mxu0 0
      %2036 = vmatpush1.bf16.msra.mxu0 0
      %2037 = vmatprep.subr.bf16.mxu0 0
      %2038 = vmatpush1.bf16.msra.mxu0 0
      %2039 = vmatprep.subr.bf16.mxu0 0
      %2040 = vmatpush1.bf16.msra.mxu0 0
      %2041 = vmatprep.subr.bf16.mxu0 0
      %2042 = vmatpush1.bf16.msra.mxu0 0
      %2043 = vmatprep.subr.bf16.mxu0 0
      %2044 = vmatpush1.bf16.msra.mxu0 0
      %2045 = vmatprep.subr.bf16.mxu0 0
      %2046 = vmatpush1.bf16.msra.mxu0 0
      %2047 = vmatprep.subr.bf16.mxu0 0
      %2048 = vmatpush1.bf16.msra.mxu0 0
      %2049 = vmatprep.subr.bf16.mxu0 0
      %2050 = vmatpush1.bf16.msra.mxu0 0
      %2051 = vmatprep.subr.bf16.mxu0 0
      %2052 = vmatpush1.bf16.msra.mxu0 0
      %2053 = vmatprep.subr.bf16.mxu0 0
      %2054 = vmatpush1.bf16.msra.mxu0 0
      %2055 = vmatprep.subr.bf16.mxu0 0
      %2056 = vmatpush1.bf16.msra.mxu0 0
      %2057 = vmatprep.subr.bf16.mxu0 0
      %2058 = vmatpush1.bf16.msra.mxu0 0
      %2059 = vmatprep.mubr.bf16.mxu0 0
      %2060 = vmatmul.mubr.bf16.gmra.mrb[0].mxu0 %v2025
      %v2061 = vpop.f32.mrb[0].mxu0
      %v2062 = vadd.f32 %v2012, %v2061
      %v2063 = vpop.f32.mrb[0].mxu0
      %v2064 = vpop.f32.mrb[0].mxu0
      %v2065 = vadd.f32 %v2017, %v2064
      %v2066 = vpop.f32.mrb[0].mxu0
      %2067 = vdwg.mxu0
      %s2068 = scalar_lea.vmem %s10, 32
      %v2069 = vld [vmem:[%s2068] sm:$0xf]
      %v2070 = vld [vmem:[%s2068 + $0x4] sm:$0xf]
      %v2071 = vld [vmem:[%s2068 + $0x8] sm:$0xf]
      %v2072 = vld [vmem:[%s2068 + $0xc] sm:$0xf]
      %s2073 = scalar_lea.vmem %s11, 2
      %v2074 = vld [vmem:[%s2073] sm:$0x1]
      %v2076 = vlaneseq
      %v2077 = vshrl.u32 %v2076, 7
      %v2078 = vsub.s32 0, %v2077
      %v2079 = vrot.slane %v2074, %v2078
      %v2085 = vunpack.c.l.b16 %v2069
      %v2086 = vunpack.c.l.b16 %v2070
      %v2087 = vunpack.c.l.b16 %v2071
      %v2088 = vunpack.c.l.b16 %v2072
      %v2089 = vpack.c.b16 %v2086, %v2085
      %v2090 = vpack.c.b16 %v2088, %v2087
      %2093 = vmatprep.subr.bf16.mxu0 0
      %2094 = vmatpush1.bf16.msra.mxu0 %v2089
      %2095 = vmatprep.subr.bf16.mxu0 0
      %2096 = vmatpush1.bf16.msra.mxu0 %v2090
      %2097 = vmatprep.subr.bf16.mxu0 0
      %2098 = vmatpush1.bf16.msra.mxu0 0
      %2099 = vmatprep.subr.bf16.mxu0 0
      %2100 = vmatpush1.bf16.msra.mxu0 0
      %2101 = vmatprep.subr.bf16.mxu0 0
      %2102 = vmatpush1.bf16.msra.mxu0 0
      %2103 = vmatprep.subr.bf16.mxu0 0
      %2104 = vmatpush1.bf16.msra.mxu0 0
      %2105 = vmatprep.subr.bf16.mxu0 0
      %2106 = vmatpush1.bf16.msra.mxu0 0
      %2107 = vmatprep.subr.bf16.mxu0 0
      %2108 = vmatpush1.bf16.msra.mxu0 0
      %2109 = vmatprep.subr.bf16.mxu0 0
      %2110 = vmatpush1.bf16.msra.mxu0 0
      %2111 = vmatprep.subr.bf16.mxu0 0
      %2112 = vmatpush1.bf16.msra.mxu0 0
      %2113 = vmatprep.subr.bf16.mxu0 0
      %2114 = vmatpush1.bf16.msra.mxu0 0
      %2115 = vmatprep.subr.bf16.mxu0 0
      %2116 = vmatpush1.bf16.msra.mxu0 0
      %2117 = vmatprep.subr.bf16.mxu0 0
      %2118 = vmatpush1.bf16.msra.mxu0 0
      %2119 = vmatprep.subr.bf16.mxu0 0
      %2120 = vmatpush1.bf16.msra.mxu0 0
      %2121 = vmatprep.subr.bf16.mxu0 0
      %2122 = vmatpush1.bf16.msra.mxu0 0
      %2123 = vmatprep.subr.bf16.mxu0 0
      %2124 = vmatpush1.bf16.msra.mxu0 0
      %2125 = vmatprep.mubr.bf16.mxu0 0
      %2126 = vmatmul.mubr.bf16.gmra.mrb[0].mxu0 %v1961
      %v2127 = vpop.f32.mrb[0].mxu0
      %v2128 = vadd.f32 %v2079, %v2127
      %v2129 = vpop.f32.mrb[0].mxu0
      %v2130 = vpop.f32.mrb[0].mxu0
      %v2131 = vpop.f32.mrb[0].mxu0
      %2132 = vdwg.mxu0
      %v2133 = vpack.c.bf16 %v1998, %v1998
      %v2134 = vpack.c.bf16 %v2065, %v2062
      %v2136 = vsel %vm1163, %v2133, 0
      %2138 = vmatprep.subr.bf16.mxu0 0
      %2139 = vmatpush1.bf16.msra.mxu0 %v2134
      %2140 = vmatprep.subr.bf16.mxu0 0
      %2141 = vmatpush1.bf16.msra.mxu0 0
      %2142 = vmatprep.subr.bf16.mxu0 0
      %2143 = vmatpush1.bf16.msra.mxu0 0
      %2144 = vmatprep.subr.bf16.mxu0 0
      %2145 = vmatpush1.bf16.msra.mxu0 0
      %2146 = vmatprep.subr.bf16.mxu0 0
      %2147 = vmatpush1.bf16.msra.mxu0 0
      %2148 = vmatprep.subr.bf16.mxu0 0
      %2149 = vmatpush1.bf16.msra.mxu0 0
      %2150 = vmatprep.subr.bf16.mxu0 0
      %2151 = vmatpush1.bf16.msra.mxu0 0
      %2152 = vmatprep.subr.bf16.mxu0 0
      %2153 = vmatpush1.bf16.msra.mxu0 0
      %2154 = vmatprep.subr.bf16.mxu0 0
      %2155 = vmatpush1.bf16.msra.mxu0 0
      %2156 = vmatprep.subr.bf16.mxu0 0
      %2157 = vmatpush1.bf16.msra.mxu0 0
      %2158 = vmatprep.subr.bf16.mxu0 0
      %2159 = vmatpush1.bf16.msra.mxu0 0
      %2160 = vmatprep.subr.bf16.mxu0 0
      %2161 = vmatpush1.bf16.msra.mxu0 0
      %2162 = vmatprep.subr.bf16.mxu0 0
      %2163 = vmatpush1.bf16.msra.mxu0 0
      %2164 = vmatprep.subr.bf16.mxu0 0
      %2165 = vmatpush1.bf16.msra.mxu0 0
      %2166 = vmatprep.subr.bf16.mxu0 0
      %2167 = vmatpush1.bf16.msra.mxu0 0
      %2168 = vmatprep.subr.bf16.mxu0 0
      %2169 = vmatpush1.bf16.msra.mxu0 0
      %2170 = vmatprep.mubr.bf16.mxu0 0
      %2171 = vmatmul.mubr.bf16.gmra.mrb[0].mxu0 %v2136
      %v2172 = vpop.f32.mrb[0].mxu0
      %v2173 = vadd.f32 %v1161, %v2172
      %v2174 = vpop.f32.mrb[0].mxu0
      %v2175 = vpop.f32.mrb[0].mxu0
      %v2176 = vpop.f32.mrb[0].mxu0
      %2177 = vdwg.mxu0
      %v2178 = vsel %vm1207, %v2173, -inf
      %2179 = vmax.xlane.f32.xlu0 %v2178
      %v2180 = vpop.xlane.xlu0 %2179
      %v2181 = vsub.f32 %v2173, %v2180
      %v2182 = vmul.f32 %v2181, 1.442695
      %v2183 = vpow.pop %v2182
      %v2184 = vsel %vm1207, %v2183, 0.0
      %2185 = vadd.xlane.f32.xlu0 %v2184
      %v2186 = vpop.xlane.xlu0 %2185
      %v2187 = vrcp.pop %v2186
      %v2188 = vmul.f32 %v2183, %v2187
      %v2189 = vpack.c.bf16 %v2188, %v2188
      %v2190 = vpack.c.bf16 %v2128, %v2128
      %v2192 = vsel %vm1207, %v2189, 0
      %v2195 = vsel %vm1224, %v2190, 0
      %2197 = vmatprep.subr.bf16.mxu0 0
      %2198 = vmatpush1.bf16.msra.mxu0 %v2195
      %2199 = vmatprep.subr.bf16.mxu0 0
      %2200 = vmatpush1.bf16.msra.mxu0 0
      %2201 = vmatprep.subr.bf16.mxu0 0
      %2202 = vmatpush1.bf16.msra.mxu0 0
      %2203 = vmatprep.subr.bf16.mxu0 0
      %2204 = vmatpush1.bf16.msra.mxu0 0
      %2205 = vmatprep.subr.bf16.mxu0 0
      %2206 = vmatpush1.bf16.msra.mxu0 0
      %2207 = vmatprep.subr.bf16.mxu0 0
      %2208 = vmatpush1.bf16.msra.mxu0 0
      %2209 = vmatprep.subr.bf16.mxu0 0
      %2210 = vmatpush1.bf16.msra.mxu0 0
      %2211 = vmatprep.subr.bf16.mxu0 0
      %2212 = vmatpush1.bf16.msra.mxu0 0
      %2213 = vmatprep.subr.bf16.mxu0 0
      %2214 = vmatpush1.bf16.msra.mxu0 0
      %2215 = vmatprep.subr.bf16.mxu0 0
      %2216 = vmatpush1.bf16.msra.mxu0 0
      %2217 = vmatprep.subr.bf16.mxu0 0
      %2218 = vmatpush1.bf16.msra.mxu0 0
      %2219 = vmatprep.subr.bf16.mxu0 0
      %2220 = vmatpush1.bf16.msra.mxu0 0
      %2221 = vmatprep.subr.bf16.mxu0 0
      %2222 = vmatpush1.bf16.msra.mxu0 0
      %2223 = vmatprep.subr.bf16.mxu0 0
      %2224 = vmatpush1.bf16.msra.mxu0 0
      %2225 = vmatprep.subr.bf16.mxu0 0
      %2226 = vmatpush1.bf16.msra.mxu0 0
      %2227 = vmatprep.subr.bf16.mxu0 0
      %2228 = vmatpush1.bf16.msra.mxu0 0
      %2229 = vmatprep.mubr.bf16.mxu0 0
      %2230 = vmatmul.mubr.bf16.gmra.mrb[0].mxu0 %v2192
      %v2231 = vpop.f32.mrb[0].mxu0
      %v2232 = vadd.f32 0.0, %v2231
      %v2233 = vpop.f32.mrb[0].mxu0
      %v2234 = vpop.f32.mrb[0].mxu0
      %v2235 = vpop.f32.mrb[0].mxu0
      %2236 = vdwg.mxu0
      %v2237 = vpack.c.bf16 %v2232, %v2232
      %s2238 = scalar_lea.vmem %s12, 16
      %v2239 = vld [vmem:[%s2238] sm:$0xf]
      %v2240 = vld [vmem:[%s2238 + $0x4] sm:$0xf]
      %s2241 = scalar_lea.vmem %s6, 48
      %v2242 = vld [vmem:[%s2241] sm:$0xf]
      %v2243 = vld [vmem:[%s2241 + $0x4] sm:$0xf]
      %v2244 = vld [vmem:[%s2241 + $0x8] sm:$0xf]
      %v2245 = vld [vmem:[%s2241 + $0xc] sm:$0xf]
      %s2246 = scalar_lea.vmem %s7, 3
      %v2247 = vld [vmem:[%s2246] sm:$0x1]
      %v2249 = vlaneseq
      %v2250 = vshrl.u32 %v2249, 7
      %v2251 = vsub.s32 0, %v2250
      %v2252 = vrot.slane %v2247, %v2251
      %v2258 = vunpack.c.l.b16 %v2242
      %v2259 = vunpack.c.l.b16 %v2243
      %v2260 = vunpack.c.l.b16 %v2244
      %v2261 = vunpack.c.l.b16 %v2245
      %v2262 = vpack.c.b16 %v2259, %v2258
      %v2263 = vpack.c.b16 %v2261, %v2260
      %2266 = vmatprep.subr.bf16.mxu0 0
      %2267 = vmatpush1.bf16.msra.mxu0 %v2262
      %2268 = vmatprep.subr.bf16.mxu0 0
      %2269 = vmatpush1.bf16.msra.mxu0 %v2263
      %2270 = vmatprep.subr.bf16.mxu0 0
      %2271 = vmatpush1.bf16.msra.mxu0 0
      %2272 = vmatprep.subr.bf16.mxu0 0
      %2273 = vmatpush1.bf16.msra.mxu0 0
      %2274 = vmatprep.subr.bf16.mxu0 0
      %2275 = vmatpush1.bf16.msra.mxu0 0
      %2276 = vmatprep.subr.bf16.mxu0 0
      %2277 = vmatpush1.bf16.msra.mxu0 0
      %2278 = vmatprep.subr.bf16.mxu0 0
      %2279 = vmatpush1.bf16.msra.mxu0 0
      %2280 = vmatprep.subr.bf16.mxu0 0
      %2281 = vmatpush1.bf16.msra.mxu0 0
      %2282 = vmatprep.subr.bf16.mxu0 0
      %2283 = vmatpush1.bf16.msra.mxu0 0
      %2284 = vmatprep.subr.bf16.mxu0 0
      %2285 = vmatpush1.bf16.msra.mxu0 0
      %2286 = vmatprep.subr.bf16.mxu0 0
      %2287 = vmatpush1.bf16.msra.mxu0 0
      %2288 = vmatprep.subr.bf16.mxu0 0
      %2289 = vmatpush1.bf16.msra.mxu0 0
      %2290 = vmatprep.subr.bf16.mxu0 0
      %2291 = vmatpush1.bf16.msra.mxu0 0
      %2292 = vmatprep.subr.bf16.mxu0 0
      %2293 = vmatpush1.bf16.msra.mxu0 0
      %2294 = vmatprep.subr.bf16.mxu0 0
      %2295 = vmatpush1.bf16.msra.mxu0 0
      %2296 = vmatprep.subr.bf16.mxu0 0
      %2297 = vmatpush1.bf16.msra.mxu0 0
      %2298 = vmatprep.mubr.bf16.mxu0 0
      %2299 = vmatmul.mubr.bf16.gmra.mrb[0].mxu0 %v1961
      %v2300 = vpop.f32.mrb[0].mxu0
      %v2301 = vadd.f32 %v2252, %v2300
      %v2302 = vpop.f32.mrb[0].mxu0
      %v2303 = vpop.f32.mrb[0].mxu0
      %v2304 = vpop.f32.mrb[0].mxu0
      %2305 = vdwg.mxu0
      %s2306 = scalar_lea.vmem %s8, 24
      %v2307 = vld [vmem:[%s2306] sm:$0xf]
      %v2308 = vld [vmem:[%s2306 + $0x4] sm:$0xf]
      %s2309 = scalar_lea.vmem %s9, 48
      %v2310 = vld [vmem:[%s2309] sm:$0xff]
      %v2311 = vld [vmem:[%s2309 + $0x8] sm:$0xff]
      %2313 = vset.pattern.permute.xlu0 0
      %2314 = vperm.xlu0 %2313, %v2310
      %v2315 = vpop.permute.xlu0 %2314
      %2318 = vset.pattern.permute.xlu0 0
      %2319 = vperm.xlu0 %2318, %v2311
      %v2320 = vpop.permute.xlu0 %2319
      %v2324 = vunpack.c.l.b16 %v2307
      %v2325 = vunpack.c.l.b16 %v2308
      %v2326 = vpack.c.b16 %v2325, %v2324
      %v2328 = vsel %vm896, %v2326, 0
      %2330 = vmatprep.subr.bf16.mxu0 0
      %2331 = vmatpush1.bf16.msra.mxu0 %v1933
      %2332 = vmatprep.subr.bf16.mxu0 0
      %2333 = vmatpush1.bf16.msra.mxu0 %v1934
      %2334 = vmatprep.subr.bf16.mxu0 0
      %2335 = vmatpush1.bf16.msra.mxu0 0
      %2336 = vmatprep.subr.bf16.mxu0 0
      %2337 = vmatpush1.bf16.msra.mxu0 0
      %2338 = vmatprep.subr.bf16.mxu0 0
      %2339 = vmatpush1.bf16.msra.mxu0 0
      %2340 = vmatprep.subr.bf16.mxu0 0
      %2341 = vmatpush1.bf16.msra.mxu0 0
      %2342 = vmatprep.subr.bf16.mxu0 0
      %2343 = vmatpush1.bf16.msra.mxu0 0
      %2344 = vmatprep.subr.bf16.mxu0 0
      %2345 = vmatpush1.bf16.msra.mxu0 0
      %2346 = vmatprep.subr.bf16.mxu0 0
      %2347 = vmatpush1.bf16.msra.mxu0 0
      %2348 = vmatprep.subr.bf16.mxu0 0
      %2349 = vmatpush1.bf16.msra.mxu0 0
      %2350 = vmatprep.subr.bf16.mxu0 0
      %2351 = vmatpush1.bf16.msra.mxu0 0
      %2352 = vmatprep.subr.bf16.mxu0 0
      %2353 = vmatpush1.bf16.msra.mxu0 0
      %2354 = vmatprep.subr.bf16.mxu0 0
      %2355 = vmatpush1.bf16.msra.mxu0 0
      %2356 = vmatprep.subr.bf16.mxu0 0
      %2357 = vmatpush1.bf16.msra.mxu0 0
      %2358 = vmatprep.subr.bf16.mxu0 0
      %2359 = vmatpush1.bf16.msra.mxu0 0
      %2360 = vmatprep.subr.bf16.mxu0 0
      %2361 = vmatpush1.bf16.msra.mxu0 0
      %2362 = vmatprep.mubr.bf16.mxu0 0
      %2363 = vmatmul.mubr.bf16.gmra.mrb[0].mxu0 %v2328
      %v2364 = vpop.f32.mrb[0].mxu0
      %v2365 = vadd.f32 %v2315, %v2364
      %v2366 = vpop.f32.mrb[0].mxu0
      %v2367 = vpop.f32.mrb[0].mxu0
      %v2368 = vadd.f32 %v2320, %v2367
      %v2369 = vpop.f32.mrb[0].mxu0
      %2370 = vdwg.mxu0
      %s2371 = scalar_lea.vmem %s10, 48
      %v2372 = vld [vmem:[%s2371] sm:$0xf]
      %v2373 = vld [vmem:[%s2371 + $0x4] sm:$0xf]
      %v2374 = vld [vmem:[%s2371 + $0x8] sm:$0xf]
      %v2375 = vld [vmem:[%s2371 + $0xc] sm:$0xf]
      %s2376 = scalar_lea.vmem %s11, 3
      %v2377 = vld [vmem:[%s2376] sm:$0x1]
      %v2379 = vlaneseq
      %v2380 = vshrl.u32 %v2379, 7
      %v2381 = vsub.s32 0, %v2380
      %v2382 = vrot.slane %v2377, %v2381
      %v2388 = vunpack.c.l.b16 %v2372
      %v2389 = vunpack.c.l.b16 %v2373
      %v2390 = vunpack.c.l.b16 %v2374
      %v2391 = vunpack.c.l.b16 %v2375
      %v2392 = vpack.c.b16 %v2389, %v2388
      %v2393 = vpack.c.b16 %v2391, %v2390
      %2396 = vmatprep.subr.bf16.mxu0 0
      %2397 = vmatpush1.bf16.msra.mxu0 %v2392
      %2398 = vmatprep.subr.bf16.mxu0 0
      %2399 = vmatpush1.bf16.msra.mxu0 %v2393
      %2400 = vmatprep.subr.bf16.mxu0 0
      %2401 = vmatpush1.bf16.msra.mxu0 0
      %2402 = vmatprep.subr.bf16.mxu0 0
      %2403 = vmatpush1.bf16.msra.mxu0 0
      %2404 = vmatprep.subr.bf16.mxu0 0
      %2405 = vmatpush1.bf16.msra.mxu0 0
      %2406 = vmatprep.subr.bf16.mxu0 0
      %2407 = vmatpush1.bf16.msra.mxu0 0
      %2408 = vmatprep.subr.bf16.mxu0 0
      %2409 = vmatpush1.bf16.msra.mxu0 0
      %2410 = vmatprep.subr.bf16.mxu0 0
      %2411 = vmatpush1.bf16.msra.mxu0 0
      %2412 = vmatprep.subr.bf16.mxu0 0
      %2413 = vmatpush1.bf16.msra.mxu0 0
      %2414 = vmatprep.subr.bf16.mxu0 0
      %2415 = vmatpush1.bf16.msra.mxu0 0
      %2416 = vmatprep.subr.bf16.mxu0 0
      %2417 = vmatpush1.bf16.msra.mxu0 0
      %2418 = vmatprep.subr.bf16.mxu0 0
      %2419 = vmatpush1.bf16.msra.mxu0 0
      %2420 = vmatprep.subr.bf16.mxu0 0
      %2421 = vmatpush1.bf16.msra.mxu0 0
      %2422 = vmatprep.subr.bf16.mxu0 0
      %2423 = vmatpush1.bf16.msra.mxu0 0
      %2424 = vmatprep.subr.bf16.mxu0 0
      %2425 = vmatpush1.bf16.msra.mxu0 0
      %2426 = vmatprep.subr.bf16.mxu0 0
      %2427 = vmatpush1.bf16.msra.mxu0 0
      %2428 = vmatprep.mubr.bf16.mxu0 0
      %2429 = vmatmul.mubr.bf16.gmra.mrb[0].mxu0 %v1961
      %v2430 = vpop.f32.mrb[0].mxu0
      %v2431 = vadd.f32 %v2382, %v2430
      %v2432 = vpop.f32.mrb[0].mxu0
      %v2433 = vpop.f32.mrb[0].mxu0
      %v2434 = vpop.f32.mrb[0].mxu0
      %2435 = vdwg.mxu0
      %v2436 = vpack.c.bf16 %v2301, %v2301
      %v2437 = vpack.c.bf16 %v2368, %v2365
      %v2439 = vsel %vm1163, %v2436, 0
      %2441 = vmatprep.subr.bf16.mxu0 0
      %2442 = vmatpush1.bf16.msra.mxu0 %v2437
      %2443 = vmatprep.subr.bf16.mxu0 0
      %2444 = vmatpush1.bf16.msra.mxu0 0
      %2445 = vmatprep.subr.bf16.mxu0 0
      %2446 = vmatpush1.bf16.msra.mxu0 0
      %2447 = vmatprep.subr.bf16.mxu0 0
      %2448 = vmatpush1.bf16.msra.mxu0 0
      %2449 = vmatprep.subr.bf16.mxu0 0
      %2450 = vmatpush1.bf16.msra.mxu0 0
      %2451 = vmatprep.subr.bf16.mxu0 0
      %2452 = vmatpush1.bf16.msra.mxu0 0
      %2453 = vmatprep.subr.bf16.mxu0 0
      %2454 = vmatpush1.bf16.msra.mxu0 0
      %2455 = vmatprep.subr.bf16.mxu0 0
      %2456 = vmatpush1.bf16.msra.mxu0 0
      %2457 = vmatprep.subr.bf16.mxu0 0
      %2458 = vmatpush1.bf16.msra.mxu0 0
      %2459 = vmatprep.subr.bf16.mxu0 0
      %2460 = vmatpush1.bf16.msra.mxu0 0
      %2461 = vmatprep.subr.bf16.mxu0 0
      %2462 = vmatpush1.bf16.msra.mxu0 0
      %2463 = vmatprep.subr.bf16.mxu0 0
      %2464 = vmatpush1.bf16.msra.mxu0 0
      %2465 = vmatprep.subr.bf16.mxu0 0
      %2466 = vmatpush1.bf16.msra.mxu0 0
      %2467 = vmatprep.subr.bf16.mxu0 0
      %2468 = vmatpush1.bf16.msra.mxu0 0
      %2469 = vmatprep.subr.bf16.mxu0 0
      %2470 = vmatpush1.bf16.msra.mxu0 0
      %2471 = vmatprep.subr.bf16.mxu0 0
      %2472 = vmatpush1.bf16.msra.mxu0 0
      %2473 = vmatprep.mubr.bf16.mxu0 0
      %2474 = vmatmul.mubr.bf16.gmra.mrb[0].mxu0 %v2439
      %v2475 = vpop.f32.mrb[0].mxu0
      %v2476 = vadd.f32 %v1161, %v2475
      %v2477 = vpop.f32.mrb[0].mxu0
      %v2478 = vpop.f32.mrb[0].mxu0
      %v2479 = vpop.f32.mrb[0].mxu0
      %2480 = vdwg.mxu0
      %v2481 = vsel %vm1207, %v2476, -inf
      %2482 = vmax.xlane.f32.xlu0 %v2481
      %v2483 = vpop.xlane.xlu0 %2482
      %v2484 = vsub.f32 %v2476, %v2483
      %v2485 = vmul.f32 %v2484, 1.442695
      %v2486 = vpow.pop %v2485
      %v2487 = vsel %vm1207, %v2486, 0.0
      %2488 = vadd.xlane.f32.xlu0 %v2487
      %v2489 = vpop.xlane.xlu0 %2488
      %v2490 = vrcp.pop %v2489
      %v2491 = vmul.f32 %v2486, %v2490
      %v2492 = vpack.c.bf16 %v2491, %v2491
      %v2493 = vpack.c.bf16 %v2431, %v2431
      %v2495 = vsel %vm1207, %v2492, 0
      %v2498 = vsel %vm1224, %v2493, 0
      %2500 = vmatprep.subr.bf16.mxu0 0
      %2501 = vmatpush1.bf16.msra.mxu0 %v2498
      %2502 = vmatprep.subr.bf16.mxu0 0
      %2503 = vmatpush1.bf16.msra.mxu0 0
      %2504 = vmatprep.subr.bf16.mxu0 0
      %2505 = vmatpush1.bf16.msra.mxu0 0
      %2506 = vmatprep.subr.bf16.mxu0 0
      %2507 = vmatpush1.bf16.msra.mxu0 0
      %2508 = vmatprep.subr.bf16.mxu0 0
      %2509 = vmatpush1.bf16.msra.mxu0 0
      %2510 = vmatprep.subr.bf16.mxu0 0
      %2511 = vmatpush1.bf16.msra.mxu0 0
      %2512 = vmatprep.subr.bf16.mxu0 0
      %2513 = vmatpush1.bf16.msra.mxu0 0
      %2514 = vmatprep.subr.bf16.mxu0 0
      %2515 = vmatpush1.bf16.msra.mxu0 0
      %2516 = vmatprep.subr.bf16.mxu0 0
      %2517 = vmatpush1.bf16.msra.mxu0 0
      %2518 = vmatprep.subr.bf16.mxu0 0
      %2519 = vmatpush1.bf16.msra.mxu0 0
      %2520 = vmatprep.subr.bf16.mxu0 0
      %2521 = vmatpush1.bf16.msra.mxu0 0
      %2522 = vmatprep.subr.bf16.mxu0 0
      %2523 = vmatpush1.bf16.msra.mxu0 0
      %2524 = vmatprep.subr.bf16.mxu0 0
      %2525 = vmatpush1.bf16.msra.mxu0 0
      %2526 = vmatprep.subr.bf16.mxu0 0
      %2527 = vmatpush1.bf16.msra.mxu0 0
      %2528 = vmatprep.subr.bf16.mxu0 0
      %2529 = vmatpush1.bf16.msra.mxu0 0
      %2530 = vmatprep.subr.bf16.mxu0 0
      %2531 = vmatpush1.bf16.msra.mxu0 0
      %2532 = vmatprep.mubr.bf16.mxu0 0
      %2533 = vmatmul.mubr.bf16.gmra.mrb[0].mxu0 %v2495
      %v2534 = vpop.f32.mrb[0].mxu0
      %v2535 = vadd.f32 0.0, %v2534
      %v2536 = vpop.f32.mrb[0].mxu0
      %v2537 = vpop.f32.mrb[0].mxu0
      %v2538 = vpop.f32.mrb[0].mxu0
      %2539 = vdwg.mxu0
      %v2540 = vpack.c.bf16 %v2535, %v2535
      %s2541 = scalar_lea.vmem %s12, 24
      %v2542 = vld [vmem:[%s2541] sm:$0xf]
      %v2543 = vld [vmem:[%s2541 + $0x4] sm:$0xf]
      %v2546 = vunpack.c.l.b16 %v2542
      %v2547 = vunpack.c.l.b16 %v2543
      %v2548 = vpack.c.b16 %v2547, %v2546
      %v2551 = vsel %vm1163, %v2540, 0
      %2553 = vmatprep.subr.bf16.mxu0 0
      %2554 = vmatpush1.bf16.msra.mxu0 %v2548
      %2555 = vmatprep.subr.bf16.mxu0 0
      %2556 = vmatpush1.bf16.msra.mxu0 0
      %2557 = vmatprep.subr.bf16.mxu0 0
      %2558 = vmatpush1.bf16.msra.mxu0 0
      %2559 = vmatprep.subr.bf16.mxu0 0
      %2560 = vmatpush1.bf16.msra.mxu0 0
      %2561 = vmatprep.subr.bf16.mxu0 0
      %2562 = vmatpush1.bf16.msra.mxu0 0
      %2563 = vmatprep.subr.bf16.mxu0 0
      %2564 = vmatpush1.bf16.msra.mxu0 0
      %2565 = vmatprep.subr.bf16.mxu0 0
      %2566 = vmatpush1.bf16.msra.mxu0 0
      %2567 = vmatprep.subr.bf16.mxu0 0
      %2568 = vmatpush1.bf16.msra.mxu0 0
      %2569 = vmatprep.subr.bf16.mxu0 0
      %2570 = vmatpush1.bf16.msra.mxu0 0
      %2571 = vmatprep.subr.bf16.mxu0 0
      %2572 = vmatpush1.bf16.msra.mxu0 0
      %2573 = vmatprep.subr.bf16.mxu0 0
      %2574 = vmatpush1.bf16.msra.mxu0 0
      %2575 = vmatprep.subr.bf16.mxu0 0
      %2576 = vmatpush1.bf16.msra.mxu0 0
      %2577 = vmatprep.subr.bf16.mxu0 0
      %2578 = vmatpush1.bf16.msra.mxu0 0
      %2579 = vmatprep.subr.bf16.mxu0 0
      %2580 = vmatpush1.bf16.msra.mxu0 0
      %2581 = vmatprep.subr.bf16.mxu0 0
      %2582 = vmatpush1.bf16.msra.mxu0 0
      %2583 = vmatprep.subr.bf16.mxu0 0
      %2584 = vmatpush1.bf16.msra.mxu0 0
      %2585 = vmatprep.mubr.bf16.mxu0 0
      %2586 = vmatmul.mubr.bf16.gmra.mrb[0].mxu0 %v2551
      %v2587 = vpop.f32.mrb[0].mxu0
      %v2588 = vadd.f32 0.0, %v2587
      %v2589 = vpop.f32.mrb[0].mxu0
      %v2590 = vpop.f32.mrb[0].mxu0
      %v2591 = vpop.f32.mrb[0].mxu0
      %2592 = vdwg.mxu0
      %v2595 = vunpack.c.l.b16 %v2239
      %v2596 = vunpack.c.l.b16 %v2240
      %v2597 = vpack.c.b16 %v2596, %v2595
      %v2600 = vsel %vm1163, %v2237, 0
      %2602 = vmatprep.subr.bf16.mxu0 0
      %2603 = vmatpush1.bf16.msra.mxu0 %v2597
      %2604 = vmatprep.subr.bf16.mxu0 0
      %2605 = vmatpush1.bf16.msra.mxu0 0
      %2606 = vmatprep.subr.bf16.mxu0 0
      %2607 = vmatpush1.bf16.msra.mxu0 0
      %2608 = vmatprep.subr.bf16.mxu0 0
      %2609 = vmatpush1.bf16.msra.mxu0 0
      %2610 = vmatprep.subr.bf16.mxu0 0
      %2611 = vmatpush1.bf16.msra.mxu0 0
      %2612 = vmatprep.subr.bf16.mxu0 0
      %2613 = vmatpush1.bf16.msra.mxu0 0
      %2614 = vmatprep.subr.bf16.mxu0 0
      %2615 = vmatpush1.bf16.msra.mxu0 0
      %2616 = vmatprep.subr.bf16.mxu0 0
      %2617 = vmatpush1.bf16.msra.mxu0 0
      %2618 = vmatprep.subr.bf16.mxu0 0
      %2619 = vmatpush1.bf16.msra.mxu0 0
      %2620 = vmatprep.subr.bf16.mxu0 0
      %2621 = vmatpush1.bf16.msra.mxu0 0
      %2622 = vmatprep.subr.bf16.mxu0 0
      %2623 = vmatpush1.bf16.msra.mxu0 0
      %2624 = vmatprep.subr.bf16.mxu0 0
      %2625 = vmatpush1.bf16.msra.mxu0 0
      %2626 = vmatprep.subr.bf16.mxu0 0
      %2627 = vmatpush1.bf16.msra.mxu0 0
      %2628 = vmatprep.subr.bf16.mxu0 0
      %2629 = vmatpush1.bf16.msra.mxu0 0
      %2630 = vmatprep.subr.bf16.mxu0 0
      %2631 = vmatpush1.bf16.msra.mxu0 0
      %2632 = vmatprep.subr.bf16.mxu0 0
      %2633 = vmatpush1.bf16.msra.mxu0 0
      %2634 = vmatprep.mubr.bf16.mxu0 0
      %2635 = vmatmul.mubr.bf16.gmra.mrb[0].mxu0 %v2600
      %v2636 = vpop.f32.mrb[0].mxu0
      %v2637 = vadd.f32 %v2588, %v2636
      %v2638 = vpop.f32.mrb[0].mxu0
      %v2639 = vpop.f32.mrb[0].mxu0
      %v2640 = vpop.f32.mrb[0].mxu0
      %2641 = vdwg.mxu0
      %v2642 = vadd.f32 %v1899, %v2637
      %s2643 = scalar_lea.vmem %s13, 1
      %v2644 = vld [vmem:[%s2643] sm:$0x1]
      %v2646 = vlaneseq
      %v2647 = vshrl.u32 %v2646, 7
      %v2648 = vsub.s32 0, %v2647
      %v2649 = vrot.slane %v2644, %v2648
      %v2651 = vadd.f32 %v2642, %v2649
      %s2652 = scalar_lea.vmem %s14, 1
      %v2653 = vld [vmem:[%s2652] sm:$0x1]
      %s2654 = scalar_lea.vmem %s15, 1
      %v2655 = vld [vmem:[%s2654] sm:$0x1]
      %v2656 = vsel %vm896, %v2651, 0.0
      %2657 = vadd.xlane.f32.xlu0 %v2656
      %v2658 = vpop.xlane.xlu0 %2657
      %v2659 = vmul.f32 %v2658, %v900
      %v2660 = vsub.f32 %v2651, %v2659
      %v2661 = vmul.f32 %v2660, %v2660
      %v2662 = vsel %vm896, %v2661, 0.0
      %2663 = vadd.xlane.f32.xlu0 %v2662
      %v2664 = vpop.xlane.xlu0 %2663
      %v2665 = vmul.f32 %v2664, %v900
      %v2666 = vadd.f32 %v2665, 1e-12
      %v2667 = vrsqrt.pop %v2666
      %v2668 = vmul.f32 %v2660, %v2667
      %v2670 = vlaneseq
      %v2671 = vshrl.u32 %v2670, 7
      %v2672 = vsub.s32 0, %v2671
      %v2673 = vrot.slane %v2653, %v2672
      %v2675 = vmul.f32 %v2668, %v2673
      %v2677 = vlaneseq
      %v2678 = vshrl.u32 %v2677, 7
      %v2679 = vsub.s32 0, %v2678
      %v2680 = vrot.slane %v2655, %v2679
      %v2682 = vadd.f32 %v2675, %v2680
      %v2683 = vpack.c.bf16 %v2682, %v2682
      %s2684 = scalar_lea.vmem %s16, 16
      %v2685 = vld [vmem:[%s2684] sm:$0xf]
      %v2686 = vld [vmem:[%s2684 + $0x4] sm:$0xf]
      %v2687 = vld [vmem:[%s2684 + $0x8] sm:$0xf]
      %v2688 = vld [vmem:[%s2684 + $0xc] sm:$0xf]
      %s2689 = scalar_lea.vmem %s17, 1
      %v2690 = vld [vmem:[%s2689] sm:$0x1]
      %v2692 = vlaneseq
      %v2693 = vshrl.u32 %v2692, 7
      %v2694 = vsub.s32 0, %v2693
      %v2695 = vrot.slane %v2690, %v2694
      %v2701 = vunpack.c.l.b16 %v2685
      %v2702 = vunpack.c.l.b16 %v2686
      %v2703 = vunpack.c.l.b16 %v2687
      %v2704 = vunpack.c.l.b16 %v2688
      %v2705 = vpack.c.b16 %v2702, %v2701
      %v2706 = vpack.c.b16 %v2704, %v2703
      %v2710 = vsel %vm896, %v2683, 0
      %2712 = vmatprep.subr.bf16.mxu0 0
      %2713 = vmatpush1.bf16.msra.mxu0 %v2705
      %2714 = vmatprep.subr.bf16.mxu0 0
      %2715 = vmatpush1.bf16.msra.mxu0 %v2706
      %2716 = vmatprep.subr.bf16.mxu0 0
      %2717 = vmatpush1.bf16.msra.mxu0 0
      %2718 = vmatprep.subr.bf16.mxu0 0
      %2719 = vmatpush1.bf16.msra.mxu0 0
      %2720 = vmatprep.subr.bf16.mxu0 0
      %2721 = vmatpush1.bf16.msra.mxu0 0
      %2722 = vmatprep.subr.bf16.mxu0 0
      %2723 = vmatpush1.bf16.msra.mxu0 0
      %2724 = vmatprep.subr.bf16.mxu0 0
      %2725 = vmatpush1.bf16.msra.mxu0 0
      %2726 = vmatprep.subr.bf16.mxu0 0
      %2727 = vmatpush1.bf16.msra.mxu0 0
      %2728 = vmatprep.subr.bf16.mxu0 0
      %2729 = vmatpush1.bf16.msra.mxu0 0
      %2730 = vmatprep.subr.bf16.mxu0 0
      %2731 = vmatpush1.bf16.msra.mxu0 0
      %2732 = vmatprep.subr.bf16.mxu0 0
      %2733 = vmatpush1.bf16.msra.mxu0 0
      %2734 = vmatprep.subr.bf16.mxu0 0
      %2735 = vmatpush1.bf16.msra.mxu0 0
      %2736 = vmatprep.subr.bf16.mxu0 0
      %2737 = vmatpush1.bf16.msra.mxu0 0
      %2738 = vmatprep.subr.bf16.mxu0 0
      %2739 = vmatpush1.bf16.msra.mxu0 0
      %2740 = vmatprep.subr.bf16.mxu0 0
      %2741 = vmatpush1.bf16.msra.mxu0 0
      %2742 = vmatprep.subr.bf16.mxu0 0
      %2743 = vmatpush1.bf16.msra.mxu0 0
      %2744 = vmatprep.mubr.bf16.mxu0 0
      %2745 = vmatmul.mubr.bf16.gmra.mrb[0].mxu0 %v2710
      %v2746 = vpop.f32.mrb[0].mxu0
      %v2747 = vadd.f32 %v2695, %v2746
      %v2748 = vpop.f32.mrb[0].mxu0
      %v2749 = vpop.f32.mrb[0].mxu0
      %v2750 = vpop.f32.mrb[0].mxu0
      %2751 = vdwg.mxu0
      %v2752 = vmul.f32 %v2747, %v2747
      %v2753 = vmul.f32 %v2747, %v2752
      %v2754 = vmul.f32 %v2753, 0.044715
      %v2755 = vadd.f32 %v2747, %v2754
      %v2756 = vmul.f32 %v2755, 0.7978846
      %v2757 = vtanh.pop %v2756
      %v2758 = vadd.f32 %v2757, 1.0
      %v2759 = vmul.f32 %v2758, 0.5
      %v2760 = vmul.f32 %v2747, %v2759
      %v2761 = vpack.c.bf16 %v2760, %v2760
      %s2762 = scalar_lea.vmem %s18, 32
      %v2763 = vld [vmem:[%s2762] sm:$0xf]
      %v2764 = vld [vmem:[%s2762 + $0x4] sm:$0xf]
      %v2765 = vld [vmem:[%s2762 + $0x8] sm:$0xf]
      %v2766 = vld [vmem:[%s2762 + $0xc] sm:$0xf]
      %v2767 = vld [vmem:[%s2762 + $0x10] sm:$0xf]
      %v2768 = vld [vmem:[%s2762 + $0x14] sm:$0xf]
      %v2769 = vld [vmem:[%s2762 + $0x18] sm:$0xf]
      %v2770 = vld [vmem:[%s2762 + $0x1c] sm:$0xf]
      %s2771 = scalar_lea.vmem %s19, 1
      %v2772 = vld [vmem:[%s2771] sm:$0x1]
      %v2774 = vlaneseq
      %v2775 = vshrl.u32 %v2774, 7
      %v2776 = vsub.s32 0, %v2775
      %v2777 = vrot.slane %v2772, %v2776
      %v2787 = vunpack.c.l.b16 %v2763
      %v2788 = vunpack.c.l.b16 %v2764
      %v2789 = vunpack.c.l.b16 %v2765
      %v2790 = vunpack.c.l.b16 %v2766
      %v2791 = vunpack.c.l.b16 %v2767
      %v2792 = vunpack.c.l.b16 %v2768
      %v2793 = vunpack.c.l.b16 %v2769
      %v2794 = vunpack.c.l.b16 %v2770
      %v2795 = vpack.c.b16 %v2788, %v2787
      %v2796 = vpack.c.b16 %v2790, %v2789
      %v2797 = vpack.c.b16 %v2792, %v2791
      %v2798 = vpack.c.b16 %v2794, %v2793
      %v2804 = vsel %vm1826, %v2761, 0
      %2806 = vmatprep.subr.bf16.mxu0 0
      %2807 = vmatpush1.bf16.msra.mxu0 %v2795
      %2808 = vmatprep.subr.bf16.mxu0 0
      %2809 = vmatpush1.bf16.msra.mxu0 %v2796
      %2810 = vmatprep.subr.bf16.mxu0 0
      %2811 = vmatpush1.bf16.msra.mxu0 %v2797
      %2812 = vmatprep.subr.bf16.mxu0 0
      %2813 = vmatpush1.bf16.msra.mxu0 %v2798
      %2814 = vmatprep.subr.bf16.mxu0 0
      %2815 = vmatpush1.bf16.msra.mxu0 0
      %2816 = vmatprep.subr.bf16.mxu0 0
      %2817 = vmatpush1.bf16.msra.mxu0 0
      %2818 = vmatprep.subr.bf16.mxu0 0
      %2819 = vmatpush1.bf16.msra.mxu0 0
      %2820 = vmatprep.subr.bf16.mxu0 0
      %2821 = vmatpush1.bf16.msra.mxu0 0
      %2822 = vmatprep.subr.bf16.mxu0 0
      %2823 = vmatpush1.bf16.msra.mxu0 0
      %2824 = vmatprep.subr.bf16.mxu0 0
      %2825 = vmatpush1.bf16.msra.mxu0 0
      %2826 = vmatprep.subr.bf16.mxu0 0
      %2827 = vmatpush1.bf16.msra.mxu0 0
      %2828 = vmatprep.subr.bf16.mxu0 0
      %2829 = vmatpush1.bf16.msra.mxu0 0
      %2830 = vmatprep.subr.bf16.mxu0 0
      %2831 = vmatpush1.bf16.msra.mxu0 0
      %2832 = vmatprep.subr.bf16.mxu0 0
      %2833 = vmatpush1.bf16.msra.mxu0 0
      %2834 = vmatprep.subr.bf16.mxu0 0
      %2835 = vmatpush1.bf16.msra.mxu0 0
      %2836 = vmatprep.subr.bf16.mxu0 0
      %2837 = vmatpush1.bf16.msra.mxu0 0
      %2838 = vmatprep.mubr.bf16.mxu0 0
      %2839 = vmatmul.mubr.bf16.gmra.mrb[0].mxu0 %v2804
      %v2840 = vpop.f32.mrb[0].mxu0
      %v2841 = vadd.f32 %v2777, %v2840
      %v2842 = vpop.f32.mrb[0].mxu0
      %v2843 = vpop.f32.mrb[0].mxu0
      %v2844 = vpop.f32.mrb[0].mxu0
      %2845 = vdwg.mxu0
      %v2846 = vadd.f32 %v2682, %v2841
      %s2847 = scalar_lea.vmem %s20, 1
      %v2848 = vld [vmem:[%s2847] sm:$0x1]
      %s2849 = scalar_lea.vmem %s21, 1
      %v2850 = vld [vmem:[%s2849] sm:$0x1]
      %v2851 = vsel %vm896, %v2846, 0.0
      %2852 = vadd.xlane.f32.xlu0 %v2851
      %v2853 = vpop.xlane.xlu0 %2852
      %v2854 = vmul.f32 %v2853, %v900
      %v2855 = vsub.f32 %v2846, %v2854
      %v2856 = vmul.f32 %v2855, %v2855
      %v2857 = vsel %vm896, %v2856, 0.0
      %2858 = vadd.xlane.f32.xlu0 %v2857
      %v2859 = vpop.xlane.xlu0 %2858
      %v2860 = vmul.f32 %v2859, %v900
      %v2861 = vadd.f32 %v2860, 1e-12
      %v2862 = vrsqrt.pop %v2861
      %v2863 = vmul.f32 %v2855, %v2862
      %v2865 = vlaneseq
      %v2866 = vshrl.u32 %v2865, 7
      %v2867 = vsub.s32 0, %v2866
      %v2868 = vrot.slane %v2848, %v2867
      %v2870 = vmul.f32 %v2863, %v2868
      %v2872 = vlaneseq
      %v2873 = vshrl.u32 %v2872, 7
      %v2874 = vsub.s32 0, %v2873
      %v2875 = vrot.slane %v2850, %v2874
      %v2877 = vadd.f32 %v2870, %v2875
      %v2878 = vpack.c.bf16 %v2877, %v2877
      %v2879 = vld [vmem:[%s22] sm:$0xf]
      %v2880 = vld [vmem:[%s22 + $0x4] sm:$0xf]
      %v2881 = vld [vmem:[%s22 + $0x8] sm:$0xf]
      %v2882 = vld [vmem:[%s22 + $0xc] sm:$0xf]
      %v2883 = vld [vmem:[%s23] sm:$0x1]
      %v2888 = vunpack.c.l.b16 %v2879
      %v2889 = vunpack.c.l.b16 %v2880
      %v2890 = vunpack.c.l.b16 %v2881
      %v2891 = vunpack.c.l.b16 %v2882
      %v2892 = vpack.c.b16 %v2889, %v2888
      %v2893 = vpack.c.b16 %v2891, %v2890
      %v2897 = vsel %vm896, %v2878, 0
      %2899 = vmatprep.subr.bf16.mxu0 0
      %2900 = vmatpush1.bf16.msra.mxu0 %v2892
      %2901 = vmatprep.subr.bf16.mxu0 0
      %2902 = vmatpush1.bf16.msra.mxu0 %v2893
      %2903 = vmatprep.subr.bf16.mxu0 0
      %2904 = vmatpush1.bf16.msra.mxu0 0
      %2905 = vmatprep.subr.bf16.mxu0 0
      %2906 = vmatpush1.bf16.msra.mxu0 0
      %2907 = vmatprep.subr.bf16.mxu0 0
      %2908 = vmatpush1.bf16.msra.mxu0 0
      %2909 = vmatprep.subr.bf16.mxu0 0
      %2910 = vmatpush1.bf16.msra.mxu0 0
      %2911 = vmatprep.subr.bf16.mxu0 0
      %2912 = vmatpush1.bf16.msra.mxu0 0
      %2913 = vmatprep.subr.bf16.mxu0 0
      %2914 = vmatpush1.bf16.msra.mxu0 0
      %2915 = vmatprep.subr.bf16.mxu0 0
      %2916 = vmatpush1.bf16.msra.mxu0 0
      %2917 = vmatprep.subr.bf16.mxu0 0
      %2918 = vmatpush1.bf16.msra.mxu0 0
      %2919 = vmatprep.subr.bf16.mxu0 0
      %2920 = vmatpush1.bf16.msra.mxu0 0
      %2921 = vmatprep.subr.bf16.mxu0 0
      %2922 = vmatpush1.bf16.msra.mxu0 0
      %2923 = vmatprep.subr.bf16.mxu0 0
      %2924 = vmatpush1.bf16.msra.mxu0 0
      %2925 = vmatprep.subr.bf16.mxu0 0
      %2926 = vmatpush1.bf16.msra.mxu0 0
      %2927 = vmatprep.subr.bf16.mxu0 0
      %2928 = vmatpush1.bf16.msra.mxu0 0
      %2929 = vmatprep.subr.bf16.mxu0 0
      %2930 = vmatpush1.bf16.msra.mxu0 0
      %2931 = vmatprep.mubr.bf16.mxu0 0
      %2932 = vmatmul.mubr.bf16.gmra.mrb[0].mxu0 %v2897
      %v2933 = vpop.f32.mrb[0].mxu0
      %v2934 = vadd.f32 %v2883, %v2933
      %v2935 = vpop.f32.mrb[0].mxu0
      %v2936 = vpop.f32.mrb[0].mxu0
      %v2937 = vpop.f32.mrb[0].mxu0
      %2938 = vdwg.mxu0
      %v2939 = vtanh.pop %v2934
      %v2940 = vld [vmem:[%s24] sm:$0x1]
      %v2941 = vmul.f32 %v2939, %v2940
      %vm2942 = vcmask 253952
      %v2943 = vsel %vm2942, %v2941, 0.0
      %2944 = vadd.xlane.f32.xlu0 %v2943
      %v2945 = vpop.xlane.xlu0 %2944
      %v2946 = vld [vmem:[%s882] sm:$0x1]
      %v2947 = vld [vmem:[%s25] sm:$0x1]
      %v2948 = vmul.f32 %v2946, %v2947
      %vm2949 = vcmask 24576
      %v2950 = vsel %vm2949, %v2948, 0.0
      %2951 = vadd.xlane.f32.xlu0 %v2950
      %v2952 = vpop.xlane.xlu0 %2951
      %v2953 = vadd.f32 %v2945, %v2952
      %v2954 = vld [vmem:[#allocation2] sm:$0x1]
      %v2955 = vadd.f32 %v2953, %v2954
      %v2956 = vxor.u32 %v2955, 2147483648
      %v2957 = vmul.f32 %v2956, 1.442695
      %v2958 = vpow.pop %v2957
      %v2959 = vadd.f32 %v2958, 1.0
      %v2960 = vrcp.pop %v2959
      %v2961 = vmul.f32 1.0, %v2960
      %vm2962 = vcmask 0
      %2963 = vst.msk [vmem:[%s888] sm:$0x1] %vm2962, %v2961
      %v2964 = vld [vmem:[%s885] sm:$0x1]
      %v2965 = vlog2.pop %v2961
      %v2966 = vmul.f32 %v2965, 0.6931472
      %v2967 = vmax.f32 %v2966, -100.0
      %v2968 = vmul.f32 %v2964, %v2967
      %v2969 = vsub.f32 1.0, %v2964
      %v2970 = vsub.f32 1.0, %v2961
      %v2971 = vlog2.pop %v2970
      %v2972 = vmul.f32 %v2971, 0.6931472
      %v2973 = vmax.f32 %v2972, -100.0
      %v2974 = vmul.f32 %v2969, %v2973
      %v2975 = vadd.f32 %v2968, %v2974
      %v2976 = vsub.f32 0.0, %v2975
      %2977 = vst.msk [vmem:[%s891] sm:$0x1] %vm2962, %v2976
      %p2978 = scmp.lt.s32.totalorder %s42, 1
      %s2979 = scalar_select %p2978, %s42, 1
      %s2980 = scalar_lea.vmem %s27, %s2979
      %p2981 = scmp.lt.s32.totalorder %s42, 1
      %s2982 = scalar_select %p2981, %s42, 1
      %s2983 = scalar_lea.vmem %s28, %s2982
      // Predicated region
      $region129: #{tpu_custom_call.1} parent=127 // pred_check
        %p2984 = pneg %p647
      $region130: #{tpu_custom_call.1} parent=127 // pred_check_branch
        %2986 = sbr.rel (%p2984) target = $region132
      $region131: #{tpu_custom_call.1} parent=127 // pred_region
        _
      $region132: #{tpu_custom_call.1} parent=127 // pred_fallthru
        _
      // Predicated region
      $region133: #{tpu_custom_call.1} parent=127 // pred_check
        %p2987 = pneg %p673
      $region134: #{tpu_custom_call.1} parent=127 // pred_check_branch
        %2989 = sbr.rel (%p2987) target = $region136
      $region135: #{tpu_custom_call.1} parent=127 // pred_region
        _
      $region136: #{tpu_custom_call.1} parent=127 // pred_fallthru
        _
    $region128: #{tpu_custom_call.1} parent=5 // pred_fallthru
      _
    %p2990 = scmp.le.s32.totalorder 2, %s37
    // Predicated region
    $region137: #{tpu_custom_call.1} parent=5 // pred_check
      %p2991 = pneg %p2990
    $region138: #{tpu_custom_call.1} parent=5 // pred_check_branch
      %2993 = sbr.rel (%p2991) target = $region140
    $region139: #{tpu_custom_call.1} parent=5 // pred_region
      %s2994 = ssub.s32 %s37, 2
      // Predicated region
      $region141: #{tpu_custom_call.1} parent=139 // pred_check
        %p2995 = pneg %p653
      $region142: #{tpu_custom_call.1} parent=139 // pred_check_branch
        %2997 = sbr.rel (%p2995) target = $region144
      $region143: #{tpu_custom_call.1} parent=139 // pred_region
        %p2998 = scmp.lt.s32.totalorder %s43, 1
        %s2999 = scalar_select %p2998, %s43, 1
        %s3000 = scalar_lea.vmem %s27, %s2999
      $region144: #{tpu_custom_call.1} parent=139 // pred_fallthru
        _
      // Predicated region
      $region145: #{tpu_custom_call.1} parent=139 // pred_check
        %p3001 = pneg %p679
      $region146: #{tpu_custom_call.1} parent=139 // pred_check_branch
        %3003 = sbr.rel (%p3001) target = $region148
      $region147: #{tpu_custom_call.1} parent=139 // pred_region
        %p3004 = scmp.lt.s32.totalorder %s43, 1
        %s3005 = scalar_select %p3004, %s43, 1
        %s3006 = scalar_lea.vmem %s28, %s3005
      $region148: #{tpu_custom_call.1} parent=139 // pred_fallthru
        _
    $region140: #{tpu_custom_call.1} parent=5 // pred_fallthru
      _
  $region6: #{tpu_custom_call.1} parent=0 // loop_footer
    %s41 = sadd.s32 1, %s37
  $region7: #{tpu_custom_call.1} parent=0 // loop_footer_branch
    %36 = sbr.rel target = $region3
  $region8: #{tpu_custom_call.1} parent=0 // loop_exit
    _

</llo_original>
